<compile_context>
chip_gen: v7x
topology: tpu7x:2x2x1
jax: 0.10.0
libtpu: 0.0.40
codegen_flags: <defaults>
</compile_context>

<pallas_src>
import jax
import jax.numpy as jnp
import numpy as np
from jax.experimental import pallas as pl
from jax.experimental.pallas import tpu as pltpu

# ---- small, forward-consistent sizes --------------------------------------
HIDDEN = 32        # hidden_size
VOCAB = 48         # output_size
MAX_LENGTH = 10    # max_length
LANES = 128        # vreg lane width; every fused matvec output is padded to it

H, V, L = HIDDEN, VOCAB, MAX_LENGTH


def _attn_decoder_kernel(emb_ref,      # (T, H)   gathered embeddings, resident
                         h0_ref,       # (1, H)   initial hidden
                         wex_ref,      # (H, 256) [W_e | W_x] token-only weights
                         bex_ref,      # (1, 256) [b_e | b_x]
                         who_ref,      # (H, 256) [W_h | W_o] recurrent weights
                         bho_ref,      # (1, 256) [b_h | b_o]
                         out_ref,      # (T, 256) [logp pad128 | attn_w pad128]
                         hout_ref,     # (1, 128) final hidden padded
                         ye_scr,       # VMEM (T, 128)
                         yx_scr,       # VMEM (T, 128)
                         yh_scr,       # VMEM (T, 128)
                         logit_scr):   # VMEM (T, 128)
    f32 = jnp.float32
    T = emb_ref.shape[0]

    # ---- prologue: batched token-only matmuls (M = T), hidden-independent ----
    # ye lanes: [attn_e+b_attn (0:L) | comb (H:2H) | 0]
    ye_all = (jnp.dot(emb_ref[...], wex_ref[:, 0:LANES],
                      preferred_element_type=f32) + bex_ref[:, 0:LANES])
    x_all = jnp.maximum(ye_all[:, H:2 * H], 0.0)         # relu(attn_combine(...))
    # yx lanes: [ir (0:H) | iz (H:2H) | in (2H:3H) | 0]
    yx_all = (jnp.dot(x_all, wex_ref[:, LANES:2 * LANES],
                      preferred_element_type=f32) + bex_ref[:, LANES:2 * LANES])
    ye_scr[...] = ye_all
    yx_scr[...] = yx_all

    # yh(0) = h0 @ W_h + b_h  (W_o half of this push is discarded)
    comb0 = (jnp.dot(h0_ref[...], who_ref[...], preferred_element_type=f32)
             + bho_ref[...])
    yh0 = comb0[:, 0:LANES]

    # ---- recurrence: exactly one M=1 MXU push per step ----
    def step(t, carry):
        h, yh = carry                                     # h (1,H), yh (1,128)
        yh_scr[pl.ds(t, 1), :] = yh                       # stashed for epilogue attn
        yx = yx_scr[pl.ds(t, 1), :]                       # (1,128) token-only row

        # GRU cell (PyTorch gate convention)
        r = jax.nn.sigmoid(yx[:, 0:H] + yh[:, H:2 * H])
        z = jax.nn.sigmoid(yx[:, H:2 * H] + yh[:, 2 * H:3 * H])
        n = jnp.tanh(yx[:, 2 * H:3 * H] + r * yh[:, 3 * H:4 * H])
        h_new = (1.0 - z) * n + z * h

        # fused: [yh(t+1) | logits(t)] = h_new @ [W_h | W_o] + [b_h | b_o]
        comb = (jnp.dot(h_new, who_ref[...], preferred_element_type=f32)
                + bho_ref[...])
        logit_scr[pl.ds(t, 1), :] = comb[:, LANES:2 * LANES]
        return (h_new, comb[:, 0:LANES])

    h_fin, _ = jax.lax.fori_loop(0, T, step, (h0_ref[...], yh0), unroll=True)

    # ---- epilogue: batched masked softmax / log_softmax over all T rows ----
    lane = jax.lax.broadcasted_iota(jnp.int32, (T, LANES), 1)
    neg = jnp.float32(-1e30)

    # log_softmax over the first V lanes of each raw logits row
    logits = jnp.where(lane < V, logit_scr[...], neg)
    lmax = jnp.max(logits, axis=-1, keepdims=True)
    lsh = logits - lmax
    logp = lsh - jnp.log(jnp.sum(jnp.exp(lsh), axis=-1, keepdims=True))
    out_ref[:, 0:LANES] = jnp.where(lane < V, logp, 0.0)

    # attention softmax over the first L lanes of (ye + yh)  (exact division)
    attn_logits = jnp.where(lane < L, ye_scr[...] + yh_scr[...], neg)
    amax = jnp.max(attn_logits, axis=-1, keepdims=True)
    ae = jnp.exp(attn_logits - amax)
    attn_w = ae / jnp.sum(ae, axis=-1, keepdims=True)
    out_ref[:, LANES:2 * LANES] = attn_w

    # final hidden, padded to a lane-dense row
    hout_ref[...] = jnp.zeros((1, LANES), f32)
    hout_ref[:, 0:H] = h_fin


def init_params(key, hidden=HIDDEN, vocab=VOCAB, max_len=MAX_LENGTH):
    """Deterministic synthetic parameters (Linear weights pre-transposed)."""
    ks = jax.random.split(key, 16)
    u = lambda k, shape, s=0.1: jax.random.uniform(k, shape, jnp.float32, -s, s)
    p = {
        "emb": u(ks[0], (vocab, hidden)),
        # attn: Linear(2H -> L), split into the emb / hidden halves
        "w_attn_e": u(ks[1], (hidden, max_len)),
        "w_attn_h": u(ks[2], (hidden, max_len)),
        "b_attn": u(ks[3], (1, max_len)),
        # attn_combine: Linear(2H -> H), split into the two cat halves
        "w_comb_e": u(ks[4], (hidden, hidden)),
        "w_comb_a": u(ks[5], (hidden, hidden)),
        "b_comb": u(ks[6], (1, hidden)),
        # GRU: weight_ih (3H,H) / weight_hh (3H,H) split into r,z,n gates
        "w_ir": u(ks[7], (hidden, hidden)),
        "w_iz": u(ks[8], (hidden, hidden)),
        "w_in": u(ks[9], (hidden, hidden)),
        "w_hr": u(ks[10], (hidden, hidden)),
        "w_hz": u(ks[11], (hidden, hidden)),
        "w_hn": u(ks[12], (hidden, hidden)),
        "b_ir": u(ks[13], (1, hidden)), "b_iz": u(ks[13], (1, hidden)) * 0.5,
        "b_in": u(ks[13], (1, hidden)) * 0.25,
        "b_hr": u(ks[14], (1, hidden)), "b_hz": u(ks[14], (1, hidden)) * 0.5,
        "b_hn": u(ks[14], (1, hidden)) * 0.25,
        # out: Linear(H -> V)
        "w_out": u(ks[15], (hidden, vocab)),
        "b_out": u(ks[15], (1, vocab)) * 0.1,
    }
    return p


def pack_params(p):
    """Build the kernel slabs once at init.

    wex (H,256) = [W_e | W_x]   token-only prologue weights
    who (H,256) = [W_h | W_o]   recurrent + output weights (fused 256-lane push)
    """
    f32 = jnp.float32

    w_e = jnp.zeros((H, LANES), f32)
    w_e = w_e.at[:, 0:L].set(p["w_attn_e"])
    # pre-sum the two attn_combine halves (valid only while dropout is identity)
    w_e = w_e.at[:, H:2 * H].set(p["w_comb_e"] + p["w_comb_a"])

    w_x = jnp.zeros((H, LANES), f32)
    w_x = w_x.at[:, 0:H].set(p["w_ir"])
    w_x = w_x.at[:, H:2 * H].set(p["w_iz"])
    w_x = w_x.at[:, 2 * H:3 * H].set(p["w_in"])

    w_h = jnp.zeros((H, LANES), f32)
    w_h = w_h.at[:, 0:L].set(p["w_attn_h"])
    w_h = w_h.at[:, H:2 * H].set(p["w_hr"])
    w_h = w_h.at[:, 2 * H:3 * H].set(p["w_hz"])
    w_h = w_h.at[:, 3 * H:4 * H].set(p["w_hn"])

    w_o = jnp.zeros((H, LANES), f32)
    w_o = w_o.at[:, 0:V].set(p["w_out"])

    b_e = jnp.zeros((1, LANES), f32)
    b_e = b_e.at[:, 0:L].set(p["b_attn"])
    b_e = b_e.at[:, H:2 * H].set(p["b_comb"])

    b_x = jnp.zeros((1, LANES), f32)
    b_x = b_x.at[:, 0:H].set(p["b_ir"])
    b_x = b_x.at[:, H:2 * H].set(p["b_iz"])
    b_x = b_x.at[:, 2 * H:3 * H].set(p["b_in"])

    b_h = jnp.zeros((1, LANES), f32)
    b_h = b_h.at[:, H:2 * H].set(p["b_hr"])
    b_h = b_h.at[:, 2 * H:3 * H].set(p["b_hz"])
    b_h = b_h.at[:, 3 * H:4 * H].set(p["b_hn"])

    b_o = jnp.zeros((1, LANES), f32)
    b_o = b_o.at[:, 0:V].set(p["b_out"])

    return {
        "emb": p["emb"].astype(f32),
        "wex": jnp.concatenate([w_e, w_x], axis=1),   # (H, 256)
        "bex": jnp.concatenate([b_e, b_x], axis=1),   # (1, 256)
        "who": jnp.concatenate([w_h, w_o], axis=1),   # (H, 256)
        "bho": jnp.concatenate([b_h, b_o], axis=1),   # (1, 256)
    }


def attn_decoder_decode(tokens, hidden, encoder_output, encoder_outputs, packed):
    """Run T decode steps inside ONE single-grid-step pallas_call.

    tokens: (T,) int32 per-step input token (teacher forced)
    hidden: (1, 1, H) initial hidden state
    Returns (logp (T, V), final hidden (1, 1, H), attn_weights (T, L)).
    encoder_output / encoder_outputs are unused by the reference forward."""
    del encoder_output, encoder_outputs
    T = int(tokens.shape[0])
    tokens = jnp.clip(tokens.astype(jnp.int32), 0, VOCAB - 1)  # guard OOB gather
    emb_all = jnp.take(packed["emb"], tokens, axis=0)          # (T, H) XLA gather
    h0 = hidden.reshape(1, H).astype(jnp.float32)

    grid_spec = pltpu.PrefetchScalarGridSpec(
        num_scalar_prefetch=0,
        grid=(1,),                                             # single grid step
        in_specs=[
            pl.BlockSpec((T, H), lambda i: (0, 0)),            # embeddings
            pl.BlockSpec((1, H), lambda i: (0, 0)),            # initial hidden
            pl.BlockSpec((H, 2 * LANES), lambda i: (0, 0)),    # [W_e | W_x]
            pl.BlockSpec((1, 2 * LANES), lambda i: (0, 0)),    # [b_e | b_x]
            pl.BlockSpec((H, 2 * LANES), lambda i: (0, 0)),    # [W_h | W_o]
            pl.BlockSpec((1, 2 * LANES), lambda i: (0, 0)),    # [b_h | b_o]
        ],
        out_specs=(
            pl.BlockSpec((T, 2 * LANES), lambda i: (0, 0)),    # [logp | attn_w]
            pl.BlockSpec((1, LANES), lambda i: (0, 0)),        # final hidden
        ),
        scratch_shapes=[pltpu.VMEM((T, LANES), jnp.float32)] * 4,
    )

    out_main, out_h = pl.pallas_call(
        _attn_decoder_kernel,
        out_shape=(jax.ShapeDtypeStruct((T, 2 * LANES), jnp.float32),
                   jax.ShapeDtypeStruct((1, LANES), jnp.float32)),
        grid_spec=grid_spec,
        compiler_params=pltpu.CompilerParams(
            dimension_semantics=("arbitrary",)),
    )(emb_all, h0, packed["wex"], packed["bex"], packed["who"], packed["bho"])

    logp = out_main[:, 0:V]
    attn_w = out_main[:, LANES:LANES + L]
    h_final = out_h[:, 0:H].reshape(1, 1, H)
    return logp, h_final, attn_w


def attn_decoder_forward(token_idx, hidden, encoder_output, encoder_outputs,
                         packed):
    """Single-step forward matching the PyTorch module signature (T = 1)."""
    return attn_decoder_decode(token_idx.reshape((1,)), hidden,
                               encoder_output, encoder_outputs, packed)


def reference_forward(token_idx, hidden, params):
    """Pure-JAX single-step reference mirroring the PyTorch module (eval dropout)."""
    emb = params["emb"][token_idx.reshape(())].reshape(1, H)
    h = hidden.reshape(1, H)
    attn_logits = emb @ params["w_attn_e"] + h @ params["w_attn_h"] + params["b_attn"]
    attn_w = jax.nn.softmax(attn_logits, axis=-1)
    comb = emb @ params["w_comb_e"] + emb @ params["w_comb_a"] + params["b_comb"]
    x = jnp.maximum(comb, 0.0)
    r = jax.nn.sigmoid(x @ params["w_ir"] + params["b_ir"]
                       + h @ params["w_hr"] + params["b_hr"])
    z = jax.nn.sigmoid(x @ params["w_iz"] + params["b_iz"]
                       + h @ params["w_hz"] + params["b_hz"])
    n = jnp.tanh(x @ params["w_in"] + params["b_in"]
                 + r * (h @ params["w_hn"] + params["b_hn"]))
    h_new = (1.0 - z) * n + z * h
    logits = h_new @ params["w_out"] + params["b_out"]
    logp = jax.nn.log_softmax(logits, axis=-1)
    return logp, h_new.reshape(1, 1, H), attn_w


if __name__ == "__main__":
    key = jax.random.PRNGKey(0)
    pkey, ikey, hkey, ekey = jax.random.split(key, 4)
    params = init_params(pkey)
    packed = pack_params(params)

    T = 16
    tokens = jax.random.randint(ikey, (T,), 0, VOCAB, dtype=jnp.int32)
    hidden = jax.random.normal(hkey, (1, 1, HIDDEN), dtype=jnp.float32) * 0.1
    encoder_outputs = jax.random.normal(ekey, (MAX_LENGTH, HIDDEN),
                                        dtype=jnp.float32)
    encoder_output = encoder_outputs[:1]

    logp, h_final, attn_w = attn_decoder_decode(
        tokens, hidden, encoder_output, encoder_outputs, packed)
    jax.block_until_ready((logp, h_final, attn_w))

    # Pure-JAX reference: the single-step module forward applied T times.
    r_logps, r_attns = [], []
    h = hidden
    for t in range(T):
        lp, h, aw = reference_forward(tokens[t:t + 1], h, params)
        r_logps.append(lp)
        r_attns.append(aw)
    r_logp = jnp.concatenate(r_logps, axis=0)
    r_attn = jnp.concatenate(r_attns, axis=0)

    np.testing.assert_allclose(np.asarray(logp), np.asarray(r_logp),
                               rtol=2e-5, atol=2e-5)
    np.testing.assert_allclose(np.asarray(h_final), np.asarray(h),
                               rtol=2e-5, atol=2e-5)
    np.testing.assert_allclose(np.asarray(attn_w), np.asarray(r_attn),
                               rtol=1e-4, atol=1e-4)

    print("KERNEL_OK")
</pallas_src>

<mosaic_0001>
module attributes {stable_mosaic.version = 11 : i64} {
  func.func @_attn_decoder_kernel(%arg0: i32, %arg1: memref<16x32xf32, #tpu.memory_space<vmem>>, %arg2: memref<1x32xf32, #tpu.memory_space<vmem>>, %arg3: memref<32x256xf32, #tpu.memory_space<vmem>>, %arg4: memref<1x256xf32, #tpu.memory_space<vmem>>, %arg5: memref<32x256xf32, #tpu.memory_space<vmem>>, %arg6: memref<1x256xf32, #tpu.memory_space<vmem>>, %arg7: memref<16x256xf32, #tpu.memory_space<vmem>>, %arg8: memref<1x128xf32, #tpu.memory_space<vmem>>, %arg9: memref<16x128xf32, #tpu.memory_space<vmem>>, %arg10: memref<16x128xf32, #tpu.memory_space<vmem>>, %arg11: memref<16x128xf32, #tpu.memory_space<vmem>>, %arg12: memref<16x128xf32, #tpu.memory_space<vmem>>) attributes {dimension_semantics = [#tpu.dimension_semantics<arbitrary>], iteration_bounds = array<i64: 1>, scalar_prefetch = 0 : i64, scratch_operands = 4 : i64, tpu.core_type = #tpu.core_type<tc>, window_params = [{pipeline_mode = #tpu.pipeline_mode<synchronous>, transform_indices = @transform_0, window_bounds = array<i64: 16, 32>}, {pipeline_mode = #tpu.pipeline_mode<synchronous>, transform_indices = @transform_1, window_bounds = array<i64: 1, 32>}, {pipeline_mode = #tpu.pipeline_mode<synchronous>, transform_indices = @transform_2, window_bounds = array<i64: 32, 256>}, {pipeline_mode = #tpu.pipeline_mode<synchronous>, transform_indices = @transform_3, window_bounds = array<i64: 1, 256>}, {pipeline_mode = #tpu.pipeline_mode<synchronous>, transform_indices = @transform_4, window_bounds = array<i64: 32, 256>}, {pipeline_mode = #tpu.pipeline_mode<synchronous>, transform_indices = @transform_5, window_bounds = array<i64: 1, 256>}, {pipeline_mode = #tpu.pipeline_mode<synchronous>, transform_indices = @transform_6, window_bounds = array<i64: 16, 256>}, {pipeline_mode = #tpu.pipeline_mode<synchronous>, transform_indices = @transform_7, window_bounds = array<i64: 1, 128>}]} {
    %c0 = arith.constant 0 : index
    %c0_0 = arith.constant 0 : index
    %0 = vector.load %arg1[%c0, %c0_0] : memref<16x32xf32, #tpu.memory_space<vmem>>, vector<16x32xf32>
    %c0_1 = arith.constant 0 : index
    %c0_2 = arith.constant 0 : index
    %1 = vector.load %arg3[%c0_1, %c0_2] : memref<32x256xf32, #tpu.memory_space<vmem>>, vector<32x128xf32>
    %cst = arith.constant dense<0.000000e+00> : vector<16x128xf32>
    %2 = tpu.matmul %0, %1, %cst {dimension_numbers = #tpu.dot_dimension_numbers<[1], [0], [0], [1], [0, 0, 1, 1], [], []>} : vector<16x32xf32>, vector<32x128xf32>, vector<16x128xf32> -> vector<16x128xf32>
    %c0_3 = arith.constant 0 : index
    %c0_4 = arith.constant 0 : index
    %3 = vector.load %arg4[%c0_3, %c0_4] : memref<1x256xf32, #tpu.memory_space<vmem>>, vector<1x128xf32>
    %4 = vector.broadcast %3 : vector<1x128xf32> to vector<16x128xf32>
    %5 = arith.addf %2, %4 : vector<16x128xf32>
    %6 = vector.extract_strided_slice %5 {offsets = [0, 32], sizes = [16, 32], strides = [1, 1]} : vector<16x128xf32> to vector<16x32xf32>
    %cst_5 = arith.constant 0.000000e+00 : f32
    %7 = vector.broadcast %cst_5 : f32 to vector<16x32xf32>
    %8 = arith.maximumf %6, %7 : vector<16x32xf32>
    %c0_6 = arith.constant 0 : index
    %c128 = arith.constant 128 : index
    %9 = vector.load %arg3[%c0_6, %c128] : memref<32x256xf32, #tpu.memory_space<vmem>>, vector<32x128xf32>
    %cst_7 = arith.constant dense<0.000000e+00> : vector<16x128xf32>
    %10 = tpu.matmul %8, %9, %cst_7 {dimension_numbers = #tpu.dot_dimension_numbers<[1], [0], [0], [1], [0, 0, 1, 1], [], []>} : vector<16x32xf32>, vector<32x128xf32>, vector<16x128xf32> -> vector<16x128xf32>
    %c0_8 = arith.constant 0 : index
    %c128_9 = arith.constant 128 : index
    %11 = vector.load %arg4[%c0_8, %c128_9] : memref<1x256xf32, #tpu.memory_space<vmem>>, vector<1x128xf32>
    %12 = vector.broadcast %11 : vector<1x128xf32> to vector<16x128xf32>
    %13 = arith.addf %10, %12 : vector<16x128xf32>
    %c0_10 = arith.constant 0 : index
    %c0_11 = arith.constant 0 : index
    %14 = vector.load %arg9[%c0_10, %c0_11] : memref<16x128xf32, #tpu.memory_space<vmem>>, vector<16x128xf32>
    tpu.vector_store %arg9[%c0_10, %c0_11], %5 {strides = array<i32>} : memref<16x128xf32, #tpu.memory_space<vmem>>, vector<16x128xf32>,
    %c0_12 = arith.constant 0 : index
    %c0_13 = arith.constant 0 : index
    %15 = vector.load %arg10[%c0_12, %c0_13] : memref<16x128xf32, #tpu.memory_space<vmem>>, vector<16x128xf32>
    tpu.vector_store %arg10[%c0_12, %c0_13], %13 {strides = array<i32>} : memref<16x128xf32, #tpu.memory_space<vmem>>, vector<16x128xf32>,
    %c0_14 = arith.constant 0 : index
    %c0_15 = arith.constant 0 : index
    %16 = vector.load %arg2[%c0_14, %c0_15] : memref<1x32xf32, #tpu.memory_space<vmem>>, vector<1x32xf32>
    %c0_16 = arith.constant 0 : index
    %c0_17 = arith.constant 0 : index
    %17 = vector.load %arg5[%c0_16, %c0_17] : memref<32x256xf32, #tpu.memory_space<vmem>>, vector<32x256xf32>
    %cst_18 = arith.constant dense<0.000000e+00> : vector<1x256xf32>
    %18 = tpu.matmul %16, %17, %cst_18 {dimension_numbers = #tpu.dot_dimension_numbers<[1], [0], [0], [1], [0, 0, 1, 1], [], []>} : vector<1x32xf32>, vector<32x256xf32>, vector<1x256xf32> -> vector<1x256xf32>
    %c0_19 = arith.constant 0 : index
    %c0_20 = arith.constant 0 : index
    %19 = vector.load %arg6[%c0_19, %c0_20] : memref<1x256xf32, #tpu.memory_space<vmem>>, vector<1x256xf32>
    %20 = arith.addf %18, %19 : vector<1x256xf32>
    %21 = vector.extract_strided_slice %20 {offsets = [0, 0], sizes = [1, 128], strides = [1, 1]} : vector<1x256xf32> to vector<1x128xf32>
    %c0_21 = arith.constant 0 : index
    %c0_22 = arith.constant 0 : index
    %22 = vector.load %arg2[%c0_21, %c0_22] : memref<1x32xf32, #tpu.memory_space<vmem>>, vector<1x32xf32>
    %c0_i32 = arith.constant 0 : i32
    %23 = arith.index_cast %c0_i32 : i32 to index
    %c0_23 = arith.constant 0 : index
    %24 = vector.load %arg11[%23, %c0_23] : memref<16x128xf32, #tpu.memory_space<vmem>>, vector<1x128xf32>
    tpu.vector_store %arg11[%23, %c0_23], %21 {strides = array<i32>} : memref<16x128xf32, #tpu.memory_space<vmem>>, vector<1x128xf32>,
    %25 = arith.index_cast %c0_i32 : i32 to index
    %c0_24 = arith.constant 0 : index
    %26 = vector.load %arg10[%25, %c0_24] : memref<16x128xf32, #tpu.memory_space<vmem>>, vector<1x128xf32>
    %27 = vector.extract_strided_slice %26 {offsets = [0, 0], sizes = [1, 32], strides = [1, 1]} : vector<1x128xf32> to vector<1x32xf32>
    %28 = vector.extract_strided_slice %21 {offsets = [0, 32], sizes = [1, 32], strides = [1, 1]} : vector<1x128xf32> to vector<1x32xf32>
    %29 = arith.addf %27, %28 : vector<1x32xf32>
    %30 = arith.negf %29 : vector<1x32xf32>
    %31 = math.exp %30 : vector<1x32xf32>
    %cst_25 = arith.constant 1.000000e+00 : f32
    %32 = vector.broadcast %cst_25 : f32 to vector<1x32xf32>
    %33 = arith.addf %32, %31 : vector<1x32xf32>
    %34 = arith.divf %32, %33 : vector<1x32xf32>
    %35 = vector.extract_strided_slice %26 {offsets = [0, 32], sizes = [1, 32], strides = [1, 1]} : vector<1x128xf32> to vector<1x32xf32>
    %36 = vector.extract_strided_slice %21 {offsets = [0, 64], sizes = [1, 32], strides = [1, 1]} : vector<1x128xf32> to vector<1x32xf32>
    %37 = arith.addf %35, %36 : vector<1x32xf32>
    %38 = arith.negf %37 : vector<1x32xf32>
    %39 = math.exp %38 : vector<1x32xf32>
    %cst_26 = arith.constant 1.000000e+00 : f32
    %40 = vector.broadcast %cst_26 : f32 to vector<1x32xf32>
    %41 = arith.addf %40, %39 : vector<1x32xf32>
    %42 = arith.divf %40, %41 : vector<1x32xf32>
    %43 = vector.extract_strided_slice %26 {offsets = [0, 64], sizes = [1, 32], strides = [1, 1]} : vector<1x128xf32> to vector<1x32xf32>
    %44 = vector.extract_strided_slice %21 {offsets = [0, 96], sizes = [1, 32], strides = [1, 1]} : vector<1x128xf32> to vector<1x32xf32>
    %45 = arith.mulf %34, %44 : vector<1x32xf32>
    %46 = arith.addf %43, %45 : vector<1x32xf32>
    %47 = math.tanh %46 : vector<1x32xf32>
    %cst_27 = arith.constant 1.000000e+00 : f32
    %48 = vector.broadcast %cst_27 : f32 to vector<1x32xf32>
    %49 = arith.subf %48, %42 : vector<1x32xf32>
    %50 = arith.mulf %49, %47 : vector<1x32xf32>
    %51 = arith.mulf %42, %22 : vector<1x32xf32>
    %52 = arith.addf %50, %51 : vector<1x32xf32>
    %c0_28 = arith.constant 0 : index
    %c0_29 = arith.constant 0 : index
    %53 = vector.load %arg5[%c0_28, %c0_29] : memref<32x256xf32, #tpu.memory_space<vmem>>, vector<32x256xf32>
    %cst_30 = arith.constant dense<0.000000e+00> : vector<1x256xf32>
    %54 = tpu.matmul %52, %53, %cst_30 {dimension_numbers = #tpu.dot_dimension_numbers<[1], [0], [0], [1], [0, 0, 1, 1], [], []>} : vector<1x32xf32>, vector<32x256xf32>, vector<1x256xf32> -> vector<1x256xf32>
    %c0_31 = arith.constant 0 : index
    %c0_32 = arith.constant 0 : index
    %55 = vector.load %arg6[%c0_31, %c0_32] : memref<1x256xf32, #tpu.memory_space<vmem>>, vector<1x256xf32>
    %56 = arith.addf %54, %55 : vector<1x256xf32>
    %57 = vector.extract_strided_slice %56 {offsets = [0, 128], sizes = [1, 128], strides = [1, 1]} : vector<1x256xf32> to vector<1x128xf32>
    %58 = arith.index_cast %c0_i32 : i32 to index
    %c0_33 = arith.constant 0 : index
    %59 = vector.load %arg12[%58, %c0_33] : memref<16x128xf32, #tpu.memory_space<vmem>>, vector<1x128xf32>
    tpu.vector_store %arg12[%58, %c0_33], %57 {strides = array<i32>} : memref<16x128xf32, #tpu.memory_space<vmem>>, vector<1x128xf32>,
    %60 = vector.extract_strided_slice %56 {offsets = [0, 0], sizes = [1, 128], strides = [1, 1]} : vector<1x256xf32> to vector<1x128xf32>
    %c1_i32 = arith.constant 1 : i32
    %61 = arith.index_cast %c1_i32 : i32 to index
    %c0_34 = arith.constant 0 : index
    %62 = vector.load %arg11[%61, %c0_34] : memref<16x128xf32, #tpu.memory_space<vmem>>, vector<1x128xf32>
    tpu.vector_store %arg11[%61, %c0_34], %60 {strides = array<i32>} : memref<16x128xf32, #tpu.memory_space<vmem>>, vector<1x128xf32>,
    %63 = arith.index_cast %c1_i32 : i32 to index
    %c0_35 = arith.constant 0 : index
    %64 = vector.load %arg10[%63, %c0_35] : memref<16x128xf32, #tpu.memory_space<vmem>>, vector<1x128xf32>
    %65 = vector.extract_strided_slice %64 {offsets = [0, 0], sizes = [1, 32], strides = [1, 1]} : vector<1x128xf32> to vector<1x32xf32>
    %66 = vector.extract_strided_slice %60 {offsets = [0, 32], sizes = [1, 32], strides = [1, 1]} : vector<1x128xf32> to vector<1x32xf32>
    %67 = arith.addf %65, %66 : vector<1x32xf32>
    %68 = arith.negf %67 : vector<1x32xf32>
    %69 = math.exp %68 : vector<1x32xf32>
    %cst_36 = arith.constant 1.000000e+00 : f32
    %70 = vector.broadcast %cst_36 : f32 to vector<1x32xf32>
    %71 = arith.addf %70, %69 : vector<1x32xf32>
    %72 = arith.divf %70, %71 : vector<1x32xf32>
    %73 = vector.extract_strided_slice %64 {offsets = [0, 32], sizes = [1, 32], strides = [1, 1]} : vector<1x128xf32> to vector<1x32xf32>
    %74 = vector.extract_strided_slice %60 {offsets = [0, 64], sizes = [1, 32], strides = [1, 1]} : vector<1x128xf32> to vector<1x32xf32>
    %75 = arith.addf %73, %74 : vector<1x32xf32>
    %76 = arith.negf %75 : vector<1x32xf32>
    %77 = math.exp %76 : vector<1x32xf32>
    %cst_37 = arith.constant 1.000000e+00 : f32
    %78 = vector.broadcast %cst_37 : f32 to vector<1x32xf32>
    %79 = arith.addf %78, %77 : vector<1x32xf32>
    %80 = arith.divf %78, %79 : vector<1x32xf32>
    %81 = vector.extract_strided_slice %64 {offsets = [0, 64], sizes = [1, 32], strides = [1, 1]} : vector<1x128xf32> to vector<1x32xf32>
    %82 = vector.extract_strided_slice %60 {offsets = [0, 96], sizes = [1, 32], strides = [1, 1]} : vector<1x128xf32> to vector<1x32xf32>
    %83 = arith.mulf %72, %82 : vector<1x32xf32>
    %84 = arith.addf %81, %83 : vector<1x32xf32>
    %85 = math.tanh %84 : vector<1x32xf32>
    %cst_38 = arith.constant 1.000000e+00 : f32
    %86 = vector.broadcast %cst_38 : f32 to vector<1x32xf32>
    %87 = arith.subf %86, %80 : vector<1x32xf32>
    %88 = arith.mulf %87, %85 : vector<1x32xf32>
    %89 = arith.mulf %80, %52 : vector<1x32xf32>
    %90 = arith.addf %88, %89 : vector<1x32xf32>
    %c0_39 = arith.constant 0 : index
    %c0_40 = arith.constant 0 : index
    %91 = vector.load %arg5[%c0_39, %c0_40] : memref<32x256xf32, #tpu.memory_space<vmem>>, vector<32x256xf32>
    %cst_41 = arith.constant dense<0.000000e+00> : vector<1x256xf32>
    %92 = tpu.matmul %90, %91, %cst_41 {dimension_numbers = #tpu.dot_dimension_numbers<[1], [0], [0], [1], [0, 0, 1, 1], [], []>} : vector<1x32xf32>, vector<32x256xf32>, vector<1x256xf32> -> vector<1x256xf32>
    %c0_42 = arith.constant 0 : index
    %c0_43 = arith.constant 0 : index
    %93 = vector.load %arg6[%c0_42, %c0_43] : memref<1x256xf32, #tpu.memory_space<vmem>>, vector<1x256xf32>
    %94 = arith.addf %92, %93 : vector<1x256xf32>
    %95 = vector.extract_strided_slice %94 {offsets = [0, 128], sizes = [1, 128], strides = [1, 1]} : vector<1x256xf32> to vector<1x128xf32>
    %96 = arith.index_cast %c1_i32 : i32 to index
    %c0_44 = arith.constant 0 : index
    %97 = vector.load %arg12[%96, %c0_44] : memref<16x128xf32, #tpu.memory_space<vmem>>, vector<1x128xf32>
    tpu.vector_store %arg12[%96, %c0_44], %95 {strides = array<i32>} : memref<16x128xf32, #tpu.memory_space<vmem>>, vector<1x128xf32>,
    %98 = vector.extract_strided_slice %94 {offsets = [0, 0], sizes = [1, 128], strides = [1, 1]} : vector<1x256xf32> to vector<1x128xf32>
    %c2_i32 = arith.constant 2 : i32
    %99 = arith.index_cast %c2_i32 : i32 to index
    %c0_45 = arith.constant 0 : index
    %100 = vector.load %arg11[%99, %c0_45] : memref<16x128xf32, #tpu.memory_space<vmem>>, vector<1x128xf32>
    tpu.vector_store %arg11[%99, %c0_45], %98 {strides = array<i32>} : memref<16x128xf32, #tpu.memory_space<vmem>>, vector<1x128xf32>,
    %101 = arith.index_cast %c2_i32 : i32 to index
    %c0_46 = arith.constant 0 : index
    %102 = vector.load %arg10[%101, %c0_46] : memref<16x128xf32, #tpu.memory_space<vmem>>, vector<1x128xf32>
    %103 = vector.extract_strided_slice %102 {offsets = [0, 0], sizes = [1, 32], strides = [1, 1]} : vector<1x128xf32> to vector<1x32xf32>
    %104 = vector.extract_strided_slice %98 {offsets = [0, 32], sizes = [1, 32], strides = [1, 1]} : vector<1x128xf32> to vector<1x32xf32>
    %105 = arith.addf %103, %104 : vector<1x32xf32>
    %106 = arith.negf %105 : vector<1x32xf32>
    %107 = math.exp %106 : vector<1x32xf32>
    %cst_47 = arith.constant 1.000000e+00 : f32
    %108 = vector.broadcast %cst_47 : f32 to vector<1x32xf32>
    %109 = arith.addf %108, %107 : vector<1x32xf32>
    %110 = arith.divf %108, %109 : vector<1x32xf32>
    %111 = vector.extract_strided_slice %102 {offsets = [0, 32], sizes = [1, 32], strides = [1, 1]} : vector<1x128xf32> to vector<1x32xf32>
    %112 = vector.extract_strided_slice %98 {offsets = [0, 64], sizes = [1, 32], strides = [1, 1]} : vector<1x128xf32> to vector<1x32xf32>
    %113 = arith.addf %111, %112 : vector<1x32xf32>
    %114 = arith.negf %113 : vector<1x32xf32>
    %115 = math.exp %114 : vector<1x32xf32>
    %cst_48 = arith.constant 1.000000e+00 : f32
    %116 = vector.broadcast %cst_48 : f32 to vector<1x32xf32>
    %117 = arith.addf %116, %115 : vector<1x32xf32>
    %118 = arith.divf %116, %117 : vector<1x32xf32>
    %119 = vector.extract_strided_slice %102 {offsets = [0, 64], sizes = [1, 32], strides = [1, 1]} : vector<1x128xf32> to vector<1x32xf32>
    %120 = vector.extract_strided_slice %98 {offsets = [0, 96], sizes = [1, 32], strides = [1, 1]} : vector<1x128xf32> to vector<1x32xf32>
    %121 = arith.mulf %110, %120 : vector<1x32xf32>
    %122 = arith.addf %119, %121 : vector<1x32xf32>
    %123 = math.tanh %122 : vector<1x32xf32>
    %cst_49 = arith.constant 1.000000e+00 : f32
    %124 = vector.broadcast %cst_49 : f32 to vector<1x32xf32>
    %125 = arith.subf %124, %118 : vector<1x32xf32>
    %126 = arith.mulf %125, %123 : vector<1x32xf32>
    %127 = arith.mulf %118, %90 : vector<1x32xf32>
    %128 = arith.addf %126, %127 : vector<1x32xf32>
    %c0_50 = arith.constant 0 : index
    %c0_51 = arith.constant 0 : index
    %129 = vector.load %arg5[%c0_50, %c0_51] : memref<32x256xf32, #tpu.memory_space<vmem>>, vector<32x256xf32>
    %cst_52 = arith.constant dense<0.000000e+00> : vector<1x256xf32>
    %130 = tpu.matmul %128, %129, %cst_52 {dimension_numbers = #tpu.dot_dimension_numbers<[1], [0], [0], [1], [0, 0, 1, 1], [], []>} : vector<1x32xf32>, vector<32x256xf32>, vector<1x256xf32> -> vector<1x256xf32>
    %c0_53 = arith.constant 0 : index
    %c0_54 = arith.constant 0 : index
    %131 = vector.load %arg6[%c0_53, %c0_54] : memref<1x256xf32, #tpu.memory_space<vmem>>, vector<1x256xf32>
    %132 = arith.addf %130, %131 : vector<1x256xf32>
    %133 = vector.extract_strided_slice %132 {offsets = [0, 128], sizes = [1, 128], strides = [1, 1]} : vector<1x256xf32> to vector<1x128xf32>
    %134 = arith.index_cast %c2_i32 : i32 to index
    %c0_55 = arith.constant 0 : index
    %135 = vector.load %arg12[%134, %c0_55] : memref<16x128xf32, #tpu.memory_space<vmem>>, vector<1x128xf32>
    tpu.vector_store %arg12[%134, %c0_55], %133 {strides = array<i32>} : memref<16x128xf32, #tpu.memory_space<vmem>>, vector<1x128xf32>,
    %136 = vector.extract_strided_slice %132 {offsets = [0, 0], sizes = [1, 128], strides = [1, 1]} : vector<1x256xf32> to vector<1x128xf32>
    %c3_i32 = arith.constant 3 : i32
    %137 = arith.index_cast %c3_i32 : i32 to index
    %c0_56 = arith.constant 0 : index
    %138 = vector.load %arg11[%137, %c0_56] : memref<16x128xf32, #tpu.memory_space<vmem>>, vector<1x128xf32>
    tpu.vector_store %arg11[%137, %c0_56], %136 {strides = array<i32>} : memref<16x128xf32, #tpu.memory_space<vmem>>, vector<1x128xf32>,
    %139 = arith.index_cast %c3_i32 : i32 to index
    %c0_57 = arith.constant 0 : index
    %140 = vector.load %arg10[%139, %c0_57] : memref<16x128xf32, #tpu.memory_space<vmem>>, vector<1x128xf32>
    %141 = vector.extract_strided_slice %140 {offsets = [0, 0], sizes = [1, 32], strides = [1, 1]} : vector<1x128xf32> to vector<1x32xf32>
    %142 = vector.extract_strided_slice %136 {offsets = [0, 32], sizes = [1, 32], strides = [1, 1]} : vector<1x128xf32> to vector<1x32xf32>
    %143 = arith.addf %141, %142 : vector<1x32xf32>
    %144 = arith.negf %143 : vector<1x32xf32>
    %145 = math.exp %144 : vector<1x32xf32>
    %cst_58 = arith.constant 1.000000e+00 : f32
    %146 = vector.broadcast %cst_58 : f32 to vector<1x32xf32>
    %147 = arith.addf %146, %145 : vector<1x32xf32>
    %148 = arith.divf %146, %147 : vector<1x32xf32>
    %149 = vector.extract_strided_slice %140 {offsets = [0, 32], sizes = [1, 32], strides = [1, 1]} : vector<1x128xf32> to vector<1x32xf32>
    %150 = vector.extract_strided_slice %136 {offsets = [0, 64], sizes = [1, 32], strides = [1, 1]} : vector<1x128xf32> to vector<1x32xf32>
    %151 = arith.addf %149, %150 : vector<1x32xf32>
    %152 = arith.negf %151 : vector<1x32xf32>
    %153 = math.exp %152 : vector<1x32xf32>
    %cst_59 = arith.constant 1.000000e+00 : f32
    %154 = vector.broadcast %cst_59 : f32 to vector<1x32xf32>
    %155 = arith.addf %154, %153 : vector<1x32xf32>
    %156 = arith.divf %154, %155 : vector<1x32xf32>
    %157 = vector.extract_strided_slice %140 {offsets = [0, 64], sizes = [1, 32], strides = [1, 1]} : vector<1x128xf32> to vector<1x32xf32>
    %158 = vector.extract_strided_slice %136 {offsets = [0, 96], sizes = [1, 32], strides = [1, 1]} : vector<1x128xf32> to vector<1x32xf32>
    %159 = arith.mulf %148, %158 : vector<1x32xf32>
    %160 = arith.addf %157, %159 : vector<1x32xf32>
    %161 = math.tanh %160 : vector<1x32xf32>
    %cst_60 = arith.constant 1.000000e+00 : f32
    %162 = vector.broadcast %cst_60 : f32 to vector<1x32xf32>
    %163 = arith.subf %162, %156 : vector<1x32xf32>
    %164 = arith.mulf %163, %161 : vector<1x32xf32>
    %165 = arith.mulf %156, %128 : vector<1x32xf32>
    %166 = arith.addf %164, %165 : vector<1x32xf32>
    %c0_61 = arith.constant 0 : index
    %c0_62 = arith.constant 0 : index
    %167 = vector.load %arg5[%c0_61, %c0_62] : memref<32x256xf32, #tpu.memory_space<vmem>>, vector<32x256xf32>
    %cst_63 = arith.constant dense<0.000000e+00> : vector<1x256xf32>
    %168 = tpu.matmul %166, %167, %cst_63 {dimension_numbers = #tpu.dot_dimension_numbers<[1], [0], [0], [1], [0, 0, 1, 1], [], []>} : vector<1x32xf32>, vector<32x256xf32>, vector<1x256xf32> -> vector<1x256xf32>
    %c0_64 = arith.constant 0 : index
    %c0_65 = arith.constant 0 : index
    %169 = vector.load %arg6[%c0_64, %c0_65] : memref<1x256xf32, #tpu.memory_space<vmem>>, vector<1x256xf32>
    %170 = arith.addf %168, %169 : vector<1x256xf32>
    %171 = vector.extract_strided_slice %170 {offsets = [0, 128], sizes = [1, 128], strides = [1, 1]} : vector<1x256xf32> to vector<1x128xf32>
    %172 = arith.index_cast %c3_i32 : i32 to index
    %c0_66 = arith.constant 0 : index
    %173 = vector.load %arg12[%172, %c0_66] : memref<16x128xf32, #tpu.memory_space<vmem>>, vector<1x128xf32>
    tpu.vector_store %arg12[%172, %c0_66], %171 {strides = array<i32>} : memref<16x128xf32, #tpu.memory_space<vmem>>, vector<1x128xf32>,
    %174 = vector.extract_strided_slice %170 {offsets = [0, 0], sizes = [1, 128], strides = [1, 1]} : vector<1x256xf32> to vector<1x128xf32>
    %c4_i32 = arith.constant 4 : i32
    %175 = arith.index_cast %c4_i32 : i32 to index
    %c0_67 = arith.constant 0 : index
    %176 = vector.load %arg11[%175, %c0_67] : memref<16x128xf32, #tpu.memory_space<vmem>>, vector<1x128xf32>
    tpu.vector_store %arg11[%175, %c0_67], %174 {strides = array<i32>} : memref<16x128xf32, #tpu.memory_space<vmem>>, vector<1x128xf32>,
    %177 = arith.index_cast %c4_i32 : i32 to index
    %c0_68 = arith.constant 0 : index
    %178 = vector.load %arg10[%177, %c0_68] : memref<16x128xf32, #tpu.memory_space<vmem>>, vector<1x128xf32>
    %179 = vector.extract_strided_slice %178 {offsets = [0, 0], sizes = [1, 32], strides = [1, 1]} : vector<1x128xf32> to vector<1x32xf32>
    %180 = vector.extract_strided_slice %174 {offsets = [0, 32], sizes = [1, 32], strides = [1, 1]} : vector<1x128xf32> to vector<1x32xf32>
    %181 = arith.addf %179, %180 : vector<1x32xf32>
    %182 = arith.negf %181 : vector<1x32xf32>
    %183 = math.exp %182 : vector<1x32xf32>
    %cst_69 = arith.constant 1.000000e+00 : f32
    %184 = vector.broadcast %cst_69 : f32 to vector<1x32xf32>
    %185 = arith.addf %184, %183 : vector<1x32xf32>
    %186 = arith.divf %184, %185 : vector<1x32xf32>
    %187 = vector.extract_strided_slice %178 {offsets = [0, 32], sizes = [1, 32], strides = [1, 1]} : vector<1x128xf32> to vector<1x32xf32>
    %188 = vector.extract_strided_slice %174 {offsets = [0, 64], sizes = [1, 32], strides = [1, 1]} : vector<1x128xf32> to vector<1x32xf32>
    %189 = arith.addf %187, %188 : vector<1x32xf32>
    %190 = arith.negf %189 : vector<1x32xf32>
    %191 = math.exp %190 : vector<1x32xf32>
    %cst_70 = arith.constant 1.000000e+00 : f32
    %192 = vector.broadcast %cst_70 : f32 to vector<1x32xf32>
    %193 = arith.addf %192, %191 : vector<1x32xf32>
    %194 = arith.divf %192, %193 : vector<1x32xf32>
    %195 = vector.extract_strided_slice %178 {offsets = [0, 64], sizes = [1, 32], strides = [1, 1]} : vector<1x128xf32> to vector<1x32xf32>
    %196 = vector.extract_strided_slice %174 {offsets = [0, 96], sizes = [1, 32], strides = [1, 1]} : vector<1x128xf32> to vector<1x32xf32>
    %197 = arith.mulf %186, %196 : vector<1x32xf32>
    %198 = arith.addf %195, %197 : vector<1x32xf32>
    %199 = math.tanh %198 : vector<1x32xf32>
    %cst_71 = arith.constant 1.000000e+00 : f32
    %200 = vector.broadcast %cst_71 : f32 to vector<1x32xf32>
    %201 = arith.subf %200, %194 : vector<1x32xf32>
    %202 = arith.mulf %201, %199 : vector<1x32xf32>
    %203 = arith.mulf %194, %166 : vector<1x32xf32>
    %204 = arith.addf %202, %203 : vector<1x32xf32>
    %c0_72 = arith.constant 0 : index
    %c0_73 = arith.constant 0 : index
    %205 = vector.load %arg5[%c0_72, %c0_73] : memref<32x256xf32, #tpu.memory_space<vmem>>, vector<32x256xf32>
    %cst_74 = arith.constant dense<0.000000e+00> : vector<1x256xf32>
    %206 = tpu.matmul %204, %205, %cst_74 {dimension_numbers = #tpu.dot_dimension_numbers<[1], [0], [0], [1], [0, 0, 1, 1], [], []>} : vector<1x32xf32>, vector<32x256xf32>, vector<1x256xf32> -> vector<1x256xf32>
    %c0_75 = arith.constant 0 : index
    %c0_76 = arith.constant 0 : index
    %207 = vector.load %arg6[%c0_75, %c0_76] : memref<1x256xf32, #tpu.memory_space<vmem>>, vector<1x256xf32>
    %208 = arith.addf %206, %207 : vector<1x256xf32>
    %209 = vector.extract_strided_slice %208 {offsets = [0, 128], sizes = [1, 128], strides = [1, 1]} : vector<1x256xf32> to vector<1x128xf32>
    %210 = arith.index_cast %c4_i32 : i32 to index
    %c0_77 = arith.constant 0 : index
    %211 = vector.load %arg12[%210, %c0_77] : memref<16x128xf32, #tpu.memory_space<vmem>>, vector<1x128xf32>
    tpu.vector_store %arg12[%210, %c0_77], %209 {strides = array<i32>} : memref<16x128xf32, #tpu.memory_space<vmem>>, vector<1x128xf32>,
    %212 = vector.extract_strided_slice %208 {offsets = [0, 0], sizes = [1, 128], strides = [1, 1]} : vector<1x256xf32> to vector<1x128xf32>
    %c5_i32 = arith.constant 5 : i32
    %213 = arith.index_cast %c5_i32 : i32 to index
    %c0_78 = arith.constant 0 : index
    %214 = vector.load %arg11[%213, %c0_78] : memref<16x128xf32, #tpu.memory_space<vmem>>, vector<1x128xf32>
    tpu.vector_store %arg11[%213, %c0_78], %212 {strides = array<i32>} : memref<16x128xf32, #tpu.memory_space<vmem>>, vector<1x128xf32>,
    %215 = arith.index_cast %c5_i32 : i32 to index
    %c0_79 = arith.constant 0 : index
    %216 = vector.load %arg10[%215, %c0_79] : memref<16x128xf32, #tpu.memory_space<vmem>>, vector<1x128xf32>
    %217 = vector.extract_strided_slice %216 {offsets = [0, 0], sizes = [1, 32], strides = [1, 1]} : vector<1x128xf32> to vector<1x32xf32>
    %218 = vector.extract_strided_slice %212 {offsets = [0, 32], sizes = [1, 32], strides = [1, 1]} : vector<1x128xf32> to vector<1x32xf32>
    %219 = arith.addf %217, %218 : vector<1x32xf32>
    %220 = arith.negf %219 : vector<1x32xf32>
    %221 = math.exp %220 : vector<1x32xf32>
    %cst_80 = arith.constant 1.000000e+00 : f32
    %222 = vector.broadcast %cst_80 : f32 to vector<1x32xf32>
    %223 = arith.addf %222, %221 : vector<1x32xf32>
    %224 = arith.divf %222, %223 : vector<1x32xf32>
    %225 = vector.extract_strided_slice %216 {offsets = [0, 32], sizes = [1, 32], strides = [1, 1]} : vector<1x128xf32> to vector<1x32xf32>
    %226 = vector.extract_strided_slice %212 {offsets = [0, 64], sizes = [1, 32], strides = [1, 1]} : vector<1x128xf32> to vector<1x32xf32>
    %227 = arith.addf %225, %226 : vector<1x32xf32>
    %228 = arith.negf %227 : vector<1x32xf32>
    %229 = math.exp %228 : vector<1x32xf32>
    %cst_81 = arith.constant 1.000000e+00 : f32
    %230 = vector.broadcast %cst_81 : f32 to vector<1x32xf32>
    %231 = arith.addf %230, %229 : vector<1x32xf32>
    %232 = arith.divf %230, %231 : vector<1x32xf32>
    %233 = vector.extract_strided_slice %216 {offsets = [0, 64], sizes = [1, 32], strides = [1, 1]} : vector<1x128xf32> to vector<1x32xf32>
    %234 = vector.extract_strided_slice %212 {offsets = [0, 96], sizes = [1, 32], strides = [1, 1]} : vector<1x128xf32> to vector<1x32xf32>
    %235 = arith.mulf %224, %234 : vector<1x32xf32>
    %236 = arith.addf %233, %235 : vector<1x32xf32>
    %237 = math.tanh %236 : vector<1x32xf32>
    %cst_82 = arith.constant 1.000000e+00 : f32
    %238 = vector.broadcast %cst_82 : f32 to vector<1x32xf32>
    %239 = arith.subf %238, %232 : vector<1x32xf32>
    %240 = arith.mulf %239, %237 : vector<1x32xf32>
    %241 = arith.mulf %232, %204 : vector<1x32xf32>
    %242 = arith.addf %240, %241 : vector<1x32xf32>
    %c0_83 = arith.constant 0 : index
    %c0_84 = arith.constant 0 : index
    %243 = vector.load %arg5[%c0_83, %c0_84] : memref<32x256xf32, #tpu.memory_space<vmem>>, vector<32x256xf32>
    %cst_85 = arith.constant dense<0.000000e+00> : vector<1x256xf32>
    %244 = tpu.matmul %242, %243, %cst_85 {dimension_numbers = #tpu.dot_dimension_numbers<[1], [0], [0], [1], [0, 0, 1, 1], [], []>} : vector<1x32xf32>, vector<32x256xf32>, vector<1x256xf32> -> vector<1x256xf32>
    %c0_86 = arith.constant 0 : index
    %c0_87 = arith.constant 0 : index
    %245 = vector.load %arg6[%c0_86, %c0_87] : memref<1x256xf32, #tpu.memory_space<vmem>>, vector<1x256xf32>
    %246 = arith.addf %244, %245 : vector<1x256xf32>
    %247 = vector.extract_strided_slice %246 {offsets = [0, 128], sizes = [1, 128], strides = [1, 1]} : vector<1x256xf32> to vector<1x128xf32>
    %248 = arith.index_cast %c5_i32 : i32 to index
    %c0_88 = arith.constant 0 : index
    %249 = vector.load %arg12[%248, %c0_88] : memref<16x128xf32, #tpu.memory_space<vmem>>, vector<1x128xf32>
    tpu.vector_store %arg12[%248, %c0_88], %247 {strides = array<i32>} : memref<16x128xf32, #tpu.memory_space<vmem>>, vector<1x128xf32>,
    %250 = vector.extract_strided_slice %246 {offsets = [0, 0], sizes = [1, 128], strides = [1, 1]} : vector<1x256xf32> to vector<1x128xf32>
    %c6_i32 = arith.constant 6 : i32
    %251 = arith.index_cast %c6_i32 : i32 to index
    %c0_89 = arith.constant 0 : index
    %252 = vector.load %arg11[%251, %c0_89] : memref<16x128xf32, #tpu.memory_space<vmem>>, vector<1x128xf32>
    tpu.vector_store %arg11[%251, %c0_89], %250 {strides = array<i32>} : memref<16x128xf32, #tpu.memory_space<vmem>>, vector<1x128xf32>,
    %253 = arith.index_cast %c6_i32 : i32 to index
    %c0_90 = arith.constant 0 : index
    %254 = vector.load %arg10[%253, %c0_90] : memref<16x128xf32, #tpu.memory_space<vmem>>, vector<1x128xf32>
    %255 = vector.extract_strided_slice %254 {offsets = [0, 0], sizes = [1, 32], strides = [1, 1]} : vector<1x128xf32> to vector<1x32xf32>
    %256 = vector.extract_strided_slice %250 {offsets = [0, 32], sizes = [1, 32], strides = [1, 1]} : vector<1x128xf32> to vector<1x32xf32>
    %257 = arith.addf %255, %256 : vector<1x32xf32>
    %258 = arith.negf %257 : vector<1x32xf32>
    %259 = math.exp %258 : vector<1x32xf32>
    %cst_91 = arith.constant 1.000000e+00 : f32
    %260 = vector.broadcast %cst_91 : f32 to vector<1x32xf32>
    %261 = arith.addf %260, %259 : vector<1x32xf32>
    %262 = arith.divf %260, %261 : vector<1x32xf32>
    %263 = vector.extract_strided_slice %254 {offsets = [0, 32], sizes = [1, 32], strides = [1, 1]} : vector<1x128xf32> to vector<1x32xf32>
    %264 = vector.extract_strided_slice %250 {offsets = [0, 64], sizes = [1, 32], strides = [1, 1]} : vector<1x128xf32> to vector<1x32xf32>
    %265 = arith.addf %263, %264 : vector<1x32xf32>
    %266 = arith.negf %265 : vector<1x32xf32>
    %267 = math.exp %266 : vector<1x32xf32>
    %cst_92 = arith.constant 1.000000e+00 : f32
    %268 = vector.broadcast %cst_92 : f32 to vector<1x32xf32>
    %269 = arith.addf %268, %267 : vector<1x32xf32>
    %270 = arith.divf %268, %269 : vector<1x32xf32>
    %271 = vector.extract_strided_slice %254 {offsets = [0, 64], sizes = [1, 32], strides = [1, 1]} : vector<1x128xf32> to vector<1x32xf32>
    %272 = vector.extract_strided_slice %250 {offsets = [0, 96], sizes = [1, 32], strides = [1, 1]} : vector<1x128xf32> to vector<1x32xf32>
    %273 = arith.mulf %262, %272 : vector<1x32xf32>
    %274 = arith.addf %271, %273 : vector<1x32xf32>
    %275 = math.tanh %274 : vector<1x32xf32>
    %cst_93 = arith.constant 1.000000e+00 : f32
    %276 = vector.broadcast %cst_93 : f32 to vector<1x32xf32>
    %277 = arith.subf %276, %270 : vector<1x32xf32>
    %278 = arith.mulf %277, %275 : vector<1x32xf32>
    %279 = arith.mulf %270, %242 : vector<1x32xf32>
    %280 = arith.addf %278, %279 : vector<1x32xf32>
    %c0_94 = arith.constant 0 : index
    %c0_95 = arith.constant 0 : index
    %281 = vector.load %arg5[%c0_94, %c0_95] : memref<32x256xf32, #tpu.memory_space<vmem>>, vector<32x256xf32>
    %cst_96 = arith.constant dense<0.000000e+00> : vector<1x256xf32>
    %282 = tpu.matmul %280, %281, %cst_96 {dimension_numbers = #tpu.dot_dimension_numbers<[1], [0], [0], [1], [0, 0, 1, 1], [], []>} : vector<1x32xf32>, vector<32x256xf32>, vector<1x256xf32> -> vector<1x256xf32>
    %c0_97 = arith.constant 0 : index
    %c0_98 = arith.constant 0 : index
    %283 = vector.load %arg6[%c0_97, %c0_98] : memref<1x256xf32, #tpu.memory_space<vmem>>, vector<1x256xf32>
    %284 = arith.addf %282, %283 : vector<1x256xf32>
    %285 = vector.extract_strided_slice %284 {offsets = [0, 128], sizes = [1, 128], strides = [1, 1]} : vector<1x256xf32> to vector<1x128xf32>
    %286 = arith.index_cast %c6_i32 : i32 to index
    %c0_99 = arith.constant 0 : index
    %287 = vector.load %arg12[%286, %c0_99] : memref<16x128xf32, #tpu.memory_space<vmem>>, vector<1x128xf32>
    tpu.vector_store %arg12[%286, %c0_99], %285 {strides = array<i32>} : memref<16x128xf32, #tpu.memory_space<vmem>>, vector<1x128xf32>,
    %288 = vector.extract_strided_slice %284 {offsets = [0, 0], sizes = [1, 128], strides = [1, 1]} : vector<1x256xf32> to vector<1x128xf32>
    %c7_i32 = arith.constant 7 : i32
    %289 = arith.index_cast %c7_i32 : i32 to index
    %c0_100 = arith.constant 0 : index
    %290 = vector.load %arg11[%289, %c0_100] : memref<16x128xf32, #tpu.memory_space<vmem>>, vector<1x128xf32>
    tpu.vector_store %arg11[%289, %c0_100], %288 {strides = array<i32>} : memref<16x128xf32, #tpu.memory_space<vmem>>, vector<1x128xf32>,
    %291 = arith.index_cast %c7_i32 : i32 to index
    %c0_101 = arith.constant 0 : index
    %292 = vector.load %arg10[%291, %c0_101] : memref<16x128xf32, #tpu.memory_space<vmem>>, vector<1x128xf32>
    %293 = vector.extract_strided_slice %292 {offsets = [0, 0], sizes = [1, 32], strides = [1, 1]} : vector<1x128xf32> to vector<1x32xf32>
    %294 = vector.extract_strided_slice %288 {offsets = [0, 32], sizes = [1, 32], strides = [1, 1]} : vector<1x128xf32> to vector<1x32xf32>
    %295 = arith.addf %293, %294 : vector<1x32xf32>
    %296 = arith.negf %295 : vector<1x32xf32>
    %297 = math.exp %296 : vector<1x32xf32>
    %cst_102 = arith.constant 1.000000e+00 : f32
    %298 = vector.broadcast %cst_102 : f32 to vector<1x32xf32>
    %299 = arith.addf %298, %297 : vector<1x32xf32>
    %300 = arith.divf %298, %299 : vector<1x32xf32>
    %301 = vector.extract_strided_slice %292 {offsets = [0, 32], sizes = [1, 32], strides = [1, 1]} : vector<1x128xf32> to vector<1x32xf32>
    %302 = vector.extract_strided_slice %288 {offsets = [0, 64], sizes = [1, 32], strides = [1, 1]} : vector<1x128xf32> to vector<1x32xf32>
    %303 = arith.addf %301, %302 : vector<1x32xf32>
    %304 = arith.negf %303 : vector<1x32xf32>
    %305 = math.exp %304 : vector<1x32xf32>
    %cst_103 = arith.constant 1.000000e+00 : f32
    %306 = vector.broadcast %cst_103 : f32 to vector<1x32xf32>
    %307 = arith.addf %306, %305 : vector<1x32xf32>
    %308 = arith.divf %306, %307 : vector<1x32xf32>
    %309 = vector.extract_strided_slice %292 {offsets = [0, 64], sizes = [1, 32], strides = [1, 1]} : vector<1x128xf32> to vector<1x32xf32>
    %310 = vector.extract_strided_slice %288 {offsets = [0, 96], sizes = [1, 32], strides = [1, 1]} : vector<1x128xf32> to vector<1x32xf32>
    %311 = arith.mulf %300, %310 : vector<1x32xf32>
    %312 = arith.addf %309, %311 : vector<1x32xf32>
    %313 = math.tanh %312 : vector<1x32xf32>
    %cst_104 = arith.constant 1.000000e+00 : f32
    %314 = vector.broadcast %cst_104 : f32 to vector<1x32xf32>
    %315 = arith.subf %314, %308 : vector<1x32xf32>
    %316 = arith.mulf %315, %313 : vector<1x32xf32>
    %317 = arith.mulf %308, %280 : vector<1x32xf32>
    %318 = arith.addf %316, %317 : vector<1x32xf32>
    %c0_105 = arith.constant 0 : index
    %c0_106 = arith.constant 0 : index
    %319 = vector.load %arg5[%c0_105, %c0_106] : memref<32x256xf32, #tpu.memory_space<vmem>>, vector<32x256xf32>
    %cst_107 = arith.constant dense<0.000000e+00> : vector<1x256xf32>
    %320 = tpu.matmul %318, %319, %cst_107 {dimension_numbers = #tpu.dot_dimension_numbers<[1], [0], [0], [1], [0, 0, 1, 1], [], []>} : vector<1x32xf32>, vector<32x256xf32>, vector<1x256xf32> -> vector<1x256xf32>
    %c0_108 = arith.constant 0 : index
    %c0_109 = arith.constant 0 : index
    %321 = vector.load %arg6[%c0_108, %c0_109] : memref<1x256xf32, #tpu.memory_space<vmem>>, vector<1x256xf32>
    %322 = arith.addf %320, %321 : vector<1x256xf32>
    %323 = vector.extract_strided_slice %322 {offsets = [0, 128], sizes = [1, 128], strides = [1, 1]} : vector<1x256xf32> to vector<1x128xf32>
    %324 = arith.index_cast %c7_i32 : i32 to index
    %c0_110 = arith.constant 0 : index
    %325 = vector.load %arg12[%324, %c0_110] : memref<16x128xf32, #tpu.memory_space<vmem>>, vector<1x128xf32>
    tpu.vector_store %arg12[%324, %c0_110], %323 {strides = array<i32>} : memref<16x128xf32, #tpu.memory_space<vmem>>, vector<1x128xf32>,
    %326 = vector.extract_strided_slice %322 {offsets = [0, 0], sizes = [1, 128], strides = [1, 1]} : vector<1x256xf32> to vector<1x128xf32>
    %c8_i32 = arith.constant 8 : i32
    %327 = arith.index_cast %c8_i32 : i32 to index
    %c0_111 = arith.constant 0 : index
    %328 = vector.load %arg11[%327, %c0_111] : memref<16x128xf32, #tpu.memory_space<vmem>>, vector<1x128xf32>
    tpu.vector_store %arg11[%327, %c0_111], %326 {strides = array<i32>} : memref<16x128xf32, #tpu.memory_space<vmem>>, vector<1x128xf32>,
    %329 = arith.index_cast %c8_i32 : i32 to index
    %c0_112 = arith.constant 0 : index
    %330 = vector.load %arg10[%329, %c0_112] : memref<16x128xf32, #tpu.memory_space<vmem>>, vector<1x128xf32>
    %331 = vector.extract_strided_slice %330 {offsets = [0, 0], sizes = [1, 32], strides = [1, 1]} : vector<1x128xf32> to vector<1x32xf32>
    %332 = vector.extract_strided_slice %326 {offsets = [0, 32], sizes = [1, 32], strides = [1, 1]} : vector<1x128xf32> to vector<1x32xf32>
    %333 = arith.addf %331, %332 : vector<1x32xf32>
    %334 = arith.negf %333 : vector<1x32xf32>
    %335 = math.exp %334 : vector<1x32xf32>
    %cst_113 = arith.constant 1.000000e+00 : f32
    %336 = vector.broadcast %cst_113 : f32 to vector<1x32xf32>
    %337 = arith.addf %336, %335 : vector<1x32xf32>
    %338 = arith.divf %336, %337 : vector<1x32xf32>
    %339 = vector.extract_strided_slice %330 {offsets = [0, 32], sizes = [1, 32], strides = [1, 1]} : vector<1x128xf32> to vector<1x32xf32>
    %340 = vector.extract_strided_slice %326 {offsets = [0, 64], sizes = [1, 32], strides = [1, 1]} : vector<1x128xf32> to vector<1x32xf32>
    %341 = arith.addf %339, %340 : vector<1x32xf32>
    %342 = arith.negf %341 : vector<1x32xf32>
    %343 = math.exp %342 : vector<1x32xf32>
    %cst_114 = arith.constant 1.000000e+00 : f32
    %344 = vector.broadcast %cst_114 : f32 to vector<1x32xf32>
    %345 = arith.addf %344, %343 : vector<1x32xf32>
    %346 = arith.divf %344, %345 : vector<1x32xf32>
    %347 = vector.extract_strided_slice %330 {offsets = [0, 64], sizes = [1, 32], strides = [1, 1]} : vector<1x128xf32> to vector<1x32xf32>
    %348 = vector.extract_strided_slice %326 {offsets = [0, 96], sizes = [1, 32], strides = [1, 1]} : vector<1x128xf32> to vector<1x32xf32>
    %349 = arith.mulf %338, %348 : vector<1x32xf32>
    %350 = arith.addf %347, %349 : vector<1x32xf32>
    %351 = math.tanh %350 : vector<1x32xf32>
    %cst_115 = arith.constant 1.000000e+00 : f32
    %352 = vector.broadcast %cst_115 : f32 to vector<1x32xf32>
    %353 = arith.subf %352, %346 : vector<1x32xf32>
    %354 = arith.mulf %353, %351 : vector<1x32xf32>
    %355 = arith.mulf %346, %318 : vector<1x32xf32>
    %356 = arith.addf %354, %355 : vector<1x32xf32>
    %c0_116 = arith.constant 0 : index
    %c0_117 = arith.constant 0 : index
    %357 = vector.load %arg5[%c0_116, %c0_117] : memref<32x256xf32, #tpu.memory_space<vmem>>, vector<32x256xf32>
    %cst_118 = arith.constant dense<0.000000e+00> : vector<1x256xf32>
    %358 = tpu.matmul %356, %357, %cst_118 {dimension_numbers = #tpu.dot_dimension_numbers<[1], [0], [0], [1], [0, 0, 1, 1], [], []>} : vector<1x32xf32>, vector<32x256xf32>, vector<1x256xf32> -> vector<1x256xf32>
    %c0_119 = arith.constant 0 : index
    %c0_120 = arith.constant 0 : index
    %359 = vector.load %arg6[%c0_119, %c0_120] : memref<1x256xf32, #tpu.memory_space<vmem>>, vector<1x256xf32>
    %360 = arith.addf %358, %359 : vector<1x256xf32>
    %361 = vector.extract_strided_slice %360 {offsets = [0, 128], sizes = [1, 128], strides = [1, 1]} : vector<1x256xf32> to vector<1x128xf32>
    %362 = arith.index_cast %c8_i32 : i32 to index
    %c0_121 = arith.constant 0 : index
    %363 = vector.load %arg12[%362, %c0_121] : memref<16x128xf32, #tpu.memory_space<vmem>>, vector<1x128xf32>
    tpu.vector_store %arg12[%362, %c0_121], %361 {strides = array<i32>} : memref<16x128xf32, #tpu.memory_space<vmem>>, vector<1x128xf32>,
    %364 = vector.extract_strided_slice %360 {offsets = [0, 0], sizes = [1, 128], strides = [1, 1]} : vector<1x256xf32> to vector<1x128xf32>
    %c9_i32 = arith.constant 9 : i32
    %365 = arith.index_cast %c9_i32 : i32 to index
    %c0_122 = arith.constant 0 : index
    %366 = vector.load %arg11[%365, %c0_122] : memref<16x128xf32, #tpu.memory_space<vmem>>, vector<1x128xf32>
    tpu.vector_store %arg11[%365, %c0_122], %364 {strides = array<i32>} : memref<16x128xf32, #tpu.memory_space<vmem>>, vector<1x128xf32>,
    %367 = arith.index_cast %c9_i32 : i32 to index
    %c0_123 = arith.constant 0 : index
    %368 = vector.load %arg10[%367, %c0_123] : memref<16x128xf32, #tpu.memory_space<vmem>>, vector<1x128xf32>
    %369 = vector.extract_strided_slice %368 {offsets = [0, 0], sizes = [1, 32], strides = [1, 1]} : vector<1x128xf32> to vector<1x32xf32>
    %370 = vector.extract_strided_slice %364 {offsets = [0, 32], sizes = [1, 32], strides = [1, 1]} : vector<1x128xf32> to vector<1x32xf32>
    %371 = arith.addf %369, %370 : vector<1x32xf32>
    %372 = arith.negf %371 : vector<1x32xf32>
    %373 = math.exp %372 : vector<1x32xf32>
    %cst_124 = arith.constant 1.000000e+00 : f32
    %374 = vector.broadcast %cst_124 : f32 to vector<1x32xf32>
    %375 = arith.addf %374, %373 : vector<1x32xf32>
    %376 = arith.divf %374, %375 : vector<1x32xf32>
    %377 = vector.extract_strided_slice %368 {offsets = [0, 32], sizes = [1, 32], strides = [1, 1]} : vector<1x128xf32> to vector<1x32xf32>
    %378 = vector.extract_strided_slice %364 {offsets = [0, 64], sizes = [1, 32], strides = [1, 1]} : vector<1x128xf32> to vector<1x32xf32>
    %379 = arith.addf %377, %378 : vector<1x32xf32>
    %380 = arith.negf %379 : vector<1x32xf32>
    %381 = math.exp %380 : vector<1x32xf32>
    %cst_125 = arith.constant 1.000000e+00 : f32
    %382 = vector.broadcast %cst_125 : f32 to vector<1x32xf32>
    %383 = arith.addf %382, %381 : vector<1x32xf32>
    %384 = arith.divf %382, %383 : vector<1x32xf32>
    %385 = vector.extract_strided_slice %368 {offsets = [0, 64], sizes = [1, 32], strides = [1, 1]} : vector<1x128xf32> to vector<1x32xf32>
    %386 = vector.extract_strided_slice %364 {offsets = [0, 96], sizes = [1, 32], strides = [1, 1]} : vector<1x128xf32> to vector<1x32xf32>
    %387 = arith.mulf %376, %386 : vector<1x32xf32>
    %388 = arith.addf %385, %387 : vector<1x32xf32>
    %389 = math.tanh %388 : vector<1x32xf32>
    %cst_126 = arith.constant 1.000000e+00 : f32
    %390 = vector.broadcast %cst_126 : f32 to vector<1x32xf32>
    %391 = arith.subf %390, %384 : vector<1x32xf32>
    %392 = arith.mulf %391, %389 : vector<1x32xf32>
    %393 = arith.mulf %384, %356 : vector<1x32xf32>
    %394 = arith.addf %392, %393 : vector<1x32xf32>
    %c0_127 = arith.constant 0 : index
    %c0_128 = arith.constant 0 : index
    %395 = vector.load %arg5[%c0_127, %c0_128] : memref<32x256xf32, #tpu.memory_space<vmem>>, vector<32x256xf32>
    %cst_129 = arith.constant dense<0.000000e+00> : vector<1x256xf32>
    %396 = tpu.matmul %394, %395, %cst_129 {dimension_numbers = #tpu.dot_dimension_numbers<[1], [0], [0], [1], [0, 0, 1, 1], [], []>} : vector<1x32xf32>, vector<32x256xf32>, vector<1x256xf32> -> vector<1x256xf32>
    %c0_130 = arith.constant 0 : index
    %c0_131 = arith.constant 0 : index
    %397 = vector.load %arg6[%c0_130, %c0_131] : memref<1x256xf32, #tpu.memory_space<vmem>>, vector<1x256xf32>
    %398 = arith.addf %396, %397 : vector<1x256xf32>
    %399 = vector.extract_strided_slice %398 {offsets = [0, 128], sizes = [1, 128], strides = [1, 1]} : vector<1x256xf32> to vector<1x128xf32>
    %400 = arith.index_cast %c9_i32 : i32 to index
    %c0_132 = arith.constant 0 : index
    %401 = vector.load %arg12[%400, %c0_132] : memref<16x128xf32, #tpu.memory_space<vmem>>, vector<1x128xf32>
    tpu.vector_store %arg12[%400, %c0_132], %399 {strides = array<i32>} : memref<16x128xf32, #tpu.memory_space<vmem>>, vector<1x128xf32>,
    %402 = vector.extract_strided_slice %398 {offsets = [0, 0], sizes = [1, 128], strides = [1, 1]} : vector<1x256xf32> to vector<1x128xf32>
    %c10_i32 = arith.constant 10 : i32
    %403 = arith.index_cast %c10_i32 : i32 to index
    %c0_133 = arith.constant 0 : index
    %404 = vector.load %arg11[%403, %c0_133] : memref<16x128xf32, #tpu.memory_space<vmem>>, vector<1x128xf32>
    tpu.vector_store %arg11[%403, %c0_133], %402 {strides = array<i32>} : memref<16x128xf32, #tpu.memory_space<vmem>>, vector<1x128xf32>,
    %405 = arith.index_cast %c10_i32 : i32 to index
    %c0_134 = arith.constant 0 : index
    %406 = vector.load %arg10[%405, %c0_134] : memref<16x128xf32, #tpu.memory_space<vmem>>, vector<1x128xf32>
    %407 = vector.extract_strided_slice %406 {offsets = [0, 0], sizes = [1, 32], strides = [1, 1]} : vector<1x128xf32> to vector<1x32xf32>
    %408 = vector.extract_strided_slice %402 {offsets = [0, 32], sizes = [1, 32], strides = [1, 1]} : vector<1x128xf32> to vector<1x32xf32>
    %409 = arith.addf %407, %408 : vector<1x32xf32>
    %410 = arith.negf %409 : vector<1x32xf32>
    %411 = math.exp %410 : vector<1x32xf32>
    %cst_135 = arith.constant 1.000000e+00 : f32
    %412 = vector.broadcast %cst_135 : f32 to vector<1x32xf32>
    %413 = arith.addf %412, %411 : vector<1x32xf32>
    %414 = arith.divf %412, %413 : vector<1x32xf32>
    %415 = vector.extract_strided_slice %406 {offsets = [0, 32], sizes = [1, 32], strides = [1, 1]} : vector<1x128xf32> to vector<1x32xf32>
    %416 = vector.extract_strided_slice %402 {offsets = [0, 64], sizes = [1, 32], strides = [1, 1]} : vector<1x128xf32> to vector<1x32xf32>
    %417 = arith.addf %415, %416 : vector<1x32xf32>
    %418 = arith.negf %417 : vector<1x32xf32>
    %419 = math.exp %418 : vector<1x32xf32>
    %cst_136 = arith.constant 1.000000e+00 : f32
    %420 = vector.broadcast %cst_136 : f32 to vector<1x32xf32>
    %421 = arith.addf %420, %419 : vector<1x32xf32>
    %422 = arith.divf %420, %421 : vector<1x32xf32>
    %423 = vector.extract_strided_slice %406 {offsets = [0, 64], sizes = [1, 32], strides = [1, 1]} : vector<1x128xf32> to vector<1x32xf32>
    %424 = vector.extract_strided_slice %402 {offsets = [0, 96], sizes = [1, 32], strides = [1, 1]} : vector<1x128xf32> to vector<1x32xf32>
    %425 = arith.mulf %414, %424 : vector<1x32xf32>
    %426 = arith.addf %423, %425 : vector<1x32xf32>
    %427 = math.tanh %426 : vector<1x32xf32>
    %cst_137 = arith.constant 1.000000e+00 : f32
    %428 = vector.broadcast %cst_137 : f32 to vector<1x32xf32>
    %429 = arith.subf %428, %422 : vector<1x32xf32>
    %430 = arith.mulf %429, %427 : vector<1x32xf32>
    %431 = arith.mulf %422, %394 : vector<1x32xf32>
    %432 = arith.addf %430, %431 : vector<1x32xf32>
    %c0_138 = arith.constant 0 : index
    %c0_139 = arith.constant 0 : index
    %433 = vector.load %arg5[%c0_138, %c0_139] : memref<32x256xf32, #tpu.memory_space<vmem>>, vector<32x256xf32>
    %cst_140 = arith.constant dense<0.000000e+00> : vector<1x256xf32>
    %434 = tpu.matmul %432, %433, %cst_140 {dimension_numbers = #tpu.dot_dimension_numbers<[1], [0], [0], [1], [0, 0, 1, 1], [], []>} : vector<1x32xf32>, vector<32x256xf32>, vector<1x256xf32> -> vector<1x256xf32>
    %c0_141 = arith.constant 0 : index
    %c0_142 = arith.constant 0 : index
    %435 = vector.load %arg6[%c0_141, %c0_142] : memref<1x256xf32, #tpu.memory_space<vmem>>, vector<1x256xf32>
    %436 = arith.addf %434, %435 : vector<1x256xf32>
    %437 = vector.extract_strided_slice %436 {offsets = [0, 128], sizes = [1, 128], strides = [1, 1]} : vector<1x256xf32> to vector<1x128xf32>
    %438 = arith.index_cast %c10_i32 : i32 to index
    %c0_143 = arith.constant 0 : index
    %439 = vector.load %arg12[%438, %c0_143] : memref<16x128xf32, #tpu.memory_space<vmem>>, vector<1x128xf32>
    tpu.vector_store %arg12[%438, %c0_143], %437 {strides = array<i32>} : memref<16x128xf32, #tpu.memory_space<vmem>>, vector<1x128xf32>,
    %440 = vector.extract_strided_slice %436 {offsets = [0, 0], sizes = [1, 128], strides = [1, 1]} : vector<1x256xf32> to vector<1x128xf32>
    %c11_i32 = arith.constant 11 : i32
    %441 = arith.index_cast %c11_i32 : i32 to index
    %c0_144 = arith.constant 0 : index
    %442 = vector.load %arg11[%441, %c0_144] : memref<16x128xf32, #tpu.memory_space<vmem>>, vector<1x128xf32>
    tpu.vector_store %arg11[%441, %c0_144], %440 {strides = array<i32>} : memref<16x128xf32, #tpu.memory_space<vmem>>, vector<1x128xf32>,
    %443 = arith.index_cast %c11_i32 : i32 to index
    %c0_145 = arith.constant 0 : index
    %444 = vector.load %arg10[%443, %c0_145] : memref<16x128xf32, #tpu.memory_space<vmem>>, vector<1x128xf32>
    %445 = vector.extract_strided_slice %444 {offsets = [0, 0], sizes = [1, 32], strides = [1, 1]} : vector<1x128xf32> to vector<1x32xf32>
    %446 = vector.extract_strided_slice %440 {offsets = [0, 32], sizes = [1, 32], strides = [1, 1]} : vector<1x128xf32> to vector<1x32xf32>
    %447 = arith.addf %445, %446 : vector<1x32xf32>
    %448 = arith.negf %447 : vector<1x32xf32>
    %449 = math.exp %448 : vector<1x32xf32>
    %cst_146 = arith.constant 1.000000e+00 : f32
    %450 = vector.broadcast %cst_146 : f32 to vector<1x32xf32>
    %451 = arith.addf %450, %449 : vector<1x32xf32>
    %452 = arith.divf %450, %451 : vector<1x32xf32>
    %453 = vector.extract_strided_slice %444 {offsets = [0, 32], sizes = [1, 32], strides = [1, 1]} : vector<1x128xf32> to vector<1x32xf32>
    %454 = vector.extract_strided_slice %440 {offsets = [0, 64], sizes = [1, 32], strides = [1, 1]} : vector<1x128xf32> to vector<1x32xf32>
    %455 = arith.addf %453, %454 : vector<1x32xf32>
    %456 = arith.negf %455 : vector<1x32xf32>
    %457 = math.exp %456 : vector<1x32xf32>
    %cst_147 = arith.constant 1.000000e+00 : f32
    %458 = vector.broadcast %cst_147 : f32 to vector<1x32xf32>
    %459 = arith.addf %458, %457 : vector<1x32xf32>
    %460 = arith.divf %458, %459 : vector<1x32xf32>
    %461 = vector.extract_strided_slice %444 {offsets = [0, 64], sizes = [1, 32], strides = [1, 1]} : vector<1x128xf32> to vector<1x32xf32>
    %462 = vector.extract_strided_slice %440 {offsets = [0, 96], sizes = [1, 32], strides = [1, 1]} : vector<1x128xf32> to vector<1x32xf32>
    %463 = arith.mulf %452, %462 : vector<1x32xf32>
    %464 = arith.addf %461, %463 : vector<1x32xf32>
    %465 = math.tanh %464 : vector<1x32xf32>
    %cst_148 = arith.constant 1.000000e+00 : f32
    %466 = vector.broadcast %cst_148 : f32 to vector<1x32xf32>
    %467 = arith.subf %466, %460 : vector<1x32xf32>
    %468 = arith.mulf %467, %465 : vector<1x32xf32>
    %469 = arith.mulf %460, %432 : vector<1x32xf32>
    %470 = arith.addf %468, %469 : vector<1x32xf32>
    %c0_149 = arith.constant 0 : index
    %c0_150 = arith.constant 0 : index
    %471 = vector.load %arg5[%c0_149, %c0_150] : memref<32x256xf32, #tpu.memory_space<vmem>>, vector<32x256xf32>
    %cst_151 = arith.constant dense<0.000000e+00> : vector<1x256xf32>
    %472 = tpu.matmul %470, %471, %cst_151 {dimension_numbers = #tpu.dot_dimension_numbers<[1], [0], [0], [1], [0, 0, 1, 1], [], []>} : vector<1x32xf32>, vector<32x256xf32>, vector<1x256xf32> -> vector<1x256xf32>
    %c0_152 = arith.constant 0 : index
    %c0_153 = arith.constant 0 : index
    %473 = vector.load %arg6[%c0_152, %c0_153] : memref<1x256xf32, #tpu.memory_space<vmem>>, vector<1x256xf32>
    %474 = arith.addf %472, %473 : vector<1x256xf32>
    %475 = vector.extract_strided_slice %474 {offsets = [0, 128], sizes = [1, 128], strides = [1, 1]} : vector<1x256xf32> to vector<1x128xf32>
    %476 = arith.index_cast %c11_i32 : i32 to index
    %c0_154 = arith.constant 0 : index
    %477 = vector.load %arg12[%476, %c0_154] : memref<16x128xf32, #tpu.memory_space<vmem>>, vector<1x128xf32>
    tpu.vector_store %arg12[%476, %c0_154], %475 {strides = array<i32>} : memref<16x128xf32, #tpu.memory_space<vmem>>, vector<1x128xf32>,
    %478 = vector.extract_strided_slice %474 {offsets = [0, 0], sizes = [1, 128], strides = [1, 1]} : vector<1x256xf32> to vector<1x128xf32>
    %c12_i32 = arith.constant 12 : i32
    %479 = arith.index_cast %c12_i32 : i32 to index
    %c0_155 = arith.constant 0 : index
    %480 = vector.load %arg11[%479, %c0_155] : memref<16x128xf32, #tpu.memory_space<vmem>>, vector<1x128xf32>
    tpu.vector_store %arg11[%479, %c0_155], %478 {strides = array<i32>} : memref<16x128xf32, #tpu.memory_space<vmem>>, vector<1x128xf32>,
    %481 = arith.index_cast %c12_i32 : i32 to index
    %c0_156 = arith.constant 0 : index
    %482 = vector.load %arg10[%481, %c0_156] : memref<16x128xf32, #tpu.memory_space<vmem>>, vector<1x128xf32>
    %483 = vector.extract_strided_slice %482 {offsets = [0, 0], sizes = [1, 32], strides = [1, 1]} : vector<1x128xf32> to vector<1x32xf32>
    %484 = vector.extract_strided_slice %478 {offsets = [0, 32], sizes = [1, 32], strides = [1, 1]} : vector<1x128xf32> to vector<1x32xf32>
    %485 = arith.addf %483, %484 : vector<1x32xf32>
    %486 = arith.negf %485 : vector<1x32xf32>
    %487 = math.exp %486 : vector<1x32xf32>
    %cst_157 = arith.constant 1.000000e+00 : f32
    %488 = vector.broadcast %cst_157 : f32 to vector<1x32xf32>
    %489 = arith.addf %488, %487 : vector<1x32xf32>
    %490 = arith.divf %488, %489 : vector<1x32xf32>
    %491 = vector.extract_strided_slice %482 {offsets = [0, 32], sizes = [1, 32], strides = [1, 1]} : vector<1x128xf32> to vector<1x32xf32>
    %492 = vector.extract_strided_slice %478 {offsets = [0, 64], sizes = [1, 32], strides = [1, 1]} : vector<1x128xf32> to vector<1x32xf32>
    %493 = arith.addf %491, %492 : vector<1x32xf32>
    %494 = arith.negf %493 : vector<1x32xf32>
    %495 = math.exp %494 : vector<1x32xf32>
    %cst_158 = arith.constant 1.000000e+00 : f32
    %496 = vector.broadcast %cst_158 : f32 to vector<1x32xf32>
    %497 = arith.addf %496, %495 : vector<1x32xf32>
    %498 = arith.divf %496, %497 : vector<1x32xf32>
    %499 = vector.extract_strided_slice %482 {offsets = [0, 64], sizes = [1, 32], strides = [1, 1]} : vector<1x128xf32> to vector<1x32xf32>
    %500 = vector.extract_strided_slice %478 {offsets = [0, 96], sizes = [1, 32], strides = [1, 1]} : vector<1x128xf32> to vector<1x32xf32>
    %501 = arith.mulf %490, %500 : vector<1x32xf32>
    %502 = arith.addf %499, %501 : vector<1x32xf32>
    %503 = math.tanh %502 : vector<1x32xf32>
    %cst_159 = arith.constant 1.000000e+00 : f32
    %504 = vector.broadcast %cst_159 : f32 to vector<1x32xf32>
    %505 = arith.subf %504, %498 : vector<1x32xf32>
    %506 = arith.mulf %505, %503 : vector<1x32xf32>
    %507 = arith.mulf %498, %470 : vector<1x32xf32>
    %508 = arith.addf %506, %507 : vector<1x32xf32>
    %c0_160 = arith.constant 0 : index
    %c0_161 = arith.constant 0 : index
    %509 = vector.load %arg5[%c0_160, %c0_161] : memref<32x256xf32, #tpu.memory_space<vmem>>, vector<32x256xf32>
    %cst_162 = arith.constant dense<0.000000e+00> : vector<1x256xf32>
    %510 = tpu.matmul %508, %509, %cst_162 {dimension_numbers = #tpu.dot_dimension_numbers<[1], [0], [0], [1], [0, 0, 1, 1], [], []>} : vector<1x32xf32>, vector<32x256xf32>, vector<1x256xf32> -> vector<1x256xf32>
    %c0_163 = arith.constant 0 : index
    %c0_164 = arith.constant 0 : index
    %511 = vector.load %arg6[%c0_163, %c0_164] : memref<1x256xf32, #tpu.memory_space<vmem>>, vector<1x256xf32>
    %512 = arith.addf %510, %511 : vector<1x256xf32>
    %513 = vector.extract_strided_slice %512 {offsets = [0, 128], sizes = [1, 128], strides = [1, 1]} : vector<1x256xf32> to vector<1x128xf32>
    %514 = arith.index_cast %c12_i32 : i32 to index
    %c0_165 = arith.constant 0 : index
    %515 = vector.load %arg12[%514, %c0_165] : memref<16x128xf32, #tpu.memory_space<vmem>>, vector<1x128xf32>
    tpu.vector_store %arg12[%514, %c0_165], %513 {strides = array<i32>} : memref<16x128xf32, #tpu.memory_space<vmem>>, vector<1x128xf32>,
    %516 = vector.extract_strided_slice %512 {offsets = [0, 0], sizes = [1, 128], strides = [1, 1]} : vector<1x256xf32> to vector<1x128xf32>
    %c13_i32 = arith.constant 13 : i32
    %517 = arith.index_cast %c13_i32 : i32 to index
    %c0_166 = arith.constant 0 : index
    %518 = vector.load %arg11[%517, %c0_166] : memref<16x128xf32, #tpu.memory_space<vmem>>, vector<1x128xf32>
    tpu.vector_store %arg11[%517, %c0_166], %516 {strides = array<i32>} : memref<16x128xf32, #tpu.memory_space<vmem>>, vector<1x128xf32>,
    %519 = arith.index_cast %c13_i32 : i32 to index
    %c0_167 = arith.constant 0 : index
    %520 = vector.load %arg10[%519, %c0_167] : memref<16x128xf32, #tpu.memory_space<vmem>>, vector<1x128xf32>
    %521 = vector.extract_strided_slice %520 {offsets = [0, 0], sizes = [1, 32], strides = [1, 1]} : vector<1x128xf32> to vector<1x32xf32>
    %522 = vector.extract_strided_slice %516 {offsets = [0, 32], sizes = [1, 32], strides = [1, 1]} : vector<1x128xf32> to vector<1x32xf32>
    %523 = arith.addf %521, %522 : vector<1x32xf32>
    %524 = arith.negf %523 : vector<1x32xf32>
    %525 = math.exp %524 : vector<1x32xf32>
    %cst_168 = arith.constant 1.000000e+00 : f32
    %526 = vector.broadcast %cst_168 : f32 to vector<1x32xf32>
    %527 = arith.addf %526, %525 : vector<1x32xf32>
    %528 = arith.divf %526, %527 : vector<1x32xf32>
    %529 = vector.extract_strided_slice %520 {offsets = [0, 32], sizes = [1, 32], strides = [1, 1]} : vector<1x128xf32> to vector<1x32xf32>
    %530 = vector.extract_strided_slice %516 {offsets = [0, 64], sizes = [1, 32], strides = [1, 1]} : vector<1x128xf32> to vector<1x32xf32>
    %531 = arith.addf %529, %530 : vector<1x32xf32>
    %532 = arith.negf %531 : vector<1x32xf32>
    %533 = math.exp %532 : vector<1x32xf32>
    %cst_169 = arith.constant 1.000000e+00 : f32
    %534 = vector.broadcast %cst_169 : f32 to vector<1x32xf32>
    %535 = arith.addf %534, %533 : vector<1x32xf32>
    %536 = arith.divf %534, %535 : vector<1x32xf32>
    %537 = vector.extract_strided_slice %520 {offsets = [0, 64], sizes = [1, 32], strides = [1, 1]} : vector<1x128xf32> to vector<1x32xf32>
    %538 = vector.extract_strided_slice %516 {offsets = [0, 96], sizes = [1, 32], strides = [1, 1]} : vector<1x128xf32> to vector<1x32xf32>
    %539 = arith.mulf %528, %538 : vector<1x32xf32>
    %540 = arith.addf %537, %539 : vector<1x32xf32>
    %541 = math.tanh %540 : vector<1x32xf32>
    %cst_170 = arith.constant 1.000000e+00 : f32
    %542 = vector.broadcast %cst_170 : f32 to vector<1x32xf32>
    %543 = arith.subf %542, %536 : vector<1x32xf32>
    %544 = arith.mulf %543, %541 : vector<1x32xf32>
    %545 = arith.mulf %536, %508 : vector<1x32xf32>
    %546 = arith.addf %544, %545 : vector<1x32xf32>
    %c0_171 = arith.constant 0 : index
    %c0_172 = arith.constant 0 : index
    %547 = vector.load %arg5[%c0_171, %c0_172] : memref<32x256xf32, #tpu.memory_space<vmem>>, vector<32x256xf32>
    %cst_173 = arith.constant dense<0.000000e+00> : vector<1x256xf32>
    %548 = tpu.matmul %546, %547, %cst_173 {dimension_numbers = #tpu.dot_dimension_numbers<[1], [0], [0], [1], [0, 0, 1, 1], [], []>} : vector<1x32xf32>, vector<32x256xf32>, vector<1x256xf32> -> vector<1x256xf32>
    %c0_174 = arith.constant 0 : index
    %c0_175 = arith.constant 0 : index
    %549 = vector.load %arg6[%c0_174, %c0_175] : memref<1x256xf32, #tpu.memory_space<vmem>>, vector<1x256xf32>
    %550 = arith.addf %548, %549 : vector<1x256xf32>
    %551 = vector.extract_strided_slice %550 {offsets = [0, 128], sizes = [1, 128], strides = [1, 1]} : vector<1x256xf32> to vector<1x128xf32>
    %552 = arith.index_cast %c13_i32 : i32 to index
    %c0_176 = arith.constant 0 : index
    %553 = vector.load %arg12[%552, %c0_176] : memref<16x128xf32, #tpu.memory_space<vmem>>, vector<1x128xf32>
    tpu.vector_store %arg12[%552, %c0_176], %551 {strides = array<i32>} : memref<16x128xf32, #tpu.memory_space<vmem>>, vector<1x128xf32>,
    %554 = vector.extract_strided_slice %550 {offsets = [0, 0], sizes = [1, 128], strides = [1, 1]} : vector<1x256xf32> to vector<1x128xf32>
    %c14_i32 = arith.constant 14 : i32
    %555 = arith.index_cast %c14_i32 : i32 to index
    %c0_177 = arith.constant 0 : index
    %556 = vector.load %arg11[%555, %c0_177] : memref<16x128xf32, #tpu.memory_space<vmem>>, vector<1x128xf32>
    tpu.vector_store %arg11[%555, %c0_177], %554 {strides = array<i32>} : memref<16x128xf32, #tpu.memory_space<vmem>>, vector<1x128xf32>,
    %557 = arith.index_cast %c14_i32 : i32 to index
    %c0_178 = arith.constant 0 : index
    %558 = vector.load %arg10[%557, %c0_178] : memref<16x128xf32, #tpu.memory_space<vmem>>, vector<1x128xf32>
    %559 = vector.extract_strided_slice %558 {offsets = [0, 0], sizes = [1, 32], strides = [1, 1]} : vector<1x128xf32> to vector<1x32xf32>
    %560 = vector.extract_strided_slice %554 {offsets = [0, 32], sizes = [1, 32], strides = [1, 1]} : vector<1x128xf32> to vector<1x32xf32>
    %561 = arith.addf %559, %560 : vector<1x32xf32>
    %562 = arith.negf %561 : vector<1x32xf32>
    %563 = math.exp %562 : vector<1x32xf32>
    %cst_179 = arith.constant 1.000000e+00 : f32
    %564 = vector.broadcast %cst_179 : f32 to vector<1x32xf32>
    %565 = arith.addf %564, %563 : vector<1x32xf32>
    %566 = arith.divf %564, %565 : vector<1x32xf32>
    %567 = vector.extract_strided_slice %558 {offsets = [0, 32], sizes = [1, 32], strides = [1, 1]} : vector<1x128xf32> to vector<1x32xf32>
    %568 = vector.extract_strided_slice %554 {offsets = [0, 64], sizes = [1, 32], strides = [1, 1]} : vector<1x128xf32> to vector<1x32xf32>
    %569 = arith.addf %567, %568 : vector<1x32xf32>
    %570 = arith.negf %569 : vector<1x32xf32>
    %571 = math.exp %570 : vector<1x32xf32>
    %cst_180 = arith.constant 1.000000e+00 : f32
    %572 = vector.broadcast %cst_180 : f32 to vector<1x32xf32>
    %573 = arith.addf %572, %571 : vector<1x32xf32>
    %574 = arith.divf %572, %573 : vector<1x32xf32>
    %575 = vector.extract_strided_slice %558 {offsets = [0, 64], sizes = [1, 32], strides = [1, 1]} : vector<1x128xf32> to vector<1x32xf32>
    %576 = vector.extract_strided_slice %554 {offsets = [0, 96], sizes = [1, 32], strides = [1, 1]} : vector<1x128xf32> to vector<1x32xf32>
    %577 = arith.mulf %566, %576 : vector<1x32xf32>
    %578 = arith.addf %575, %577 : vector<1x32xf32>
    %579 = math.tanh %578 : vector<1x32xf32>
    %cst_181 = arith.constant 1.000000e+00 : f32
    %580 = vector.broadcast %cst_181 : f32 to vector<1x32xf32>
    %581 = arith.subf %580, %574 : vector<1x32xf32>
    %582 = arith.mulf %581, %579 : vector<1x32xf32>
    %583 = arith.mulf %574, %546 : vector<1x32xf32>
    %584 = arith.addf %582, %583 : vector<1x32xf32>
    %c0_182 = arith.constant 0 : index
    %c0_183 = arith.constant 0 : index
    %585 = vector.load %arg5[%c0_182, %c0_183] : memref<32x256xf32, #tpu.memory_space<vmem>>, vector<32x256xf32>
    %cst_184 = arith.constant dense<0.000000e+00> : vector<1x256xf32>
    %586 = tpu.matmul %584, %585, %cst_184 {dimension_numbers = #tpu.dot_dimension_numbers<[1], [0], [0], [1], [0, 0, 1, 1], [], []>} : vector<1x32xf32>, vector<32x256xf32>, vector<1x256xf32> -> vector<1x256xf32>
    %c0_185 = arith.constant 0 : index
    %c0_186 = arith.constant 0 : index
    %587 = vector.load %arg6[%c0_185, %c0_186] : memref<1x256xf32, #tpu.memory_space<vmem>>, vector<1x256xf32>
    %588 = arith.addf %586, %587 : vector<1x256xf32>
    %589 = vector.extract_strided_slice %588 {offsets = [0, 128], sizes = [1, 128], strides = [1, 1]} : vector<1x256xf32> to vector<1x128xf32>
    %590 = arith.index_cast %c14_i32 : i32 to index
    %c0_187 = arith.constant 0 : index
    %591 = vector.load %arg12[%590, %c0_187] : memref<16x128xf32, #tpu.memory_space<vmem>>, vector<1x128xf32>
    tpu.vector_store %arg12[%590, %c0_187], %589 {strides = array<i32>} : memref<16x128xf32, #tpu.memory_space<vmem>>, vector<1x128xf32>,
    %592 = vector.extract_strided_slice %588 {offsets = [0, 0], sizes = [1, 128], strides = [1, 1]} : vector<1x256xf32> to vector<1x128xf32>
    %c15_i32 = arith.constant 15 : i32
    %593 = arith.index_cast %c15_i32 : i32 to index
    %c0_188 = arith.constant 0 : index
    %594 = vector.load %arg11[%593, %c0_188] : memref<16x128xf32, #tpu.memory_space<vmem>>, vector<1x128xf32>
    tpu.vector_store %arg11[%593, %c0_188], %592 {strides = array<i32>} : memref<16x128xf32, #tpu.memory_space<vmem>>, vector<1x128xf32>,
    %595 = arith.index_cast %c15_i32 : i32 to index
    %c0_189 = arith.constant 0 : index
    %596 = vector.load %arg10[%595, %c0_189] : memref<16x128xf32, #tpu.memory_space<vmem>>, vector<1x128xf32>
    %597 = vector.extract_strided_slice %596 {offsets = [0, 0], sizes = [1, 32], strides = [1, 1]} : vector<1x128xf32> to vector<1x32xf32>
    %598 = vector.extract_strided_slice %592 {offsets = [0, 32], sizes = [1, 32], strides = [1, 1]} : vector<1x128xf32> to vector<1x32xf32>
    %599 = arith.addf %597, %598 : vector<1x32xf32>
    %600 = arith.negf %599 : vector<1x32xf32>
    %601 = math.exp %600 : vector<1x32xf32>
    %cst_190 = arith.constant 1.000000e+00 : f32
    %602 = vector.broadcast %cst_190 : f32 to vector<1x32xf32>
    %603 = arith.addf %602, %601 : vector<1x32xf32>
    %604 = arith.divf %602, %603 : vector<1x32xf32>
    %605 = vector.extract_strided_slice %596 {offsets = [0, 32], sizes = [1, 32], strides = [1, 1]} : vector<1x128xf32> to vector<1x32xf32>
    %606 = vector.extract_strided_slice %592 {offsets = [0, 64], sizes = [1, 32], strides = [1, 1]} : vector<1x128xf32> to vector<1x32xf32>
    %607 = arith.addf %605, %606 : vector<1x32xf32>
    %608 = arith.negf %607 : vector<1x32xf32>
    %609 = math.exp %608 : vector<1x32xf32>
    %cst_191 = arith.constant 1.000000e+00 : f32
    %610 = vector.broadcast %cst_191 : f32 to vector<1x32xf32>
    %611 = arith.addf %610, %609 : vector<1x32xf32>
    %612 = arith.divf %610, %611 : vector<1x32xf32>
    %613 = vector.extract_strided_slice %596 {offsets = [0, 64], sizes = [1, 32], strides = [1, 1]} : vector<1x128xf32> to vector<1x32xf32>
    %614 = vector.extract_strided_slice %592 {offsets = [0, 96], sizes = [1, 32], strides = [1, 1]} : vector<1x128xf32> to vector<1x32xf32>
    %615 = arith.mulf %604, %614 : vector<1x32xf32>
    %616 = arith.addf %613, %615 : vector<1x32xf32>
    %617 = math.tanh %616 : vector<1x32xf32>
    %cst_192 = arith.constant 1.000000e+00 : f32
    %618 = vector.broadcast %cst_192 : f32 to vector<1x32xf32>
    %619 = arith.subf %618, %612 : vector<1x32xf32>
    %620 = arith.mulf %619, %617 : vector<1x32xf32>
    %621 = arith.mulf %612, %584 : vector<1x32xf32>
    %622 = arith.addf %620, %621 : vector<1x32xf32>
    %c0_193 = arith.constant 0 : index
    %c0_194 = arith.constant 0 : index
    %623 = vector.load %arg5[%c0_193, %c0_194] : memref<32x256xf32, #tpu.memory_space<vmem>>, vector<32x256xf32>
    %cst_195 = arith.constant dense<0.000000e+00> : vector<1x256xf32>
    %624 = tpu.matmul %622, %623, %cst_195 {dimension_numbers = #tpu.dot_dimension_numbers<[1], [0], [0], [1], [0, 0, 1, 1], [], []>} : vector<1x32xf32>, vector<32x256xf32>, vector<1x256xf32> -> vector<1x256xf32>
    %c0_196 = arith.constant 0 : index
    %c0_197 = arith.constant 0 : index
    %625 = vector.load %arg6[%c0_196, %c0_197] : memref<1x256xf32, #tpu.memory_space<vmem>>, vector<1x256xf32>
    %626 = arith.addf %624, %625 : vector<1x256xf32>
    %627 = vector.extract_strided_slice %626 {offsets = [0, 128], sizes = [1, 128], strides = [1, 1]} : vector<1x256xf32> to vector<1x128xf32>
    %628 = arith.index_cast %c15_i32 : i32 to index
    %c0_198 = arith.constant 0 : index
    %629 = vector.load %arg12[%628, %c0_198] : memref<16x128xf32, #tpu.memory_space<vmem>>, vector<1x128xf32>
    tpu.vector_store %arg12[%628, %c0_198], %627 {strides = array<i32>} : memref<16x128xf32, #tpu.memory_space<vmem>>, vector<1x128xf32>,
    %630 = vector.extract_strided_slice %626 {offsets = [0, 0], sizes = [1, 128], strides = [1, 1]} : vector<1x256xf32> to vector<1x128xf32>
    %c16_i32 = arith.constant 16 : i32
    %631 = tpu.iota {dimensions = array<i32: 1>} : vector<16x128xi32>
    %c48_i32 = arith.constant 48 : i32
    %632 = vector.broadcast %c48_i32 : i32 to vector<16x128xi32>
    %633 = arith.cmpi slt, %631, %632 : vector<16x128xi32>
    %c0_199 = arith.constant 0 : index
    %c0_200 = arith.constant 0 : index
    %634 = vector.load %arg12[%c0_199, %c0_200] : memref<16x128xf32, #tpu.memory_space<vmem>>, vector<16x128xf32>
    %cst_201 = arith.constant -1.000000e+30 : f32
    %635 = vector.broadcast %cst_201 : f32 to vector<16x128xf32>
    %636 = arith.select %633, %634, %635 : vector<16x128xi1>, vector<16x128xf32>
    %cst_202 = arith.constant dense<0xFF800000> : vector<16xf32>
    %637 = vector.multi_reduction <maximumf>, %636, %cst_202 [1] : vector<16x128xf32> to vector<16xf32>
    %638 = vector.shape_cast %637 : vector<16xf32> to vector<16x1xf32>
    %639 = vector.broadcast %638 : vector<16x1xf32> to vector<16x128xf32>
    %640 = arith.subf %636, %639 : vector<16x128xf32>
    %641 = math.exp %640 : vector<16x128xf32>
    %cst_203 = arith.constant dense<0.000000e+00> : vector<16xf32>
    %642 = vector.multi_reduction <add>, %641, %cst_203 [1] : vector<16x128xf32> to vector<16xf32>
    %643 = vector.shape_cast %642 : vector<16xf32> to vector<16x1xf32>
    %644 = math.log %643 : vector<16x1xf32>
    %645 = vector.broadcast %644 : vector<16x1xf32> to vector<16x128xf32>
    %646 = arith.subf %640, %645 : vector<16x128xf32>
    %c48_i32_204 = arith.constant 48 : i32
    %647 = vector.broadcast %c48_i32_204 : i32 to vector<16x128xi32>
    %648 = arith.cmpi slt, %631, %647 : vector<16x128xi32>
    %cst_205 = arith.constant 0.000000e+00 : f32
    %649 = vector.broadcast %cst_205 : f32 to vector<16x128xf32>
    %650 = arith.select %648, %646, %649 : vector<16x128xi1>, vector<16x128xf32>
    %c0_206 = arith.constant 0 : index
    %c0_207 = arith.constant 0 : index
    %651 = vector.load %arg7[%c0_206, %c0_207] : memref<16x256xf32, #tpu.memory_space<vmem>>, vector<16x128xf32>
    tpu.vector_store %arg7[%c0_206, %c0_207], %650 {strides = array<i32>} : memref<16x256xf32, #tpu.memory_space<vmem>>, vector<16x128xf32>,
    %c10_i32_208 = arith.constant 10 : i32
    %652 = vector.broadcast %c10_i32_208 : i32 to vector<16x128xi32>
    %653 = arith.cmpi slt, %631, %652 : vector<16x128xi32>
    %c0_209 = arith.constant 0 : index
    %c0_210 = arith.constant 0 : index
    %654 = vector.load %arg9[%c0_209, %c0_210] : memref<16x128xf32, #tpu.memory_space<vmem>>, vector<16x128xf32>
    %c0_211 = arith.constant 0 : index
    %c0_212 = arith.constant 0 : index
    %655 = vector.load %arg11[%c0_211, %c0_212] : memref<16x128xf32, #tpu.memory_space<vmem>>, vector<16x128xf32>
    %656 = arith.addf %654, %655 : vector<16x128xf32>
    %cst_213 = arith.constant -1.000000e+30 : f32
    %657 = vector.broadcast %cst_213 : f32 to vector<16x128xf32>
    %658 = arith.select %653, %656, %657 : vector<16x128xi1>, vector<16x128xf32>
    %cst_214 = arith.constant dense<0xFF800000> : vector<16xf32>
    %659 = vector.multi_reduction <maximumf>, %658, %cst_214 [1] : vector<16x128xf32> to vector<16xf32>
    %660 = vector.shape_cast %659 : vector<16xf32> to vector<16x1xf32>
    %661 = vector.broadcast %660 : vector<16x1xf32> to vector<16x128xf32>
    %662 = arith.subf %658, %661 : vector<16x128xf32>
    %663 = math.exp %662 : vector<16x128xf32>
    %cst_215 = arith.constant dense<0.000000e+00> : vector<16xf32>
    %664 = vector.multi_reduction <add>, %663, %cst_215 [1] : vector<16x128xf32> to vector<16xf32>
    %665 = vector.shape_cast %664 : vector<16xf32> to vector<16x1xf32>
    %666 = vector.broadcast %665 : vector<16x1xf32> to vector<16x128xf32>
    %667 = arith.divf %663, %666 : vector<16x128xf32>
    %c0_216 = arith.constant 0 : index
    %c128_217 = arith.constant 128 : index
    %668 = vector.load %arg7[%c0_216, %c128_217] : memref<16x256xf32, #tpu.memory_space<vmem>>, vector<16x128xf32>
    tpu.vector_store %arg7[%c0_216, %c128_217], %667 {strides = array<i32>} : memref<16x256xf32, #tpu.memory_space<vmem>>, vector<16x128xf32>,
    %cst_218 = arith.constant 0.000000e+00 : f32
    %669 = vector.broadcast %cst_218 : f32 to vector<1x128xf32>
    %c0_219 = arith.constant 0 : index
    %c0_220 = arith.constant 0 : index
    %670 = vector.load %arg8[%c0_219, %c0_220] : memref<1x128xf32, #tpu.memory_space<vmem>>, vector<1x128xf32>
    tpu.vector_store %arg8[%c0_219, %c0_220], %669 {strides = array<i32>} : memref<1x128xf32, #tpu.memory_space<vmem>>, vector<1x128xf32>,
    %c0_221 = arith.constant 0 : index
    %c0_222 = arith.constant 0 : index
    %671 = vector.load %arg8[%c0_221, %c0_222] : memref<1x128xf32, #tpu.memory_space<vmem>>, vector<1x32xf32>
    tpu.vector_store %arg8[%c0_221, %c0_222], %622 {strides = array<i32>} : memref<1x128xf32, #tpu.memory_space<vmem>>, vector<1x32xf32>,
    return
  }
  func.func @transform_0(%arg0: i32) -> (i32, i32) {
    %c0_i32 = arith.constant 0 : i32
    %c0_i32_0 = arith.constant 0 : i32
    %c0_i32_1 = arith.constant 0 : i32
    return %c0_i32, %c0_i32_0 : i32, i32
  }
  func.func @transform_1(%arg0: i32) -> (i32, i32) {
    %c0_i32 = arith.constant 0 : i32
    %c0_i32_0 = arith.constant 0 : i32
    %c0_i32_1 = arith.constant 0 : i32
    return %c0_i32, %c0_i32_0 : i32, i32
  }
  func.func @transform_2(%arg0: i32) -> (i32, i32) {
    %c0_i32 = arith.constant 0 : i32
    %c0_i32_0 = arith.constant 0 : i32
    %c0_i32_1 = arith.constant 0 : i32
    return %c0_i32, %c0_i32_0 : i32, i32
  }
  func.func @transform_3(%arg0: i32) -> (i32, i32) {
    %c0_i32 = arith.constant 0 : i32
    %c0_i32_0 = arith.constant 0 : i32
    %c0_i32_1 = arith.constant 0 : i32
    return %c0_i32, %c0_i32_0 : i32, i32
  }
  func.func @transform_4(%arg0: i32) -> (i32, i32) {
    %c0_i32 = arith.constant 0 : i32
    %c0_i32_0 = arith.constant 0 : i32
    %c0_i32_1 = arith.constant 0 : i32
    return %c0_i32, %c0_i32_0 : i32, i32
  }
  func.func @transform_5(%arg0: i32) -> (i32, i32) {
    %c0_i32 = arith.constant 0 : i32
    %c0_i32_0 = arith.constant 0 : i32
    %c0_i32_1 = arith.constant 0 : i32
    return %c0_i32, %c0_i32_0 : i32, i32
  }
  func.func @transform_6(%arg0: i32) -> (i32, i32) {
    %c0_i32 = arith.constant 0 : i32
    %c0_i32_0 = arith.constant 0 : i32
    %c0_i32_1 = arith.constant 0 : i32
    return %c0_i32, %c0_i32_0 : i32, i32
  }
  func.func @transform_7(%arg0: i32) -> (i32, i32) {
    %c0_i32 = arith.constant 0 : i32
    %c0_i32_0 = arith.constant 0 : i32
    %c0_i32_1 = arith.constant 0 : i32
    return %c0_i32, %c0_i32_0 : i32, i32
  }
}

</mosaic_0001>

<llo_original>
// kernel: tpu_custom_call.1
$region0: #{tpu_custom_call.1}
  #allocation0 [shape = 'u32[]', space=smem, size = 0x4, offset = 0x4, fixed_abs, tag = 'smem constant byte address 0x4 - core index']
  #allocation1 [shape = 'u32[144,128]{1,0:T(1,128)}', space=vmem, size = 0x12000, scoped, tag = 'internal scratch']
  #allocation2 [shape = 'f32[16,128]{1,0:T(8,128)}', space=vmem, size = 0x2000, scoped, tag = 'scratch operand']
  #allocation3 [shape = 'f32[16,128]{1,0:T(8,128)}', space=vmem, size = 0x2000, scoped, tag = 'scratch operand']
  #allocation4 [shape = 'f32[16,128]{1,0:T(8,128)}', space=vmem, size = 0x2000, scoped, tag = 'scratch operand']
  #allocation5 [shape = 'f32[16,128]{1,0:T(8,128)}', space=vmem, size = 0x2000, scoped, tag = 'scratch operand']
  %s0 = inlined_call_operand.hbm [shape: f32[16,32], index: 0, kind: input, shape index: {}]
  %s1 = inlined_call_operand.vmem [shape: f32[1,32], index: 1, kind: input, shape index: {}]
  %s2 = inlined_call_operand.hbm [shape: f32[32,256], index: 2, kind: input, shape index: {}]
  %s3 = inlined_call_operand.vmem [shape: f32[1,256], index: 3, kind: input, shape index: {}]
  %s4 = inlined_call_operand.hbm [shape: f32[32,256], index: 4, kind: input, shape index: {}]
  %s5 = inlined_call_operand.vmem [shape: f32[1,256], index: 5, kind: input, shape index: {}]
  %s6 = inlined_call_operand.hbm [shape: f32[16,256], index: 6, kind: output, shape index: {0}]
  %s7 = inlined_call_operand.hbm [shape: f32[1,128], index: 7, kind: output, shape index: {1}]
  %8 = xla_tuple %s6, %s7
  %s9 = sld [smem:[#allocation0]]
  $region54: #{tpu_custom_call.1} parent=0
    _
  %s11 = ssub.s32 1, %s9
  %s12 = scalar_select 0, %s11, %s9
  $region1: #{tpu_custom_call.1} parent=0
    #allocation6 [shape = 'u8[8192]{0}', space=vmem, size = 0x2000, scoped, tag = 'input window, operand 0, single buffered']
    #allocation7 [shape = 's32[1]{0}', space=sflag, size = 0x4, scoped, tag = 'scoped memory for tpu_custom_call.1']
    #allocation8 [shape = 's32[1]{0}', space=sflag, size = 0x4, scoped, tag = 'scoped memory for tpu_custom_call.1']
    #allocation9 [shape = 'u8[32768]{0}', space=vmem, size = 0x8000, scoped, tag = 'input window, operand 2, single buffered']
    #allocation10 [shape = 's32[1]{0}', space=sflag, size = 0x4, scoped, tag = 'scoped memory for tpu_custom_call.1']
    #allocation11 [shape = 'u8[32768]{0}', space=vmem, size = 0x8000, scoped, tag = 'input window, operand 4, single buffered']
    #allocation12 [shape = 'u8[16384]{0}', space=vmem, size = 0x4000, scoped, tag = 'output window, operand 0, single buffered']
    #allocation13 [shape = 'u8[512]{0}', space=vmem, size = 0x400, scoped, tag = 'output window, operand 1, single buffered']
    #allocation14 [shape = 's32[1]{0}', space=sflag, size = 0x4, scoped, tag = 'scoped memory for tpu_custom_call.1']
    %13 = vsyncpa [#allocation7], 0
    %14 = vsyncpa [#allocation10], 0
    %15 = vsyncpa [#allocation8], 0
    %16 = vsyncpa [#allocation14], 0
    // Predicated region
    $region2: #{tpu_custom_call.1} parent=1 // pred_check
      _
    $region3: #{tpu_custom_call.1} parent=1 // pred_check_branch
      %18 = sbr.rel (0) target = $region5
    $region4: #{tpu_custom_call.1} parent=1 // pred_region
      %s20 = ssub.s32 256, 256
      %21 = vsyncadd [#allocation7], %s20
      %s22 = sshll.u32 [#allocation6], 4
      %s23 = int_to_ptr.vmem [resolvable:$true] %s22
      %28 = dma.hbm_to_vmem [thread:$0]  %s0, 256, %s23, [#allocation7], 128, 128, 8
    $region5: #{tpu_custom_call.1} parent=1 // pred_fallthru
      _
    // Predicated region
    $region6: #{tpu_custom_call.1} parent=1 // pred_check
      _
    $region7: #{tpu_custom_call.1} parent=1 // pred_check_branch
      %30 = sbr.rel (0) target = $region9
    $region8: #{tpu_custom_call.1} parent=1 // pred_region
      _
    $region9: #{tpu_custom_call.1} parent=1 // pred_fallthru
      _
    // Predicated region
    $region10: #{tpu_custom_call.1} parent=1 // pred_check
      _
    $region11: #{tpu_custom_call.1} parent=1 // pred_check_branch
      %32 = sbr.rel (0) target = $region13
    $region12: #{tpu_custom_call.1} parent=1 // pred_region
      %s34 = ssub.s32 1024, 1024
      %35 = vsyncadd [#allocation10], %s34
      %s36 = sshll.u32 [#allocation9], 4
      %s37 = int_to_ptr.vmem [resolvable:$true] %s36
      %42 = dma.hbm_to_vmem [thread:$0]  %s2, 1024, %s37, [#allocation10], 256, 256, 16
    $region13: #{tpu_custom_call.1} parent=1 // pred_fallthru
      _
    // Predicated region
    $region14: #{tpu_custom_call.1} parent=1 // pred_check
      _
    $region15: #{tpu_custom_call.1} parent=1 // pred_check_branch
      %44 = sbr.rel (0) target = $region17
    $region16: #{tpu_custom_call.1} parent=1 // pred_region
      _
    $region17: #{tpu_custom_call.1} parent=1 // pred_fallthru
      _
    // Predicated region
    $region18: #{tpu_custom_call.1} parent=1 // pred_check
      _
    $region19: #{tpu_custom_call.1} parent=1 // pred_check_branch
      %46 = sbr.rel (0) target = $region21
    $region20: #{tpu_custom_call.1} parent=1 // pred_region
      %s48 = ssub.s32 1024, 1024
      %49 = vsyncadd [#allocation10], %s48
      %s50 = sshll.u32 [#allocation11], 4
      %s51 = int_to_ptr.vmem [resolvable:$true] %s50
      %56 = dma.hbm_to_vmem [thread:$0]  %s4, 1024, %s51, [#allocation10], 256, 256, 16
    $region21: #{tpu_custom_call.1} parent=1 // pred_fallthru
      _
    // Predicated region
    $region22: #{tpu_custom_call.1} parent=1 // pred_check
      _
    $region23: #{tpu_custom_call.1} parent=1 // pred_check_branch
      %58 = sbr.rel (0) target = $region25
    $region24: #{tpu_custom_call.1} parent=1 // pred_region
      _
    $region25: #{tpu_custom_call.1} parent=1 // pred_fallthru
      _
    // Predicated region
    $region26: #{tpu_custom_call.1} parent=1 // pred_check
      _
    $region27: #{tpu_custom_call.1} parent=1 // pred_check_branch
      %60 = sbr.rel (0) target = $region29
    $region28: #{tpu_custom_call.1} parent=1 // pred_region
      %61 = dma.done [#allocation7], 256
    $region29: #{tpu_custom_call.1} parent=1 // pred_fallthru
      _
    // Predicated region
    $region30: #{tpu_custom_call.1} parent=1 // pred_check
      _
    $region31: #{tpu_custom_call.1} parent=1 // pred_check_branch
      %63 = sbr.rel (0) target = $region33
    $region32: #{tpu_custom_call.1} parent=1 // pred_region
      %64 = dma.done [#allocation10], 1024
    $region33: #{tpu_custom_call.1} parent=1 // pred_fallthru
      _
    // Predicated region
    $region34: #{tpu_custom_call.1} parent=1 // pred_check
      _
    $region35: #{tpu_custom_call.1} parent=1 // pred_check_branch
      %66 = sbr.rel (0) target = $region37
    $region36: #{tpu_custom_call.1} parent=1 // pred_region
      %67 = dma.done [#allocation10], 1024
    $region37: #{tpu_custom_call.1} parent=1 // pred_fallthru
      _
    %v68 = vld [vmem:[#allocation6] sm:$0xff]
    %v69 = vld [vmem:[#allocation6 + $0x8] sm:$0xff]
    %v70 = vld [vmem:[#allocation9] sm:$0xff]
    %v71 = vld [vmem:[#allocation9 + $0x10] sm:$0xff]
    %v72 = vld [vmem:[#allocation9 + $0x20] sm:$0xff]
    %v73 = vld [vmem:[#allocation9 + $0x30] sm:$0xff]
    %v74 = vld [vmem:[%s3] sm:$0x1]
    %v76 = vlaneseq
    %v77 = vshrl.u32 %v76, 7
    %v78 = vsub.s32 0, %v77
    %v79 = vrot.slane %v74, %v78
    %vm81 = vcmask 261120
    %v83 = vsel %vm81, %v68, 0
    %v86 = vsel %vm81, %v69, 0
    %88 = vmatprep.subr.mxu0 0.0
    %89 = vmatpush1.msra.mxu0 %v70
    %90 = vmatprep.subr.mxu0 0.0
    %91 = vmatpush1.msra.mxu0 %v71
    %92 = vmatprep.subr.mxu0 0.0
    %93 = vmatpush1.msra.mxu0 %v72
    %94 = vmatprep.subr.mxu0 0.0
    %95 = vmatpush1.msra.mxu0 %v73
    %96 = vmatprep.subr.mxu0 0.0
    %97 = vmatpush1.msra.mxu0 0.0
    %98 = vmatprep.subr.mxu0 0.0
    %99 = vmatpush1.msra.mxu0 0.0
    %100 = vmatprep.subr.mxu0 0.0
    %101 = vmatpush1.msra.mxu0 0.0
    %102 = vmatprep.subr.mxu0 0.0
    %103 = vmatpush1.msra.mxu0 0.0
    %104 = vmatprep.subr.mxu0 0.0
    %105 = vmatpush1.msra.mxu0 0.0
    %106 = vmatprep.subr.mxu0 0.0
    %107 = vmatpush1.msra.mxu0 0.0
    %108 = vmatprep.subr.mxu0 0.0
    %109 = vmatpush1.msra.mxu0 0.0
    %110 = vmatprep.subr.mxu0 0.0
    %111 = vmatpush1.msra.mxu0 0.0
    %112 = vmatprep.subr.mxu0 0.0
    %113 = vmatpush1.msra.mxu0 0.0
    %114 = vmatprep.subr.mxu0 0.0
    %115 = vmatpush1.msra.mxu0 0.0
    %116 = vmatprep.subr.mxu0 0.0
    %117 = vmatpush1.msra.mxu0 0.0
    %118 = vmatprep.subr.mxu0 0.0
    %119 = vmatpush1.msra.mxu0 0.0
    %120 = vmatprep.subr.mxu0 0.0
    %121 = vmatpush1.msra.mxu0 0.0
    %122 = vmatprep.subr.mxu0 0.0
    %123 = vmatpush1.msra.mxu0 0.0
    %124 = vmatprep.subr.mxu0 0.0
    %125 = vmatpush1.msra.mxu0 0.0
    %126 = vmatprep.subr.mxu0 0.0
    %127 = vmatpush1.msra.mxu0 0.0
    %128 = vmatprep.subr.mxu0 0.0
    %129 = vmatpush1.msra.mxu0 0.0
    %130 = vmatprep.subr.mxu0 0.0
    %131 = vmatpush1.msra.mxu0 0.0
    %132 = vmatprep.subr.mxu0 0.0
    %133 = vmatpush1.msra.mxu0 0.0
    %134 = vmatprep.subr.mxu0 0.0
    %135 = vmatpush1.msra.mxu0 0.0
    %136 = vmatprep.subr.mxu0 0.0
    %137 = vmatpush1.msra.mxu0 0.0
    %138 = vmatprep.subr.mxu0 0.0
    %139 = vmatpush1.msra.mxu0 0.0
    %140 = vmatprep.subr.mxu0 0.0
    %141 = vmatpush1.msra.mxu0 0.0
    %142 = vmatprep.subr.mxu0 0.0
    %143 = vmatpush1.msra.mxu0 0.0
    %144 = vmatprep.subr.mxu0 0.0
    %145 = vmatpush1.msra.mxu0 0.0
    %146 = vmatprep.subr.mxu0 0.0
    %147 = vmatpush1.msra.mxu0 0.0
    %148 = vmatprep.subr.mxu0 0.0
    %149 = vmatpush1.msra.mxu0 0.0
    %150 = vmatprep.subr.mxu0 0.0
    %151 = vmatpush1.msra.mxu0 0.0
    %152 = vmatprep.mubr.f32.mxu0 0.0
    %153 = vmatmul.mubr.f32.gmra.mrb[0].mxu0 %v83
    %v154 = vpop.f32.mrb[0].mxu0
    %v155 = vadd.f32 %v79, %v154
    %v156 = vpop.f32.mrb[0].mxu0
    %157 = vmatprep.mubr.f32.mxu0 0.0
    %158 = vmatmul.mubr.f32.gmra.mrb[0].mxu0 %v86
    %v159 = vpop.f32.mrb[0].mxu0
    %v160 = vadd.f32 %v79, %v159
    %v161 = vpop.f32.mrb[0].mxu0
    %162 = vdwg.mxu0
    %v163 = vmax.f32 %v155, 0.0
    %v164 = vmax.f32 %v160, 0.0
    %v165 = vld [vmem:[#allocation9 + $0x8] sm:$0xff]
    %v166 = vld [vmem:[#allocation9 + $0x18] sm:$0xff]
    %v167 = vld [vmem:[#allocation9 + $0x28] sm:$0xff]
    %v168 = vld [vmem:[#allocation9 + $0x38] sm:$0xff]
    %v169 = vld [vmem:[%s3 + $0x1] sm:$0x1]
    %v171 = vlaneseq
    %v172 = vshrl.u32 %v171, 7
    %v173 = vsub.s32 0, %v172
    %v174 = vrot.slane %v169, %v173
    %178 = vrot.lane.b32.xlu0 %v163, 96
    %v179 = vpop.permute.xlu0 %178
    %180 = vrot.lane.b32.xlu0 %v164, 96
    %v181 = vpop.permute.xlu0 %180
    %v182 = vsel %vm81, %v179, 0
    %v184 = vsel %vm81, %v181, 0
    %186 = vmatprep.subr.mxu0 0.0
    %187 = vmatpush1.msra.mxu0 %v165
    %188 = vmatprep.subr.mxu0 0.0
    %189 = vmatpush1.msra.mxu0 %v166
    %190 = vmatprep.subr.mxu0 0.0
    %191 = vmatpush1.msra.mxu0 %v167
    %192 = vmatprep.subr.mxu0 0.0
    %193 = vmatpush1.msra.mxu0 %v168
    %194 = vmatprep.subr.mxu0 0.0
    %195 = vmatpush1.msra.mxu0 0.0
    %196 = vmatprep.subr.mxu0 0.0
    %197 = vmatpush1.msra.mxu0 0.0
    %198 = vmatprep.subr.mxu0 0.0
    %199 = vmatpush1.msra.mxu0 0.0
    %200 = vmatprep.subr.mxu0 0.0
    %201 = vmatpush1.msra.mxu0 0.0
    %202 = vmatprep.subr.mxu0 0.0
    %203 = vmatpush1.msra.mxu0 0.0
    %204 = vmatprep.subr.mxu0 0.0
    %205 = vmatpush1.msra.mxu0 0.0
    %206 = vmatprep.subr.mxu0 0.0
    %207 = vmatpush1.msra.mxu0 0.0
    %208 = vmatprep.subr.mxu0 0.0
    %209 = vmatpush1.msra.mxu0 0.0
    %210 = vmatprep.subr.mxu0 0.0
    %211 = vmatpush1.msra.mxu0 0.0
    %212 = vmatprep.subr.mxu0 0.0
    %213 = vmatpush1.msra.mxu0 0.0
    %214 = vmatprep.subr.mxu0 0.0
    %215 = vmatpush1.msra.mxu0 0.0
    %216 = vmatprep.subr.mxu0 0.0
    %217 = vmatpush1.msra.mxu0 0.0
    %218 = vmatprep.subr.mxu0 0.0
    %219 = vmatpush1.msra.mxu0 0.0
    %220 = vmatprep.subr.mxu0 0.0
    %221 = vmatpush1.msra.mxu0 0.0
    %222 = vmatprep.subr.mxu0 0.0
    %223 = vmatpush1.msra.mxu0 0.0
    %224 = vmatprep.subr.mxu0 0.0
    %225 = vmatpush1.msra.mxu0 0.0
    %226 = vmatprep.subr.mxu0 0.0
    %227 = vmatpush1.msra.mxu0 0.0
    %228 = vmatprep.subr.mxu0 0.0
    %229 = vmatpush1.msra.mxu0 0.0
    %230 = vmatprep.subr.mxu0 0.0
    %231 = vmatpush1.msra.mxu0 0.0
    %232 = vmatprep.subr.mxu0 0.0
    %233 = vmatpush1.msra.mxu0 0.0
    %234 = vmatprep.subr.mxu0 0.0
    %235 = vmatpush1.msra.mxu0 0.0
    %236 = vmatprep.subr.mxu0 0.0
    %237 = vmatpush1.msra.mxu0 0.0
    %238 = vmatprep.subr.mxu0 0.0
    %239 = vmatpush1.msra.mxu0 0.0
    %240 = vmatprep.subr.mxu0 0.0
    %241 = vmatpush1.msra.mxu0 0.0
    %242 = vmatprep.subr.mxu0 0.0
    %243 = vmatpush1.msra.mxu0 0.0
    %244 = vmatprep.subr.mxu0 0.0
    %245 = vmatpush1.msra.mxu0 0.0
    %246 = vmatprep.subr.mxu0 0.0
    %247 = vmatpush1.msra.mxu0 0.0
    %248 = vmatprep.subr.mxu0 0.0
    %249 = vmatpush1.msra.mxu0 0.0
    %250 = vmatprep.mubr.f32.mxu0 0.0
    %251 = vmatmul.mubr.f32.gmra.mrb[0].mxu0 %v182
    %v252 = vpop.f32.mrb[0].mxu0
    %v253 = vadd.f32 %v174, %v252
    %v254 = vpop.f32.mrb[0].mxu0
    %255 = vmatprep.mubr.f32.mxu0 0.0
    %256 = vmatmul.mubr.f32.gmra.mrb[0].mxu0 %v184
    %v257 = vpop.f32.mrb[0].mxu0
    %v258 = vadd.f32 %v174, %v257
    %v259 = vpop.f32.mrb[0].mxu0
    %260 = vdwg.mxu0
    %261 = vst [vmem:[#allocation2] sm:$0xff] %v155
    %262 = vst [vmem:[#allocation2 + $0x8] sm:$0xff] %v160
    %263 = vst [vmem:[#allocation3] sm:$0xff] %v253
    %264 = vst [vmem:[#allocation3 + $0x8] sm:$0xff] %v258
    %v265 = vld [vmem:[%s1] sm:$0x1]
    %v266 = vld [vmem:[#allocation11] sm:$0xff]
    %v267 = vld [vmem:[#allocation11 + $0x8] sm:$0xff]
    %v268 = vld [vmem:[#allocation11 + $0x10] sm:$0xff]
    %v269 = vld [vmem:[#allocation11 + $0x18] sm:$0xff]
    %v270 = vld [vmem:[#allocation11 + $0x20] sm:$0xff]
    %v271 = vld [vmem:[#allocation11 + $0x28] sm:$0xff]
    %v272 = vld [vmem:[#allocation11 + $0x30] sm:$0xff]
    %v273 = vld [vmem:[#allocation11 + $0x38] sm:$0xff]
    %v274 = vld [vmem:[%s5] sm:$0x3]
    %v276 = vlaneseq
    %v277 = vshrl.u32 %v276, 7
    %v278 = vsub.s32 0, %v277
    %v279 = vrot.slane %v274, %v278
    %v282 = vsel %vm81, %v265, 0
    %284 = vmatprep.subr.mxu0 %v267
    %285 = vmatpush1.msra.mxu0 %v266
    %286 = vmatprep.subr.mxu0 %v269
    %287 = vmatpush1.msra.mxu0 %v268
    %288 = vmatprep.subr.mxu0 %v271
    %289 = vmatpush1.msra.mxu0 %v270
    %290 = vmatprep.subr.mxu0 %v273
    %291 = vmatpush1.msra.mxu0 %v272
    %292 = vmatprep.subr.mxu0 0.0
    %293 = vmatpush1.msra.mxu0 0.0
    %294 = vmatprep.subr.mxu0 0.0
    %295 = vmatpush1.msra.mxu0 0.0
    %296 = vmatprep.subr.mxu0 0.0
    %297 = vmatpush1.msra.mxu0 0.0
    %298 = vmatprep.subr.mxu0 0.0
    %299 = vmatpush1.msra.mxu0 0.0
    %300 = vmatprep.subr.mxu0 0.0
    %301 = vmatpush1.msra.mxu0 0.0
    %302 = vmatprep.subr.mxu0 0.0
    %303 = vmatpush1.msra.mxu0 0.0
    %304 = vmatprep.subr.mxu0 0.0
    %305 = vmatpush1.msra.mxu0 0.0
    %306 = vmatprep.subr.mxu0 0.0
    %307 = vmatpush1.msra.mxu0 0.0
    %308 = vmatprep.subr.mxu0 0.0
    %309 = vmatpush1.msra.mxu0 0.0
    %310 = vmatprep.subr.mxu0 0.0
    %311 = vmatpush1.msra.mxu0 0.0
    %312 = vmatprep.subr.mxu0 0.0
    %313 = vmatpush1.msra.mxu0 0.0
    %314 = vmatprep.subr.mxu0 0.0
    %315 = vmatpush1.msra.mxu0 0.0
    %316 = vmatprep.subr.mxu0 0.0
    %317 = vmatpush1.msra.mxu0 0.0
    %318 = vmatprep.subr.mxu0 0.0
    %319 = vmatpush1.msra.mxu0 0.0
    %320 = vmatprep.subr.mxu0 0.0
    %321 = vmatpush1.msra.mxu0 0.0
    %322 = vmatprep.subr.mxu0 0.0
    %323 = vmatpush1.msra.mxu0 0.0
    %324 = vmatprep.subr.mxu0 0.0
    %325 = vmatpush1.msra.mxu0 0.0
    %326 = vmatprep.subr.mxu0 0.0
    %327 = vmatpush1.msra.mxu0 0.0
    %328 = vmatprep.subr.mxu0 0.0
    %329 = vmatpush1.msra.mxu0 0.0
    %330 = vmatprep.subr.mxu0 0.0
    %331 = vmatpush1.msra.mxu0 0.0
    %332 = vmatprep.subr.mxu0 0.0
    %333 = vmatpush1.msra.mxu0 0.0
    %334 = vmatprep.subr.mxu0 0.0
    %335 = vmatpush1.msra.mxu0 0.0
    %336 = vmatprep.subr.mxu0 0.0
    %337 = vmatpush1.msra.mxu0 0.0
    %338 = vmatprep.subr.mxu0 0.0
    %339 = vmatpush1.msra.mxu0 0.0
    %340 = vmatprep.subr.mxu0 0.0
    %341 = vmatpush1.msra.mxu0 0.0
    %342 = vmatprep.subr.mxu0 0.0
    %343 = vmatpush1.msra.mxu0 0.0
    %344 = vmatprep.subr.mxu0 0.0
    %345 = vmatpush1.msra.mxu0 0.0
    %346 = vmatprep.subr.mxu0 0.0
    %347 = vmatpush1.msra.mxu0 0.0
    %348 = vmatprep.mubr.f32.mxu0 0.0
    %349 = vmatmul.mubr.f32.gmra.mrb[0].mxu0 %v282
    %v350 = vpop.f32.mrb[0].mxu0
    %v351 = vadd.f32 %v279, %v350
    %v352 = vpop.f32.mrb[0].mxu0
    %353 = vdwg.mxu0
    %354 = vst [vmem:[#allocation4] sm:$0x1] %v351
    %v355 = vld [vmem:[#allocation3] sm:$0x1]
    %357 = vrot.lane.b32.xlu0 %v351, 96
    %v358 = vpop.permute.xlu0 %357
    %v360 = vadd.f32 %v355, %v358
    %v361 = vxor.u32 %v360, 2147483648
    %v362 = vmul.f32 %v361, 1.442695
    %v363 = vpow.pop %v362
    %v364 = vadd.f32 %v363, 1.0
    %v365 = vrcp.pop %v364
    %v366 = vmul.f32 1.0, %v365
    %367 = vrot.lane.b32.xlu0 %v351, 32
    %v368 = vpop.permute.xlu0 %367
    %v370 = vmul.f32 %v366, %v368
    %372 = vrot.lane.b32.xlu0 %v370, 64
    %v373 = vpop.permute.xlu0 %372
    %v375 = vadd.f32 %v355, %v373
    %v376 = vtanh.pop %v375
    %v377 = vsub.f32 1.0, %v366
    %379 = vrot.lane.b32.xlu0 %v376, 96
    %v380 = vpop.permute.xlu0 %379
    %v382 = vmul.f32 %v377, %v380
    %v383 = vlaneseq
    %v384 = vshrl.u32 %v383, 7
    %v385 = vsub.s32 0, %v384
    %v386 = vrot.slane %v265, %v385
    %387 = vrot.lane.b32.xlu0 %v386, 32
    %v388 = vpop.permute.xlu0 %387
    %v390 = vmul.f32 %v366, %v388
    %v391 = vadd.f32 %v382, %v390
    %v392 = vld [vmem:[#allocation11] sm:$0xff]
    %v393 = vld [vmem:[#allocation11 + $0x8] sm:$0xff]
    %v394 = vld [vmem:[#allocation11 + $0x10] sm:$0xff]
    %v395 = vld [vmem:[#allocation11 + $0x18] sm:$0xff]
    %v396 = vld [vmem:[#allocation11 + $0x20] sm:$0xff]
    %v397 = vld [vmem:[#allocation11 + $0x28] sm:$0xff]
    %v398 = vld [vmem:[#allocation11 + $0x30] sm:$0xff]
    %v399 = vld [vmem:[#allocation11 + $0x38] sm:$0xff]
    %v400 = vld [vmem:[%s5] sm:$0x3]
    %402 = vrot.lane.b32.xlu0 %v391, 96
    %v403 = vpop.permute.xlu0 %402
    %v405 = vlaneseq
    %v406 = vshrl.u32 %v405, 7
    %v407 = vsub.s32 0, %v406
    %v408 = vrot.slane %v400, %v407
    %v409 = vlaneseq
    %v410 = vshrl.u32 %v409, 7
    %v411 = vsub.s32 1, %v410
    %v412 = vrot.slane %v400, %v411
    %v415 = vsel %vm81, %v403, 0
    %417 = vmatprep.subr.mxu0 %v393
    %418 = vmatpush1.msra.mxu0 %v392
    %419 = vmatprep.subr.mxu0 %v395
    %420 = vmatpush1.msra.mxu0 %v394
    %421 = vmatprep.subr.mxu0 %v397
    %422 = vmatpush1.msra.mxu0 %v396
    %423 = vmatprep.subr.mxu0 %v399
    %424 = vmatpush1.msra.mxu0 %v398
    %425 = vmatprep.subr.mxu0 0.0
    %426 = vmatpush1.msra.mxu0 0.0
    %427 = vmatprep.subr.mxu0 0.0
    %428 = vmatpush1.msra.mxu0 0.0
    %429 = vmatprep.subr.mxu0 0.0
    %430 = vmatpush1.msra.mxu0 0.0
    %431 = vmatprep.subr.mxu0 0.0
    %432 = vmatpush1.msra.mxu0 0.0
    %433 = vmatprep.subr.mxu0 0.0
    %434 = vmatpush1.msra.mxu0 0.0
    %435 = vmatprep.subr.mxu0 0.0
    %436 = vmatpush1.msra.mxu0 0.0
    %437 = vmatprep.subr.mxu0 0.0
    %438 = vmatpush1.msra.mxu0 0.0
    %439 = vmatprep.subr.mxu0 0.0
    %440 = vmatpush1.msra.mxu0 0.0
    %441 = vmatprep.subr.mxu0 0.0
    %442 = vmatpush1.msra.mxu0 0.0
    %443 = vmatprep.subr.mxu0 0.0
    %444 = vmatpush1.msra.mxu0 0.0
    %445 = vmatprep.subr.mxu0 0.0
    %446 = vmatpush1.msra.mxu0 0.0
    %447 = vmatprep.subr.mxu0 0.0
    %448 = vmatpush1.msra.mxu0 0.0
    %449 = vmatprep.subr.mxu0 0.0
    %450 = vmatpush1.msra.mxu0 0.0
    %451 = vmatprep.subr.mxu0 0.0
    %452 = vmatpush1.msra.mxu0 0.0
    %453 = vmatprep.subr.mxu0 0.0
    %454 = vmatpush1.msra.mxu0 0.0
    %455 = vmatprep.subr.mxu0 0.0
    %456 = vmatpush1.msra.mxu0 0.0
    %457 = vmatprep.subr.mxu0 0.0
    %458 = vmatpush1.msra.mxu0 0.0
    %459 = vmatprep.subr.mxu0 0.0
    %460 = vmatpush1.msra.mxu0 0.0
    %461 = vmatprep.subr.mxu0 0.0
    %462 = vmatpush1.msra.mxu0 0.0
    %463 = vmatprep.subr.mxu0 0.0
    %464 = vmatpush1.msra.mxu0 0.0
    %465 = vmatprep.subr.mxu0 0.0
    %466 = vmatpush1.msra.mxu0 0.0
    %467 = vmatprep.subr.mxu0 0.0
    %468 = vmatpush1.msra.mxu0 0.0
    %469 = vmatprep.subr.mxu0 0.0
    %470 = vmatpush1.msra.mxu0 0.0
    %471 = vmatprep.subr.mxu0 0.0
    %472 = vmatpush1.msra.mxu0 0.0
    %473 = vmatprep.subr.mxu0 0.0
    %474 = vmatpush1.msra.mxu0 0.0
    %475 = vmatprep.subr.mxu0 0.0
    %476 = vmatpush1.msra.mxu0 0.0
    %477 = vmatprep.subr.mxu0 0.0
    %478 = vmatpush1.msra.mxu0 0.0
    %479 = vmatprep.subr.mxu0 0.0
    %480 = vmatpush1.msra.mxu0 0.0
    %481 = vmatprep.mubr.f32.mxu0 0.0
    %482 = vmatmul.mubr.f32.gmra.mrb[0].mxu0 %v415
    %v483 = vpop.f32.mrb[0].mxu0
    %v484 = vadd.f32 %v408, %v483
    %v485 = vpop.f32.mrb[0].mxu0
    %v486 = vadd.f32 %v412, %v485
    %487 = vdwg.mxu0
    %488 = vst [vmem:[#allocation5] sm:$0x1] %v486
    %489 = vst [vmem:[#allocation4 + $0x1] sm:$0x1] %v484
    %v490 = vld [vmem:[#allocation3 + $0x1] sm:$0x1]
    %492 = vrot.lane.b32.xlu0 %v484, 96
    %v493 = vpop.permute.xlu0 %492
    %v495 = vadd.f32 %v490, %v493
    %v496 = vxor.u32 %v495, 2147483648
    %v497 = vmul.f32 %v496, 1.442695
    %v498 = vpow.pop %v497
    %v499 = vadd.f32 %v498, 1.0
    %v500 = vrcp.pop %v499
    %v501 = vmul.f32 1.0, %v500
    %502 = vrot.lane.b32.xlu0 %v484, 32
    %v503 = vpop.permute.xlu0 %502
    %v505 = vmul.f32 %v501, %v503
    %507 = vrot.lane.b32.xlu0 %v505, 64
    %v508 = vpop.permute.xlu0 %507
    %v510 = vadd.f32 %v490, %v508
    %v511 = vtanh.pop %v510
    %v512 = vsub.f32 1.0, %v501
    %514 = vrot.lane.b32.xlu0 %v511, 96
    %v515 = vpop.permute.xlu0 %514
    %v517 = vmul.f32 %v512, %v515
    %v518 = vmul.f32 %v501, %v391
    %v519 = vadd.f32 %v517, %v518
    %v520 = vld [vmem:[#allocation11] sm:$0xff]
    %v521 = vld [vmem:[#allocation11 + $0x8] sm:$0xff]
    %v522 = vld [vmem:[#allocation11 + $0x10] sm:$0xff]
    %v523 = vld [vmem:[#allocation11 + $0x18] sm:$0xff]
    %v524 = vld [vmem:[#allocation11 + $0x20] sm:$0xff]
    %v525 = vld [vmem:[#allocation11 + $0x28] sm:$0xff]
    %v526 = vld [vmem:[#allocation11 + $0x30] sm:$0xff]
    %v527 = vld [vmem:[#allocation11 + $0x38] sm:$0xff]
    %v528 = vld [vmem:[%s5] sm:$0x3]
    %530 = vrot.lane.b32.xlu0 %v519, 96
    %v531 = vpop.permute.xlu0 %530
    %v533 = vlaneseq
    %v534 = vshrl.u32 %v533, 7
    %v535 = vsub.s32 0, %v534
    %v536 = vrot.slane %v528, %v535
    %v537 = vlaneseq
    %v538 = vshrl.u32 %v537, 7
    %v539 = vsub.s32 1, %v538
    %v540 = vrot.slane %v528, %v539
    %v543 = vsel %vm81, %v531, 0
    %545 = vmatprep.subr.mxu0 %v521
    %546 = vmatpush1.msra.mxu0 %v520
    %547 = vmatprep.subr.mxu0 %v523
    %548 = vmatpush1.msra.mxu0 %v522
    %549 = vmatprep.subr.mxu0 %v525
    %550 = vmatpush1.msra.mxu0 %v524
    %551 = vmatprep.subr.mxu0 %v527
    %552 = vmatpush1.msra.mxu0 %v526
    %553 = vmatprep.subr.mxu0 0.0
    %554 = vmatpush1.msra.mxu0 0.0
    %555 = vmatprep.subr.mxu0 0.0
    %556 = vmatpush1.msra.mxu0 0.0
    %557 = vmatprep.subr.mxu0 0.0
    %558 = vmatpush1.msra.mxu0 0.0
    %559 = vmatprep.subr.mxu0 0.0
    %560 = vmatpush1.msra.mxu0 0.0
    %561 = vmatprep.subr.mxu0 0.0
    %562 = vmatpush1.msra.mxu0 0.0
    %563 = vmatprep.subr.mxu0 0.0
    %564 = vmatpush1.msra.mxu0 0.0
    %565 = vmatprep.subr.mxu0 0.0
    %566 = vmatpush1.msra.mxu0 0.0
    %567 = vmatprep.subr.mxu0 0.0
    %568 = vmatpush1.msra.mxu0 0.0
    %569 = vmatprep.subr.mxu0 0.0
    %570 = vmatpush1.msra.mxu0 0.0
    %571 = vmatprep.subr.mxu0 0.0
    %572 = vmatpush1.msra.mxu0 0.0
    %573 = vmatprep.subr.mxu0 0.0
    %574 = vmatpush1.msra.mxu0 0.0
    %575 = vmatprep.subr.mxu0 0.0
    %576 = vmatpush1.msra.mxu0 0.0
    %577 = vmatprep.subr.mxu0 0.0
    %578 = vmatpush1.msra.mxu0 0.0
    %579 = vmatprep.subr.mxu0 0.0
    %580 = vmatpush1.msra.mxu0 0.0
    %581 = vmatprep.subr.mxu0 0.0
    %582 = vmatpush1.msra.mxu0 0.0
    %583 = vmatprep.subr.mxu0 0.0
    %584 = vmatpush1.msra.mxu0 0.0
    %585 = vmatprep.subr.mxu0 0.0
    %586 = vmatpush1.msra.mxu0 0.0
    %587 = vmatprep.subr.mxu0 0.0
    %588 = vmatpush1.msra.mxu0 0.0
    %589 = vmatprep.subr.mxu0 0.0
    %590 = vmatpush1.msra.mxu0 0.0
    %591 = vmatprep.subr.mxu0 0.0
    %592 = vmatpush1.msra.mxu0 0.0
    %593 = vmatprep.subr.mxu0 0.0
    %594 = vmatpush1.msra.mxu0 0.0
    %595 = vmatprep.subr.mxu0 0.0
    %596 = vmatpush1.msra.mxu0 0.0
    %597 = vmatprep.subr.mxu0 0.0
    %598 = vmatpush1.msra.mxu0 0.0
    %599 = vmatprep.subr.mxu0 0.0
    %600 = vmatpush1.msra.mxu0 0.0
    %601 = vmatprep.subr.mxu0 0.0
    %602 = vmatpush1.msra.mxu0 0.0
    %603 = vmatprep.subr.mxu0 0.0
    %604 = vmatpush1.msra.mxu0 0.0
    %605 = vmatprep.subr.mxu0 0.0
    %606 = vmatpush1.msra.mxu0 0.0
    %607 = vmatprep.subr.mxu0 0.0
    %608 = vmatpush1.msra.mxu0 0.0
    %609 = vmatprep.mubr.f32.mxu0 0.0
    %610 = vmatmul.mubr.f32.gmra.mrb[0].mxu0 %v543
    %v611 = vpop.f32.mrb[0].mxu0
    %v612 = vadd.f32 %v536, %v611
    %v613 = vpop.f32.mrb[0].mxu0
    %v614 = vadd.f32 %v540, %v613
    %615 = vdwg.mxu0
    %616 = vst [vmem:[#allocation5 + $0x1] sm:$0x1] %v614
    %617 = vst [vmem:[#allocation4 + $0x2] sm:$0x1] %v612
    %v618 = vld [vmem:[#allocation3 + $0x2] sm:$0x1]
    %620 = vrot.lane.b32.xlu0 %v612, 96
    %v621 = vpop.permute.xlu0 %620
    %v623 = vadd.f32 %v618, %v621
    %v624 = vxor.u32 %v623, 2147483648
    %v625 = vmul.f32 %v624, 1.442695
    %v626 = vpow.pop %v625
    %v627 = vadd.f32 %v626, 1.0
    %v628 = vrcp.pop %v627
    %v629 = vmul.f32 1.0, %v628
    %630 = vrot.lane.b32.xlu0 %v612, 32
    %v631 = vpop.permute.xlu0 %630
    %v633 = vmul.f32 %v629, %v631
    %635 = vrot.lane.b32.xlu0 %v633, 64
    %v636 = vpop.permute.xlu0 %635
    %v638 = vadd.f32 %v618, %v636
    %v639 = vtanh.pop %v638
    %v640 = vsub.f32 1.0, %v629
    %642 = vrot.lane.b32.xlu0 %v639, 96
    %v643 = vpop.permute.xlu0 %642
    %v645 = vmul.f32 %v640, %v643
    %v646 = vmul.f32 %v629, %v519
    %v647 = vadd.f32 %v645, %v646
    %v648 = vld [vmem:[#allocation11] sm:$0xff]
    %v649 = vld [vmem:[#allocation11 + $0x8] sm:$0xff]
    %v650 = vld [vmem:[#allocation11 + $0x10] sm:$0xff]
    %v651 = vld [vmem:[#allocation11 + $0x18] sm:$0xff]
    %v652 = vld [vmem:[#allocation11 + $0x20] sm:$0xff]
    %v653 = vld [vmem:[#allocation11 + $0x28] sm:$0xff]
    %v654 = vld [vmem:[#allocation11 + $0x30] sm:$0xff]
    %v655 = vld [vmem:[#allocation11 + $0x38] sm:$0xff]
    %v656 = vld [vmem:[%s5] sm:$0x3]
    %658 = vrot.lane.b32.xlu0 %v647, 96
    %v659 = vpop.permute.xlu0 %658
    %v661 = vlaneseq
    %v662 = vshrl.u32 %v661, 7
    %v663 = vsub.s32 0, %v662
    %v664 = vrot.slane %v656, %v663
    %v665 = vlaneseq
    %v666 = vshrl.u32 %v665, 7
    %v667 = vsub.s32 1, %v666
    %v668 = vrot.slane %v656, %v667
    %v671 = vsel %vm81, %v659, 0
    %673 = vmatprep.subr.mxu0 %v649
    %674 = vmatpush1.msra.mxu0 %v648
    %675 = vmatprep.subr.mxu0 %v651
    %676 = vmatpush1.msra.mxu0 %v650
    %677 = vmatprep.subr.mxu0 %v653
    %678 = vmatpush1.msra.mxu0 %v652
    %679 = vmatprep.subr.mxu0 %v655
    %680 = vmatpush1.msra.mxu0 %v654
    %681 = vmatprep.subr.mxu0 0.0
    %682 = vmatpush1.msra.mxu0 0.0
    %683 = vmatprep.subr.mxu0 0.0
    %684 = vmatpush1.msra.mxu0 0.0
    %685 = vmatprep.subr.mxu0 0.0
    %686 = vmatpush1.msra.mxu0 0.0
    %687 = vmatprep.subr.mxu0 0.0
    %688 = vmatpush1.msra.mxu0 0.0
    %689 = vmatprep.subr.mxu0 0.0
    %690 = vmatpush1.msra.mxu0 0.0
    %691 = vmatprep.subr.mxu0 0.0
    %692 = vmatpush1.msra.mxu0 0.0
    %693 = vmatprep.subr.mxu0 0.0
    %694 = vmatpush1.msra.mxu0 0.0
    %695 = vmatprep.subr.mxu0 0.0
    %696 = vmatpush1.msra.mxu0 0.0
    %697 = vmatprep.subr.mxu0 0.0
    %698 = vmatpush1.msra.mxu0 0.0
    %699 = vmatprep.subr.mxu0 0.0
    %700 = vmatpush1.msra.mxu0 0.0
    %701 = vmatprep.subr.mxu0 0.0
    %702 = vmatpush1.msra.mxu0 0.0
    %703 = vmatprep.subr.mxu0 0.0
    %704 = vmatpush1.msra.mxu0 0.0
    %705 = vmatprep.subr.mxu0 0.0
    %706 = vmatpush1.msra.mxu0 0.0
    %707 = vmatprep.subr.mxu0 0.0
    %708 = vmatpush1.msra.mxu0 0.0
    %709 = vmatprep.subr.mxu0 0.0
    %710 = vmatpush1.msra.mxu0 0.0
    %711 = vmatprep.subr.mxu0 0.0
    %712 = vmatpush1.msra.mxu0 0.0
    %713 = vmatprep.subr.mxu0 0.0
    %714 = vmatpush1.msra.mxu0 0.0
    %715 = vmatprep.subr.mxu0 0.0
    %716 = vmatpush1.msra.mxu0 0.0
    %717 = vmatprep.subr.mxu0 0.0
    %718 = vmatpush1.msra.mxu0 0.0
    %719 = vmatprep.subr.mxu0 0.0
    %720 = vmatpush1.msra.mxu0 0.0
    %721 = vmatprep.subr.mxu0 0.0
    %722 = vmatpush1.msra.mxu0 0.0
    %723 = vmatprep.subr.mxu0 0.0
    %724 = vmatpush1.msra.mxu0 0.0
    %725 = vmatprep.subr.mxu0 0.0
    %726 = vmatpush1.msra.mxu0 0.0
    %727 = vmatprep.subr.mxu0 0.0
    %728 = vmatpush1.msra.mxu0 0.0
    %729 = vmatprep.subr.mxu0 0.0
    %730 = vmatpush1.msra.mxu0 0.0
    %731 = vmatprep.subr.mxu0 0.0
    %732 = vmatpush1.msra.mxu0 0.0
    %733 = vmatprep.subr.mxu0 0.0
    %734 = vmatpush1.msra.mxu0 0.0
    %735 = vmatprep.subr.mxu0 0.0
    %736 = vmatpush1.msra.mxu0 0.0
    %737 = vmatprep.mubr.f32.mxu0 0.0
    %738 = vmatmul.mubr.f32.gmra.mrb[0].mxu0 %v671
    %v739 = vpop.f32.mrb[0].mxu0
    %v740 = vadd.f32 %v664, %v739
    %v741 = vpop.f32.mrb[0].mxu0
    %v742 = vadd.f32 %v668, %v741
    %743 = vdwg.mxu0
    %744 = vst [vmem:[#allocation5 + $0x2] sm:$0x1] %v742
    %745 = vst [vmem:[#allocation4 + $0x3] sm:$0x1] %v740
    %v746 = vld [vmem:[#allocation3 + $0x3] sm:$0x1]
    %748 = vrot.lane.b32.xlu0 %v740, 96
    %v749 = vpop.permute.xlu0 %748
    %v751 = vadd.f32 %v746, %v749
    %v752 = vxor.u32 %v751, 2147483648
    %v753 = vmul.f32 %v752, 1.442695
    %v754 = vpow.pop %v753
    %v755 = vadd.f32 %v754, 1.0
    %v756 = vrcp.pop %v755
    %v757 = vmul.f32 1.0, %v756
    %758 = vrot.lane.b32.xlu0 %v740, 32
    %v759 = vpop.permute.xlu0 %758
    %v761 = vmul.f32 %v757, %v759
    %763 = vrot.lane.b32.xlu0 %v761, 64
    %v764 = vpop.permute.xlu0 %763
    %v766 = vadd.f32 %v746, %v764
    %v767 = vtanh.pop %v766
    %v768 = vsub.f32 1.0, %v757
    %770 = vrot.lane.b32.xlu0 %v767, 96
    %v771 = vpop.permute.xlu0 %770
    %v773 = vmul.f32 %v768, %v771
    %v774 = vmul.f32 %v757, %v647
    %v775 = vadd.f32 %v773, %v774
    %v776 = vld [vmem:[#allocation11] sm:$0xff]
    %v777 = vld [vmem:[#allocation11 + $0x8] sm:$0xff]
    %v778 = vld [vmem:[#allocation11 + $0x10] sm:$0xff]
    %v779 = vld [vmem:[#allocation11 + $0x18] sm:$0xff]
    %v780 = vld [vmem:[#allocation11 + $0x20] sm:$0xff]
    %v781 = vld [vmem:[#allocation11 + $0x28] sm:$0xff]
    %v782 = vld [vmem:[#allocation11 + $0x30] sm:$0xff]
    %v783 = vld [vmem:[#allocation11 + $0x38] sm:$0xff]
    %v784 = vld [vmem:[%s5] sm:$0x3]
    %786 = vrot.lane.b32.xlu0 %v775, 96
    %v787 = vpop.permute.xlu0 %786
    %v789 = vlaneseq
    %v790 = vshrl.u32 %v789, 7
    %v791 = vsub.s32 0, %v790
    %v792 = vrot.slane %v784, %v791
    %v793 = vlaneseq
    %v794 = vshrl.u32 %v793, 7
    %v795 = vsub.s32 1, %v794
    %v796 = vrot.slane %v784, %v795
    %v799 = vsel %vm81, %v787, 0
    %801 = vmatprep.subr.mxu0 %v777
    %802 = vmatpush1.msra.mxu0 %v776
    %803 = vmatprep.subr.mxu0 %v779
    %804 = vmatpush1.msra.mxu0 %v778
    %805 = vmatprep.subr.mxu0 %v781
    %806 = vmatpush1.msra.mxu0 %v780
    %807 = vmatprep.subr.mxu0 %v783
    %808 = vmatpush1.msra.mxu0 %v782
    %809 = vmatprep.subr.mxu0 0.0
    %810 = vmatpush1.msra.mxu0 0.0
    %811 = vmatprep.subr.mxu0 0.0
    %812 = vmatpush1.msra.mxu0 0.0
    %813 = vmatprep.subr.mxu0 0.0
    %814 = vmatpush1.msra.mxu0 0.0
    %815 = vmatprep.subr.mxu0 0.0
    %816 = vmatpush1.msra.mxu0 0.0
    %817 = vmatprep.subr.mxu0 0.0
    %818 = vmatpush1.msra.mxu0 0.0
    %819 = vmatprep.subr.mxu0 0.0
    %820 = vmatpush1.msra.mxu0 0.0
    %821 = vmatprep.subr.mxu0 0.0
    %822 = vmatpush1.msra.mxu0 0.0
    %823 = vmatprep.subr.mxu0 0.0
    %824 = vmatpush1.msra.mxu0 0.0
    %825 = vmatprep.subr.mxu0 0.0
    %826 = vmatpush1.msra.mxu0 0.0
    %827 = vmatprep.subr.mxu0 0.0
    %828 = vmatpush1.msra.mxu0 0.0
    %829 = vmatprep.subr.mxu0 0.0
    %830 = vmatpush1.msra.mxu0 0.0
    %831 = vmatprep.subr.mxu0 0.0
    %832 = vmatpush1.msra.mxu0 0.0
    %833 = vmatprep.subr.mxu0 0.0
    %834 = vmatpush1.msra.mxu0 0.0
    %835 = vmatprep.subr.mxu0 0.0
    %836 = vmatpush1.msra.mxu0 0.0
    %837 = vmatprep.subr.mxu0 0.0
    %838 = vmatpush1.msra.mxu0 0.0
    %839 = vmatprep.subr.mxu0 0.0
    %840 = vmatpush1.msra.mxu0 0.0
    %841 = vmatprep.subr.mxu0 0.0
    %842 = vmatpush1.msra.mxu0 0.0
    %843 = vmatprep.subr.mxu0 0.0
    %844 = vmatpush1.msra.mxu0 0.0
    %845 = vmatprep.subr.mxu0 0.0
    %846 = vmatpush1.msra.mxu0 0.0
    %847 = vmatprep.subr.mxu0 0.0
    %848 = vmatpush1.msra.mxu0 0.0
    %849 = vmatprep.subr.mxu0 0.0
    %850 = vmatpush1.msra.mxu0 0.0
    %851 = vmatprep.subr.mxu0 0.0
    %852 = vmatpush1.msra.mxu0 0.0
    %853 = vmatprep.subr.mxu0 0.0
    %854 = vmatpush1.msra.mxu0 0.0
    %855 = vmatprep.subr.mxu0 0.0
    %856 = vmatpush1.msra.mxu0 0.0
    %857 = vmatprep.subr.mxu0 0.0
    %858 = vmatpush1.msra.mxu0 0.0
    %859 = vmatprep.subr.mxu0 0.0
    %860 = vmatpush1.msra.mxu0 0.0
    %861 = vmatprep.subr.mxu0 0.0
    %862 = vmatpush1.msra.mxu0 0.0
    %863 = vmatprep.subr.mxu0 0.0
    %864 = vmatpush1.msra.mxu0 0.0
    %865 = vmatprep.mubr.f32.mxu0 0.0
    %866 = vmatmul.mubr.f32.gmra.mrb[0].mxu0 %v799
    %v867 = vpop.f32.mrb[0].mxu0
    %v868 = vadd.f32 %v792, %v867
    %v869 = vpop.f32.mrb[0].mxu0
    %v870 = vadd.f32 %v796, %v869
    %871 = vdwg.mxu0
    %872 = vst [vmem:[#allocation5 + $0x3] sm:$0x1] %v870
    %873 = vst [vmem:[#allocation4 + $0x4] sm:$0x1] %v868
    %v874 = vld [vmem:[#allocation3 + $0x4] sm:$0x1]
    %876 = vrot.lane.b32.xlu0 %v868, 96
    %v877 = vpop.permute.xlu0 %876
    %v879 = vadd.f32 %v874, %v877
    %v880 = vxor.u32 %v879, 2147483648
    %v881 = vmul.f32 %v880, 1.442695
    %v882 = vpow.pop %v881
    %v883 = vadd.f32 %v882, 1.0
    %v884 = vrcp.pop %v883
    %v885 = vmul.f32 1.0, %v884
    %886 = vrot.lane.b32.xlu0 %v868, 32
    %v887 = vpop.permute.xlu0 %886
    %v889 = vmul.f32 %v885, %v887
    %891 = vrot.lane.b32.xlu0 %v889, 64
    %v892 = vpop.permute.xlu0 %891
    %v894 = vadd.f32 %v874, %v892
    %v895 = vtanh.pop %v894
    %v896 = vsub.f32 1.0, %v885
    %898 = vrot.lane.b32.xlu0 %v895, 96
    %v899 = vpop.permute.xlu0 %898
    %v901 = vmul.f32 %v896, %v899
    %v902 = vmul.f32 %v885, %v775
    %v903 = vadd.f32 %v901, %v902
    %v904 = vld [vmem:[#allocation11] sm:$0xff]
    %v905 = vld [vmem:[#allocation11 + $0x8] sm:$0xff]
    %v906 = vld [vmem:[#allocation11 + $0x10] sm:$0xff]
    %v907 = vld [vmem:[#allocation11 + $0x18] sm:$0xff]
    %v908 = vld [vmem:[#allocation11 + $0x20] sm:$0xff]
    %v909 = vld [vmem:[#allocation11 + $0x28] sm:$0xff]
    %v910 = vld [vmem:[#allocation11 + $0x30] sm:$0xff]
    %v911 = vld [vmem:[#allocation11 + $0x38] sm:$0xff]
    %v912 = vld [vmem:[%s5] sm:$0x3]
    %914 = vrot.lane.b32.xlu0 %v903, 96
    %v915 = vpop.permute.xlu0 %914
    %v917 = vlaneseq
    %v918 = vshrl.u32 %v917, 7
    %v919 = vsub.s32 0, %v918
    %v920 = vrot.slane %v912, %v919
    %v921 = vlaneseq
    %v922 = vshrl.u32 %v921, 7
    %v923 = vsub.s32 1, %v922
    %v924 = vrot.slane %v912, %v923
    %v927 = vsel %vm81, %v915, 0
    %929 = vmatprep.subr.mxu0 %v905
    %930 = vmatpush1.msra.mxu0 %v904
    %931 = vmatprep.subr.mxu0 %v907
    %932 = vmatpush1.msra.mxu0 %v906
    %933 = vmatprep.subr.mxu0 %v909
    %934 = vmatpush1.msra.mxu0 %v908
    %935 = vmatprep.subr.mxu0 %v911
    %936 = vmatpush1.msra.mxu0 %v910
    %937 = vmatprep.subr.mxu0 0.0
    %938 = vmatpush1.msra.mxu0 0.0
    %939 = vmatprep.subr.mxu0 0.0
    %940 = vmatpush1.msra.mxu0 0.0
    %941 = vmatprep.subr.mxu0 0.0
    %942 = vmatpush1.msra.mxu0 0.0
    %943 = vmatprep.subr.mxu0 0.0
    %944 = vmatpush1.msra.mxu0 0.0
    %945 = vmatprep.subr.mxu0 0.0
    %946 = vmatpush1.msra.mxu0 0.0
    %947 = vmatprep.subr.mxu0 0.0
    %948 = vmatpush1.msra.mxu0 0.0
    %949 = vmatprep.subr.mxu0 0.0
    %950 = vmatpush1.msra.mxu0 0.0
    %951 = vmatprep.subr.mxu0 0.0
    %952 = vmatpush1.msra.mxu0 0.0
    %953 = vmatprep.subr.mxu0 0.0
    %954 = vmatpush1.msra.mxu0 0.0
    %955 = vmatprep.subr.mxu0 0.0
    %956 = vmatpush1.msra.mxu0 0.0
    %957 = vmatprep.subr.mxu0 0.0
    %958 = vmatpush1.msra.mxu0 0.0
    %959 = vmatprep.subr.mxu0 0.0
    %960 = vmatpush1.msra.mxu0 0.0
    %961 = vmatprep.subr.mxu0 0.0
    %962 = vmatpush1.msra.mxu0 0.0
    %963 = vmatprep.subr.mxu0 0.0
    %964 = vmatpush1.msra.mxu0 0.0
    %965 = vmatprep.subr.mxu0 0.0
    %966 = vmatpush1.msra.mxu0 0.0
    %967 = vmatprep.subr.mxu0 0.0
    %968 = vmatpush1.msra.mxu0 0.0
    %969 = vmatprep.subr.mxu0 0.0
    %970 = vmatpush1.msra.mxu0 0.0
    %971 = vmatprep.subr.mxu0 0.0
    %972 = vmatpush1.msra.mxu0 0.0
    %973 = vmatprep.subr.mxu0 0.0
    %974 = vmatpush1.msra.mxu0 0.0
    %975 = vmatprep.subr.mxu0 0.0
    %976 = vmatpush1.msra.mxu0 0.0
    %977 = vmatprep.subr.mxu0 0.0
    %978 = vmatpush1.msra.mxu0 0.0
    %979 = vmatprep.subr.mxu0 0.0
    %980 = vmatpush1.msra.mxu0 0.0
    %981 = vmatprep.subr.mxu0 0.0
    %982 = vmatpush1.msra.mxu0 0.0
    %983 = vmatprep.subr.mxu0 0.0
    %984 = vmatpush1.msra.mxu0 0.0
    %985 = vmatprep.subr.mxu0 0.0
    %986 = vmatpush1.msra.mxu0 0.0
    %987 = vmatprep.subr.mxu0 0.0
    %988 = vmatpush1.msra.mxu0 0.0
    %989 = vmatprep.subr.mxu0 0.0
    %990 = vmatpush1.msra.mxu0 0.0
    %991 = vmatprep.subr.mxu0 0.0
    %992 = vmatpush1.msra.mxu0 0.0
    %993 = vmatprep.mubr.f32.mxu0 0.0
    %994 = vmatmul.mubr.f32.gmra.mrb[0].mxu0 %v927
    %v995 = vpop.f32.mrb[0].mxu0
    %v996 = vadd.f32 %v920, %v995
    %v997 = vpop.f32.mrb[0].mxu0
    %v998 = vadd.f32 %v924, %v997
    %999 = vdwg.mxu0
    %1000 = vst [vmem:[#allocation5 + $0x4] sm:$0x1] %v998
    %1001 = vst [vmem:[#allocation4 + $0x5] sm:$0x1] %v996
    %v1002 = vld [vmem:[#allocation3 + $0x5] sm:$0x1]
    %1004 = vrot.lane.b32.xlu0 %v996, 96
    %v1005 = vpop.permute.xlu0 %1004
    %v1007 = vadd.f32 %v1002, %v1005
    %v1008 = vxor.u32 %v1007, 2147483648
    %v1009 = vmul.f32 %v1008, 1.442695
    %v1010 = vpow.pop %v1009
    %v1011 = vadd.f32 %v1010, 1.0
    %v1012 = vrcp.pop %v1011
    %v1013 = vmul.f32 1.0, %v1012
    %1014 = vrot.lane.b32.xlu0 %v996, 32
    %v1015 = vpop.permute.xlu0 %1014
    %v1017 = vmul.f32 %v1013, %v1015
    %1019 = vrot.lane.b32.xlu0 %v1017, 64
    %v1020 = vpop.permute.xlu0 %1019
    %v1022 = vadd.f32 %v1002, %v1020
    %v1023 = vtanh.pop %v1022
    %v1024 = vsub.f32 1.0, %v1013
    %1026 = vrot.lane.b32.xlu0 %v1023, 96
    %v1027 = vpop.permute.xlu0 %1026
    %v1029 = vmul.f32 %v1024, %v1027
    %v1030 = vmul.f32 %v1013, %v903
    %v1031 = vadd.f32 %v1029, %v1030
    %v1032 = vld [vmem:[#allocation11] sm:$0xff]
    %v1033 = vld [vmem:[#allocation11 + $0x8] sm:$0xff]
    %v1034 = vld [vmem:[#allocation11 + $0x10] sm:$0xff]
    %v1035 = vld [vmem:[#allocation11 + $0x18] sm:$0xff]
    %v1036 = vld [vmem:[#allocation11 + $0x20] sm:$0xff]
    %v1037 = vld [vmem:[#allocation11 + $0x28] sm:$0xff]
    %v1038 = vld [vmem:[#allocation11 + $0x30] sm:$0xff]
    %v1039 = vld [vmem:[#allocation11 + $0x38] sm:$0xff]
    %v1040 = vld [vmem:[%s5] sm:$0x3]
    %1042 = vrot.lane.b32.xlu0 %v1031, 96
    %v1043 = vpop.permute.xlu0 %1042
    %v1045 = vlaneseq
    %v1046 = vshrl.u32 %v1045, 7
    %v1047 = vsub.s32 0, %v1046
    %v1048 = vrot.slane %v1040, %v1047
    %v1049 = vlaneseq
    %v1050 = vshrl.u32 %v1049, 7
    %v1051 = vsub.s32 1, %v1050
    %v1052 = vrot.slane %v1040, %v1051
    %v1055 = vsel %vm81, %v1043, 0
    %1057 = vmatprep.subr.mxu0 %v1033
    %1058 = vmatpush1.msra.mxu0 %v1032
    %1059 = vmatprep.subr.mxu0 %v1035
    %1060 = vmatpush1.msra.mxu0 %v1034
    %1061 = vmatprep.subr.mxu0 %v1037
    %1062 = vmatpush1.msra.mxu0 %v1036
    %1063 = vmatprep.subr.mxu0 %v1039
    %1064 = vmatpush1.msra.mxu0 %v1038
    %1065 = vmatprep.subr.mxu0 0.0
    %1066 = vmatpush1.msra.mxu0 0.0
    %1067 = vmatprep.subr.mxu0 0.0
    %1068 = vmatpush1.msra.mxu0 0.0
    %1069 = vmatprep.subr.mxu0 0.0
    %1070 = vmatpush1.msra.mxu0 0.0
    %1071 = vmatprep.subr.mxu0 0.0
    %1072 = vmatpush1.msra.mxu0 0.0
    %1073 = vmatprep.subr.mxu0 0.0
    %1074 = vmatpush1.msra.mxu0 0.0
    %1075 = vmatprep.subr.mxu0 0.0
    %1076 = vmatpush1.msra.mxu0 0.0
    %1077 = vmatprep.subr.mxu0 0.0
    %1078 = vmatpush1.msra.mxu0 0.0
    %1079 = vmatprep.subr.mxu0 0.0
    %1080 = vmatpush1.msra.mxu0 0.0
    %1081 = vmatprep.subr.mxu0 0.0
    %1082 = vmatpush1.msra.mxu0 0.0
    %1083 = vmatprep.subr.mxu0 0.0
    %1084 = vmatpush1.msra.mxu0 0.0
    %1085 = vmatprep.subr.mxu0 0.0
    %1086 = vmatpush1.msra.mxu0 0.0
    %1087 = vmatprep.subr.mxu0 0.0
    %1088 = vmatpush1.msra.mxu0 0.0
    %1089 = vmatprep.subr.mxu0 0.0
    %1090 = vmatpush1.msra.mxu0 0.0
    %1091 = vmatprep.subr.mxu0 0.0
    %1092 = vmatpush1.msra.mxu0 0.0
    %1093 = vmatprep.subr.mxu0 0.0
    %1094 = vmatpush1.msra.mxu0 0.0
    %1095 = vmatprep.subr.mxu0 0.0
    %1096 = vmatpush1.msra.mxu0 0.0
    %1097 = vmatprep.subr.mxu0 0.0
    %1098 = vmatpush1.msra.mxu0 0.0
    %1099 = vmatprep.subr.mxu0 0.0
    %1100 = vmatpush1.msra.mxu0 0.0
    %1101 = vmatprep.subr.mxu0 0.0
    %1102 = vmatpush1.msra.mxu0 0.0
    %1103 = vmatprep.subr.mxu0 0.0
    %1104 = vmatpush1.msra.mxu0 0.0
    %1105 = vmatprep.subr.mxu0 0.0
    %1106 = vmatpush1.msra.mxu0 0.0
    %1107 = vmatprep.subr.mxu0 0.0
    %1108 = vmatpush1.msra.mxu0 0.0
    %1109 = vmatprep.subr.mxu0 0.0
    %1110 = vmatpush1.msra.mxu0 0.0
    %1111 = vmatprep.subr.mxu0 0.0
    %1112 = vmatpush1.msra.mxu0 0.0
    %1113 = vmatprep.subr.mxu0 0.0
    %1114 = vmatpush1.msra.mxu0 0.0
    %1115 = vmatprep.subr.mxu0 0.0
    %1116 = vmatpush1.msra.mxu0 0.0
    %1117 = vmatprep.subr.mxu0 0.0
    %1118 = vmatpush1.msra.mxu0 0.0
    %1119 = vmatprep.subr.mxu0 0.0
    %1120 = vmatpush1.msra.mxu0 0.0
    %1121 = vmatprep.mubr.f32.mxu0 0.0
    %1122 = vmatmul.mubr.f32.gmra.mrb[0].mxu0 %v1055
    %v1123 = vpop.f32.mrb[0].mxu0
    %v1124 = vadd.f32 %v1048, %v1123
    %v1125 = vpop.f32.mrb[0].mxu0
    %v1126 = vadd.f32 %v1052, %v1125
    %1127 = vdwg.mxu0
    %1128 = vst [vmem:[#allocation5 + $0x5] sm:$0x1] %v1126
    %1129 = vst [vmem:[#allocation4 + $0x6] sm:$0x1] %v1124
    %v1130 = vld [vmem:[#allocation3 + $0x6] sm:$0x1]
    %1132 = vrot.lane.b32.xlu0 %v1124, 96
    %v1133 = vpop.permute.xlu0 %1132
    %v1135 = vadd.f32 %v1130, %v1133
    %v1136 = vxor.u32 %v1135, 2147483648
    %v1137 = vmul.f32 %v1136, 1.442695
    %v1138 = vpow.pop %v1137
    %v1139 = vadd.f32 %v1138, 1.0
    %v1140 = vrcp.pop %v1139
    %v1141 = vmul.f32 1.0, %v1140
    %1142 = vrot.lane.b32.xlu0 %v1124, 32
    %v1143 = vpop.permute.xlu0 %1142
    %v1145 = vmul.f32 %v1141, %v1143
    %1147 = vrot.lane.b32.xlu0 %v1145, 64
    %v1148 = vpop.permute.xlu0 %1147
    %v1150 = vadd.f32 %v1130, %v1148
    %v1151 = vtanh.pop %v1150
    %v1152 = vsub.f32 1.0, %v1141
    %1154 = vrot.lane.b32.xlu0 %v1151, 96
    %v1155 = vpop.permute.xlu0 %1154
    %v1157 = vmul.f32 %v1152, %v1155
    %v1158 = vmul.f32 %v1141, %v1031
    %v1159 = vadd.f32 %v1157, %v1158
    %v1160 = vld [vmem:[#allocation11] sm:$0xff]
    %v1161 = vld [vmem:[#allocation11 + $0x8] sm:$0xff]
    %v1162 = vld [vmem:[#allocation11 + $0x10] sm:$0xff]
    %v1163 = vld [vmem:[#allocation11 + $0x18] sm:$0xff]
    %v1164 = vld [vmem:[#allocation11 + $0x20] sm:$0xff]
    %v1165 = vld [vmem:[#allocation11 + $0x28] sm:$0xff]
    %v1166 = vld [vmem:[#allocation11 + $0x30] sm:$0xff]
    %v1167 = vld [vmem:[#allocation11 + $0x38] sm:$0xff]
    %v1168 = vld [vmem:[%s5] sm:$0x3]
    %1170 = vrot.lane.b32.xlu0 %v1159, 96
    %v1171 = vpop.permute.xlu0 %1170
    %v1173 = vlaneseq
    %v1174 = vshrl.u32 %v1173, 7
    %v1175 = vsub.s32 0, %v1174
    %v1176 = vrot.slane %v1168, %v1175
    %v1177 = vlaneseq
    %v1178 = vshrl.u32 %v1177, 7
    %v1179 = vsub.s32 1, %v1178
    %v1180 = vrot.slane %v1168, %v1179
    %v1183 = vsel %vm81, %v1171, 0
    %1185 = vmatprep.subr.mxu0 %v1161
    %1186 = vmatpush1.msra.mxu0 %v1160
    %1187 = vmatprep.subr.mxu0 %v1163
    %1188 = vmatpush1.msra.mxu0 %v1162
    %1189 = vmatprep.subr.mxu0 %v1165
    %1190 = vmatpush1.msra.mxu0 %v1164
    %1191 = vmatprep.subr.mxu0 %v1167
    %1192 = vmatpush1.msra.mxu0 %v1166
    %1193 = vmatprep.subr.mxu0 0.0
    %1194 = vmatpush1.msra.mxu0 0.0
    %1195 = vmatprep.subr.mxu0 0.0
    %1196 = vmatpush1.msra.mxu0 0.0
    %1197 = vmatprep.subr.mxu0 0.0
    %1198 = vmatpush1.msra.mxu0 0.0
    %1199 = vmatprep.subr.mxu0 0.0
    %1200 = vmatpush1.msra.mxu0 0.0
    %1201 = vmatprep.subr.mxu0 0.0
    %1202 = vmatpush1.msra.mxu0 0.0
    %1203 = vmatprep.subr.mxu0 0.0
    %1204 = vmatpush1.msra.mxu0 0.0
    %1205 = vmatprep.subr.mxu0 0.0
    %1206 = vmatpush1.msra.mxu0 0.0
    %1207 = vmatprep.subr.mxu0 0.0
    %1208 = vmatpush1.msra.mxu0 0.0
    %1209 = vmatprep.subr.mxu0 0.0
    %1210 = vmatpush1.msra.mxu0 0.0
    %1211 = vmatprep.subr.mxu0 0.0
    %1212 = vmatpush1.msra.mxu0 0.0
    %1213 = vmatprep.subr.mxu0 0.0
    %1214 = vmatpush1.msra.mxu0 0.0
    %1215 = vmatprep.subr.mxu0 0.0
    %1216 = vmatpush1.msra.mxu0 0.0
    %1217 = vmatprep.subr.mxu0 0.0
    %1218 = vmatpush1.msra.mxu0 0.0
    %1219 = vmatprep.subr.mxu0 0.0
    %1220 = vmatpush1.msra.mxu0 0.0
    %1221 = vmatprep.subr.mxu0 0.0
    %1222 = vmatpush1.msra.mxu0 0.0
    %1223 = vmatprep.subr.mxu0 0.0
    %1224 = vmatpush1.msra.mxu0 0.0
    %1225 = vmatprep.subr.mxu0 0.0
    %1226 = vmatpush1.msra.mxu0 0.0
    %1227 = vmatprep.subr.mxu0 0.0
    %1228 = vmatpush1.msra.mxu0 0.0
    %1229 = vmatprep.subr.mxu0 0.0
    %1230 = vmatpush1.msra.mxu0 0.0
    %1231 = vmatprep.subr.mxu0 0.0
    %1232 = vmatpush1.msra.mxu0 0.0
    %1233 = vmatprep.subr.mxu0 0.0
    %1234 = vmatpush1.msra.mxu0 0.0
    %1235 = vmatprep.subr.mxu0 0.0
    %1236 = vmatpush1.msra.mxu0 0.0
    %1237 = vmatprep.subr.mxu0 0.0
    %1238 = vmatpush1.msra.mxu0 0.0
    %1239 = vmatprep.subr.mxu0 0.0
    %1240 = vmatpush1.msra.mxu0 0.0
    %1241 = vmatprep.subr.mxu0 0.0
    %1242 = vmatpush1.msra.mxu0 0.0
    %1243 = vmatprep.subr.mxu0 0.0
    %1244 = vmatpush1.msra.mxu0 0.0
    %1245 = vmatprep.subr.mxu0 0.0
    %1246 = vmatpush1.msra.mxu0 0.0
    %1247 = vmatprep.subr.mxu0 0.0
    %1248 = vmatpush1.msra.mxu0 0.0
    %1249 = vmatprep.mubr.f32.mxu0 0.0
    %1250 = vmatmul.mubr.f32.gmra.mrb[0].mxu0 %v1183
    %v1251 = vpop.f32.mrb[0].mxu0
    %v1252 = vadd.f32 %v1176, %v1251
    %v1253 = vpop.f32.mrb[0].mxu0
    %v1254 = vadd.f32 %v1180, %v1253
    %1255 = vdwg.mxu0
    %1256 = vst [vmem:[#allocation5 + $0x6] sm:$0x1] %v1254
    %1257 = vst [vmem:[#allocation4 + $0x7] sm:$0x1] %v1252
    %v1258 = vld [vmem:[#allocation3 + $0x7] sm:$0x1]
    %1260 = vrot.lane.b32.xlu0 %v1252, 96
    %v1261 = vpop.permute.xlu0 %1260
    %v1263 = vadd.f32 %v1258, %v1261
    %v1264 = vxor.u32 %v1263, 2147483648
    %v1265 = vmul.f32 %v1264, 1.442695
    %v1266 = vpow.pop %v1265
    %v1267 = vadd.f32 %v1266, 1.0
    %v1268 = vrcp.pop %v1267
    %v1269 = vmul.f32 1.0, %v1268
    %1270 = vrot.lane.b32.xlu0 %v1252, 32
    %v1271 = vpop.permute.xlu0 %1270
    %v1273 = vmul.f32 %v1269, %v1271
    %1275 = vrot.lane.b32.xlu0 %v1273, 64
    %v1276 = vpop.permute.xlu0 %1275
    %v1278 = vadd.f32 %v1258, %v1276
    %v1279 = vtanh.pop %v1278
    %v1280 = vsub.f32 1.0, %v1269
    %1282 = vrot.lane.b32.xlu0 %v1279, 96
    %v1283 = vpop.permute.xlu0 %1282
    %v1285 = vmul.f32 %v1280, %v1283
    %v1286 = vmul.f32 %v1269, %v1159
    %v1287 = vadd.f32 %v1285, %v1286
    %v1288 = vld [vmem:[#allocation11] sm:$0xff]
    %v1289 = vld [vmem:[#allocation11 + $0x8] sm:$0xff]
    %v1290 = vld [vmem:[#allocation11 + $0x10] sm:$0xff]
    %v1291 = vld [vmem:[#allocation11 + $0x18] sm:$0xff]
    %v1292 = vld [vmem:[#allocation11 + $0x20] sm:$0xff]
    %v1293 = vld [vmem:[#allocation11 + $0x28] sm:$0xff]
    %v1294 = vld [vmem:[#allocation11 + $0x30] sm:$0xff]
    %v1295 = vld [vmem:[#allocation11 + $0x38] sm:$0xff]
    %v1296 = vld [vmem:[%s5] sm:$0x3]
    %1298 = vrot.lane.b32.xlu0 %v1287, 96
    %v1299 = vpop.permute.xlu0 %1298
    %v1301 = vlaneseq
    %v1302 = vshrl.u32 %v1301, 7
    %v1303 = vsub.s32 0, %v1302
    %v1304 = vrot.slane %v1296, %v1303
    %v1305 = vlaneseq
    %v1306 = vshrl.u32 %v1305, 7
    %v1307 = vsub.s32 1, %v1306
    %v1308 = vrot.slane %v1296, %v1307
    %v1311 = vsel %vm81, %v1299, 0
    %1313 = vmatprep.subr.mxu0 %v1289
    %1314 = vmatpush1.msra.mxu0 %v1288
    %1315 = vmatprep.subr.mxu0 %v1291
    %1316 = vmatpush1.msra.mxu0 %v1290
    %1317 = vmatprep.subr.mxu0 %v1293
    %1318 = vmatpush1.msra.mxu0 %v1292
    %1319 = vmatprep.subr.mxu0 %v1295
    %1320 = vmatpush1.msra.mxu0 %v1294
    %1321 = vmatprep.subr.mxu0 0.0
    %1322 = vmatpush1.msra.mxu0 0.0
    %1323 = vmatprep.subr.mxu0 0.0
    %1324 = vmatpush1.msra.mxu0 0.0
    %1325 = vmatprep.subr.mxu0 0.0
    %1326 = vmatpush1.msra.mxu0 0.0
    %1327 = vmatprep.subr.mxu0 0.0
    %1328 = vmatpush1.msra.mxu0 0.0
    %1329 = vmatprep.subr.mxu0 0.0
    %1330 = vmatpush1.msra.mxu0 0.0
    %1331 = vmatprep.subr.mxu0 0.0
    %1332 = vmatpush1.msra.mxu0 0.0
    %1333 = vmatprep.subr.mxu0 0.0
    %1334 = vmatpush1.msra.mxu0 0.0
    %1335 = vmatprep.subr.mxu0 0.0
    %1336 = vmatpush1.msra.mxu0 0.0
    %1337 = vmatprep.subr.mxu0 0.0
    %1338 = vmatpush1.msra.mxu0 0.0
    %1339 = vmatprep.subr.mxu0 0.0
    %1340 = vmatpush1.msra.mxu0 0.0
    %1341 = vmatprep.subr.mxu0 0.0
    %1342 = vmatpush1.msra.mxu0 0.0
    %1343 = vmatprep.subr.mxu0 0.0
    %1344 = vmatpush1.msra.mxu0 0.0
    %1345 = vmatprep.subr.mxu0 0.0
    %1346 = vmatpush1.msra.mxu0 0.0
    %1347 = vmatprep.subr.mxu0 0.0
    %1348 = vmatpush1.msra.mxu0 0.0
    %1349 = vmatprep.subr.mxu0 0.0
    %1350 = vmatpush1.msra.mxu0 0.0
    %1351 = vmatprep.subr.mxu0 0.0
    %1352 = vmatpush1.msra.mxu0 0.0
    %1353 = vmatprep.subr.mxu0 0.0
    %1354 = vmatpush1.msra.mxu0 0.0
    %1355 = vmatprep.subr.mxu0 0.0
    %1356 = vmatpush1.msra.mxu0 0.0
    %1357 = vmatprep.subr.mxu0 0.0
    %1358 = vmatpush1.msra.mxu0 0.0
    %1359 = vmatprep.subr.mxu0 0.0
    %1360 = vmatpush1.msra.mxu0 0.0
    %1361 = vmatprep.subr.mxu0 0.0
    %1362 = vmatpush1.msra.mxu0 0.0
    %1363 = vmatprep.subr.mxu0 0.0
    %1364 = vmatpush1.msra.mxu0 0.0
    %1365 = vmatprep.subr.mxu0 0.0
    %1366 = vmatpush1.msra.mxu0 0.0
    %1367 = vmatprep.subr.mxu0 0.0
    %1368 = vmatpush1.msra.mxu0 0.0
    %1369 = vmatprep.subr.mxu0 0.0
    %1370 = vmatpush1.msra.mxu0 0.0
    %1371 = vmatprep.subr.mxu0 0.0
    %1372 = vmatpush1.msra.mxu0 0.0
    %1373 = vmatprep.subr.mxu0 0.0
    %1374 = vmatpush1.msra.mxu0 0.0
    %1375 = vmatprep.subr.mxu0 0.0
    %1376 = vmatpush1.msra.mxu0 0.0
    %1377 = vmatprep.mubr.f32.mxu0 0.0
    %1378 = vmatmul.mubr.f32.gmra.mrb[0].mxu0 %v1311
    %v1379 = vpop.f32.mrb[0].mxu0
    %v1380 = vadd.f32 %v1304, %v1379
    %v1381 = vpop.f32.mrb[0].mxu0
    %v1382 = vadd.f32 %v1308, %v1381
    %1383 = vdwg.mxu0
    %1384 = vst [vmem:[#allocation5 + $0x7] sm:$0x1] %v1382
    %1385 = vst [vmem:[#allocation4 + $0x8] sm:$0x1] %v1380
    %v1386 = vld [vmem:[#allocation3 + $0x8] sm:$0x1]
    %1388 = vrot.lane.b32.xlu0 %v1380, 96
    %v1389 = vpop.permute.xlu0 %1388
    %v1391 = vadd.f32 %v1386, %v1389
    %v1392 = vxor.u32 %v1391, 2147483648
    %v1393 = vmul.f32 %v1392, 1.442695
    %v1394 = vpow.pop %v1393
    %v1395 = vadd.f32 %v1394, 1.0
    %v1396 = vrcp.pop %v1395
    %v1397 = vmul.f32 1.0, %v1396
    %1398 = vrot.lane.b32.xlu0 %v1380, 32
    %v1399 = vpop.permute.xlu0 %1398
    %v1401 = vmul.f32 %v1397, %v1399
    %1403 = vrot.lane.b32.xlu0 %v1401, 64
    %v1404 = vpop.permute.xlu0 %1403
    %v1406 = vadd.f32 %v1386, %v1404
    %v1407 = vtanh.pop %v1406
    %v1408 = vsub.f32 1.0, %v1397
    %1410 = vrot.lane.b32.xlu0 %v1407, 96
    %v1411 = vpop.permute.xlu0 %1410
    %v1413 = vmul.f32 %v1408, %v1411
    %v1414 = vmul.f32 %v1397, %v1287
    %v1415 = vadd.f32 %v1413, %v1414
    %v1416 = vld [vmem:[#allocation11] sm:$0xff]
    %v1417 = vld [vmem:[#allocation11 + $0x8] sm:$0xff]
    %v1418 = vld [vmem:[#allocation11 + $0x10] sm:$0xff]
    %v1419 = vld [vmem:[#allocation11 + $0x18] sm:$0xff]
    %v1420 = vld [vmem:[#allocation11 + $0x20] sm:$0xff]
    %v1421 = vld [vmem:[#allocation11 + $0x28] sm:$0xff]
    %v1422 = vld [vmem:[#allocation11 + $0x30] sm:$0xff]
    %v1423 = vld [vmem:[#allocation11 + $0x38] sm:$0xff]
    %v1424 = vld [vmem:[%s5] sm:$0x3]
    %1426 = vrot.lane.b32.xlu0 %v1415, 96
    %v1427 = vpop.permute.xlu0 %1426
    %v1429 = vlaneseq
    %v1430 = vshrl.u32 %v1429, 7
    %v1431 = vsub.s32 0, %v1430
    %v1432 = vrot.slane %v1424, %v1431
    %v1433 = vlaneseq
    %v1434 = vshrl.u32 %v1433, 7
    %v1435 = vsub.s32 1, %v1434
    %v1436 = vrot.slane %v1424, %v1435
    %v1439 = vsel %vm81, %v1427, 0
    %1441 = vmatprep.subr.mxu0 %v1417
    %1442 = vmatpush1.msra.mxu0 %v1416
    %1443 = vmatprep.subr.mxu0 %v1419
    %1444 = vmatpush1.msra.mxu0 %v1418
    %1445 = vmatprep.subr.mxu0 %v1421
    %1446 = vmatpush1.msra.mxu0 %v1420
    %1447 = vmatprep.subr.mxu0 %v1423
    %1448 = vmatpush1.msra.mxu0 %v1422
    %1449 = vmatprep.subr.mxu0 0.0
    %1450 = vmatpush1.msra.mxu0 0.0
    %1451 = vmatprep.subr.mxu0 0.0
    %1452 = vmatpush1.msra.mxu0 0.0
    %1453 = vmatprep.subr.mxu0 0.0
    %1454 = vmatpush1.msra.mxu0 0.0
    %1455 = vmatprep.subr.mxu0 0.0
    %1456 = vmatpush1.msra.mxu0 0.0
    %1457 = vmatprep.subr.mxu0 0.0
    %1458 = vmatpush1.msra.mxu0 0.0
    %1459 = vmatprep.subr.mxu0 0.0
    %1460 = vmatpush1.msra.mxu0 0.0
    %1461 = vmatprep.subr.mxu0 0.0
    %1462 = vmatpush1.msra.mxu0 0.0
    %1463 = vmatprep.subr.mxu0 0.0
    %1464 = vmatpush1.msra.mxu0 0.0
    %1465 = vmatprep.subr.mxu0 0.0
    %1466 = vmatpush1.msra.mxu0 0.0
    %1467 = vmatprep.subr.mxu0 0.0
    %1468 = vmatpush1.msra.mxu0 0.0
    %1469 = vmatprep.subr.mxu0 0.0
    %1470 = vmatpush1.msra.mxu0 0.0
    %1471 = vmatprep.subr.mxu0 0.0
    %1472 = vmatpush1.msra.mxu0 0.0
    %1473 = vmatprep.subr.mxu0 0.0
    %1474 = vmatpush1.msra.mxu0 0.0
    %1475 = vmatprep.subr.mxu0 0.0
    %1476 = vmatpush1.msra.mxu0 0.0
    %1477 = vmatprep.subr.mxu0 0.0
    %1478 = vmatpush1.msra.mxu0 0.0
    %1479 = vmatprep.subr.mxu0 0.0
    %1480 = vmatpush1.msra.mxu0 0.0
    %1481 = vmatprep.subr.mxu0 0.0
    %1482 = vmatpush1.msra.mxu0 0.0
    %1483 = vmatprep.subr.mxu0 0.0
    %1484 = vmatpush1.msra.mxu0 0.0
    %1485 = vmatprep.subr.mxu0 0.0
    %1486 = vmatpush1.msra.mxu0 0.0
    %1487 = vmatprep.subr.mxu0 0.0
    %1488 = vmatpush1.msra.mxu0 0.0
    %1489 = vmatprep.subr.mxu0 0.0
    %1490 = vmatpush1.msra.mxu0 0.0
    %1491 = vmatprep.subr.mxu0 0.0
    %1492 = vmatpush1.msra.mxu0 0.0
    %1493 = vmatprep.subr.mxu0 0.0
    %1494 = vmatpush1.msra.mxu0 0.0
    %1495 = vmatprep.subr.mxu0 0.0
    %1496 = vmatpush1.msra.mxu0 0.0
    %1497 = vmatprep.subr.mxu0 0.0
    %1498 = vmatpush1.msra.mxu0 0.0
    %1499 = vmatprep.subr.mxu0 0.0
    %1500 = vmatpush1.msra.mxu0 0.0
    %1501 = vmatprep.subr.mxu0 0.0
    %1502 = vmatpush1.msra.mxu0 0.0
    %1503 = vmatprep.subr.mxu0 0.0
    %1504 = vmatpush1.msra.mxu0 0.0
    %1505 = vmatprep.mubr.f32.mxu0 0.0
    %1506 = vmatmul.mubr.f32.gmra.mrb[0].mxu0 %v1439
    %v1507 = vpop.f32.mrb[0].mxu0
    %v1508 = vadd.f32 %v1432, %v1507
    %v1509 = vpop.f32.mrb[0].mxu0
    %v1510 = vadd.f32 %v1436, %v1509
    %1511 = vdwg.mxu0
    %1512 = vst [vmem:[#allocation5 + $0x8] sm:$0x1] %v1510
    %1513 = vst [vmem:[#allocation4 + $0x9] sm:$0x1] %v1508
    %v1514 = vld [vmem:[#allocation3 + $0x9] sm:$0x1]
    %1516 = vrot.lane.b32.xlu0 %v1508, 96
    %v1517 = vpop.permute.xlu0 %1516
    %v1519 = vadd.f32 %v1514, %v1517
    %v1520 = vxor.u32 %v1519, 2147483648
    %v1521 = vmul.f32 %v1520, 1.442695
    %v1522 = vpow.pop %v1521
    %v1523 = vadd.f32 %v1522, 1.0
    %v1524 = vrcp.pop %v1523
    %v1525 = vmul.f32 1.0, %v1524
    %1526 = vrot.lane.b32.xlu0 %v1508, 32
    %v1527 = vpop.permute.xlu0 %1526
    %v1529 = vmul.f32 %v1525, %v1527
    %1531 = vrot.lane.b32.xlu0 %v1529, 64
    %v1532 = vpop.permute.xlu0 %1531
    %v1534 = vadd.f32 %v1514, %v1532
    %v1535 = vtanh.pop %v1534
    %v1536 = vsub.f32 1.0, %v1525
    %1538 = vrot.lane.b32.xlu0 %v1535, 96
    %v1539 = vpop.permute.xlu0 %1538
    %v1541 = vmul.f32 %v1536, %v1539
    %v1542 = vmul.f32 %v1525, %v1415
    %v1543 = vadd.f32 %v1541, %v1542
    %v1544 = vld [vmem:[#allocation11] sm:$0xff]
    %v1545 = vld [vmem:[#allocation11 + $0x8] sm:$0xff]
    %v1546 = vld [vmem:[#allocation11 + $0x10] sm:$0xff]
    %v1547 = vld [vmem:[#allocation11 + $0x18] sm:$0xff]
    %v1548 = vld [vmem:[#allocation11 + $0x20] sm:$0xff]
    %v1549 = vld [vmem:[#allocation11 + $0x28] sm:$0xff]
    %v1550 = vld [vmem:[#allocation11 + $0x30] sm:$0xff]
    %v1551 = vld [vmem:[#allocation11 + $0x38] sm:$0xff]
    %v1552 = vld [vmem:[%s5] sm:$0x3]
    %1554 = vrot.lane.b32.xlu0 %v1543, 96
    %v1555 = vpop.permute.xlu0 %1554
    %v1557 = vlaneseq
    %v1558 = vshrl.u32 %v1557, 7
    %v1559 = vsub.s32 0, %v1558
    %v1560 = vrot.slane %v1552, %v1559
    %v1561 = vlaneseq
    %v1562 = vshrl.u32 %v1561, 7
    %v1563 = vsub.s32 1, %v1562
    %v1564 = vrot.slane %v1552, %v1563
    %v1567 = vsel %vm81, %v1555, 0
    %1569 = vmatprep.subr.mxu0 %v1545
    %1570 = vmatpush1.msra.mxu0 %v1544
    %1571 = vmatprep.subr.mxu0 %v1547
    %1572 = vmatpush1.msra.mxu0 %v1546
    %1573 = vmatprep.subr.mxu0 %v1549
    %1574 = vmatpush1.msra.mxu0 %v1548
    %1575 = vmatprep.subr.mxu0 %v1551
    %1576 = vmatpush1.msra.mxu0 %v1550
    %1577 = vmatprep.subr.mxu0 0.0
    %1578 = vmatpush1.msra.mxu0 0.0
    %1579 = vmatprep.subr.mxu0 0.0
    %1580 = vmatpush1.msra.mxu0 0.0
    %1581 = vmatprep.subr.mxu0 0.0
    %1582 = vmatpush1.msra.mxu0 0.0
    %1583 = vmatprep.subr.mxu0 0.0
    %1584 = vmatpush1.msra.mxu0 0.0
    %1585 = vmatprep.subr.mxu0 0.0
    %1586 = vmatpush1.msra.mxu0 0.0
    %1587 = vmatprep.subr.mxu0 0.0
    %1588 = vmatpush1.msra.mxu0 0.0
    %1589 = vmatprep.subr.mxu0 0.0
    %1590 = vmatpush1.msra.mxu0 0.0
    %1591 = vmatprep.subr.mxu0 0.0
    %1592 = vmatpush1.msra.mxu0 0.0
    %1593 = vmatprep.subr.mxu0 0.0
    %1594 = vmatpush1.msra.mxu0 0.0
    %1595 = vmatprep.subr.mxu0 0.0
    %1596 = vmatpush1.msra.mxu0 0.0
    %1597 = vmatprep.subr.mxu0 0.0
    %1598 = vmatpush1.msra.mxu0 0.0
    %1599 = vmatprep.subr.mxu0 0.0
    %1600 = vmatpush1.msra.mxu0 0.0
    %1601 = vmatprep.subr.mxu0 0.0
    %1602 = vmatpush1.msra.mxu0 0.0
    %1603 = vmatprep.subr.mxu0 0.0
    %1604 = vmatpush1.msra.mxu0 0.0
    %1605 = vmatprep.subr.mxu0 0.0
    %1606 = vmatpush1.msra.mxu0 0.0
    %1607 = vmatprep.subr.mxu0 0.0
    %1608 = vmatpush1.msra.mxu0 0.0
    %1609 = vmatprep.subr.mxu0 0.0
    %1610 = vmatpush1.msra.mxu0 0.0
    %1611 = vmatprep.subr.mxu0 0.0
    %1612 = vmatpush1.msra.mxu0 0.0
    %1613 = vmatprep.subr.mxu0 0.0
    %1614 = vmatpush1.msra.mxu0 0.0
    %1615 = vmatprep.subr.mxu0 0.0
    %1616 = vmatpush1.msra.mxu0 0.0
    %1617 = vmatprep.subr.mxu0 0.0
    %1618 = vmatpush1.msra.mxu0 0.0
    %1619 = vmatprep.subr.mxu0 0.0
    %1620 = vmatpush1.msra.mxu0 0.0
    %1621 = vmatprep.subr.mxu0 0.0
    %1622 = vmatpush1.msra.mxu0 0.0
    %1623 = vmatprep.subr.mxu0 0.0
    %1624 = vmatpush1.msra.mxu0 0.0
    %1625 = vmatprep.subr.mxu0 0.0
    %1626 = vmatpush1.msra.mxu0 0.0
    %1627 = vmatprep.subr.mxu0 0.0
    %1628 = vmatpush1.msra.mxu0 0.0
    %1629 = vmatprep.subr.mxu0 0.0
    %1630 = vmatpush1.msra.mxu0 0.0
    %1631 = vmatprep.subr.mxu0 0.0
    %1632 = vmatpush1.msra.mxu0 0.0
    %1633 = vmatprep.mubr.f32.mxu0 0.0
    %1634 = vmatmul.mubr.f32.gmra.mrb[0].mxu0 %v1567
    %v1635 = vpop.f32.mrb[0].mxu0
    %v1636 = vadd.f32 %v1560, %v1635
    %v1637 = vpop.f32.mrb[0].mxu0
    %v1638 = vadd.f32 %v1564, %v1637
    %1639 = vdwg.mxu0
    %1640 = vst [vmem:[#allocation5 + $0x9] sm:$0x1] %v1638
    %1641 = vst [vmem:[#allocation4 + $0xa] sm:$0x1] %v1636
    %v1642 = vld [vmem:[#allocation3 + $0xa] sm:$0x1]
    %1644 = vrot.lane.b32.xlu0 %v1636, 96
    %v1645 = vpop.permute.xlu0 %1644
    %v1647 = vadd.f32 %v1642, %v1645
    %v1648 = vxor.u32 %v1647, 2147483648
    %v1649 = vmul.f32 %v1648, 1.442695
    %v1650 = vpow.pop %v1649
    %v1651 = vadd.f32 %v1650, 1.0
    %v1652 = vrcp.pop %v1651
    %v1653 = vmul.f32 1.0, %v1652
    %1654 = vrot.lane.b32.xlu0 %v1636, 32
    %v1655 = vpop.permute.xlu0 %1654
    %v1657 = vmul.f32 %v1653, %v1655
    %1659 = vrot.lane.b32.xlu0 %v1657, 64
    %v1660 = vpop.permute.xlu0 %1659
    %v1662 = vadd.f32 %v1642, %v1660
    %v1663 = vtanh.pop %v1662
    %v1664 = vsub.f32 1.0, %v1653
    %1666 = vrot.lane.b32.xlu0 %v1663, 96
    %v1667 = vpop.permute.xlu0 %1666
    %v1669 = vmul.f32 %v1664, %v1667
    %v1670 = vmul.f32 %v1653, %v1543
    %v1671 = vadd.f32 %v1669, %v1670
    %v1672 = vld [vmem:[#allocation11] sm:$0xff]
    %v1673 = vld [vmem:[#allocation11 + $0x8] sm:$0xff]
    %v1674 = vld [vmem:[#allocation11 + $0x10] sm:$0xff]
    %v1675 = vld [vmem:[#allocation11 + $0x18] sm:$0xff]
    %v1676 = vld [vmem:[#allocation11 + $0x20] sm:$0xff]
    %v1677 = vld [vmem:[#allocation11 + $0x28] sm:$0xff]
    %v1678 = vld [vmem:[#allocation11 + $0x30] sm:$0xff]
    %v1679 = vld [vmem:[#allocation11 + $0x38] sm:$0xff]
    %v1680 = vld [vmem:[%s5] sm:$0x3]
    %1682 = vrot.lane.b32.xlu0 %v1671, 96
    %v1683 = vpop.permute.xlu0 %1682
    %v1685 = vlaneseq
    %v1686 = vshrl.u32 %v1685, 7
    %v1687 = vsub.s32 0, %v1686
    %v1688 = vrot.slane %v1680, %v1687
    %v1689 = vlaneseq
    %v1690 = vshrl.u32 %v1689, 7
    %v1691 = vsub.s32 1, %v1690
    %v1692 = vrot.slane %v1680, %v1691
    %v1695 = vsel %vm81, %v1683, 0
    %1697 = vmatprep.subr.mxu0 %v1673
    %1698 = vmatpush1.msra.mxu0 %v1672
    %1699 = vmatprep.subr.mxu0 %v1675
    %1700 = vmatpush1.msra.mxu0 %v1674
    %1701 = vmatprep.subr.mxu0 %v1677
    %1702 = vmatpush1.msra.mxu0 %v1676
    %1703 = vmatprep.subr.mxu0 %v1679
    %1704 = vmatpush1.msra.mxu0 %v1678
    %1705 = vmatprep.subr.mxu0 0.0
    %1706 = vmatpush1.msra.mxu0 0.0
    %1707 = vmatprep.subr.mxu0 0.0
    %1708 = vmatpush1.msra.mxu0 0.0
    %1709 = vmatprep.subr.mxu0 0.0
    %1710 = vmatpush1.msra.mxu0 0.0
    %1711 = vmatprep.subr.mxu0 0.0
    %1712 = vmatpush1.msra.mxu0 0.0
    %1713 = vmatprep.subr.mxu0 0.0
    %1714 = vmatpush1.msra.mxu0 0.0
    %1715 = vmatprep.subr.mxu0 0.0
    %1716 = vmatpush1.msra.mxu0 0.0
    %1717 = vmatprep.subr.mxu0 0.0
    %1718 = vmatpush1.msra.mxu0 0.0
    %1719 = vmatprep.subr.mxu0 0.0
    %1720 = vmatpush1.msra.mxu0 0.0
    %1721 = vmatprep.subr.mxu0 0.0
    %1722 = vmatpush1.msra.mxu0 0.0
    %1723 = vmatprep.subr.mxu0 0.0
    %1724 = vmatpush1.msra.mxu0 0.0
    %1725 = vmatprep.subr.mxu0 0.0
    %1726 = vmatpush1.msra.mxu0 0.0
    %1727 = vmatprep.subr.mxu0 0.0
    %1728 = vmatpush1.msra.mxu0 0.0
    %1729 = vmatprep.subr.mxu0 0.0
    %1730 = vmatpush1.msra.mxu0 0.0
    %1731 = vmatprep.subr.mxu0 0.0
    %1732 = vmatpush1.msra.mxu0 0.0
    %1733 = vmatprep.subr.mxu0 0.0
    %1734 = vmatpush1.msra.mxu0 0.0
    %1735 = vmatprep.subr.mxu0 0.0
    %1736 = vmatpush1.msra.mxu0 0.0
    %1737 = vmatprep.subr.mxu0 0.0
    %1738 = vmatpush1.msra.mxu0 0.0
    %1739 = vmatprep.subr.mxu0 0.0
    %1740 = vmatpush1.msra.mxu0 0.0
    %1741 = vmatprep.subr.mxu0 0.0
    %1742 = vmatpush1.msra.mxu0 0.0
    %1743 = vmatprep.subr.mxu0 0.0
    %1744 = vmatpush1.msra.mxu0 0.0
    %1745 = vmatprep.subr.mxu0 0.0
    %1746 = vmatpush1.msra.mxu0 0.0
    %1747 = vmatprep.subr.mxu0 0.0
    %1748 = vmatpush1.msra.mxu0 0.0
    %1749 = vmatprep.subr.mxu0 0.0
    %1750 = vmatpush1.msra.mxu0 0.0
    %1751 = vmatprep.subr.mxu0 0.0
    %1752 = vmatpush1.msra.mxu0 0.0
    %1753 = vmatprep.subr.mxu0 0.0
    %1754 = vmatpush1.msra.mxu0 0.0
    %1755 = vmatprep.subr.mxu0 0.0
    %1756 = vmatpush1.msra.mxu0 0.0
    %1757 = vmatprep.subr.mxu0 0.0
    %1758 = vmatpush1.msra.mxu0 0.0
    %1759 = vmatprep.subr.mxu0 0.0
    %1760 = vmatpush1.msra.mxu0 0.0
    %1761 = vmatprep.mubr.f32.mxu0 0.0
    %1762 = vmatmul.mubr.f32.gmra.mrb[0].mxu0 %v1695
    %v1763 = vpop.f32.mrb[0].mxu0
    %v1764 = vadd.f32 %v1688, %v1763
    %v1765 = vpop.f32.mrb[0].mxu0
    %v1766 = vadd.f32 %v1692, %v1765
    %1767 = vdwg.mxu0
    %1768 = vst [vmem:[#allocation5 + $0xa] sm:$0x1] %v1766
    %1769 = vst [vmem:[#allocation4 + $0xb] sm:$0x1] %v1764
    %v1770 = vld [vmem:[#allocation3 + $0xb] sm:$0x1]
    %1772 = vrot.lane.b32.xlu0 %v1764, 96
    %v1773 = vpop.permute.xlu0 %1772
    %v1775 = vadd.f32 %v1770, %v1773
    %v1776 = vxor.u32 %v1775, 2147483648
    %v1777 = vmul.f32 %v1776, 1.442695
    %v1778 = vpow.pop %v1777
    %v1779 = vadd.f32 %v1778, 1.0
    %v1780 = vrcp.pop %v1779
    %v1781 = vmul.f32 1.0, %v1780
    %1782 = vrot.lane.b32.xlu0 %v1764, 32
    %v1783 = vpop.permute.xlu0 %1782
    %v1785 = vmul.f32 %v1781, %v1783
    %1787 = vrot.lane.b32.xlu0 %v1785, 64
    %v1788 = vpop.permute.xlu0 %1787
    %v1790 = vadd.f32 %v1770, %v1788
    %v1791 = vtanh.pop %v1790
    %v1792 = vsub.f32 1.0, %v1781
    %1794 = vrot.lane.b32.xlu0 %v1791, 96
    %v1795 = vpop.permute.xlu0 %1794
    %v1797 = vmul.f32 %v1792, %v1795
    %v1798 = vmul.f32 %v1781, %v1671
    %v1799 = vadd.f32 %v1797, %v1798
    %v1800 = vld [vmem:[#allocation11] sm:$0xff]
    %v1801 = vld [vmem:[#allocation11 + $0x8] sm:$0xff]
    %v1802 = vld [vmem:[#allocation11 + $0x10] sm:$0xff]
    %v1803 = vld [vmem:[#allocation11 + $0x18] sm:$0xff]
    %v1804 = vld [vmem:[#allocation11 + $0x20] sm:$0xff]
    %v1805 = vld [vmem:[#allocation11 + $0x28] sm:$0xff]
    %v1806 = vld [vmem:[#allocation11 + $0x30] sm:$0xff]
    %v1807 = vld [vmem:[#allocation11 + $0x38] sm:$0xff]
    %v1808 = vld [vmem:[%s5] sm:$0x3]
    %1810 = vrot.lane.b32.xlu0 %v1799, 96
    %v1811 = vpop.permute.xlu0 %1810
    %v1813 = vlaneseq
    %v1814 = vshrl.u32 %v1813, 7
    %v1815 = vsub.s32 0, %v1814
    %v1816 = vrot.slane %v1808, %v1815
    %v1817 = vlaneseq
    %v1818 = vshrl.u32 %v1817, 7
    %v1819 = vsub.s32 1, %v1818
    %v1820 = vrot.slane %v1808, %v1819
    %v1823 = vsel %vm81, %v1811, 0
    %1825 = vmatprep.subr.mxu0 %v1801
    %1826 = vmatpush1.msra.mxu0 %v1800
    %1827 = vmatprep.subr.mxu0 %v1803
    %1828 = vmatpush1.msra.mxu0 %v1802
    %1829 = vmatprep.subr.mxu0 %v1805
    %1830 = vmatpush1.msra.mxu0 %v1804
    %1831 = vmatprep.subr.mxu0 %v1807
    %1832 = vmatpush1.msra.mxu0 %v1806
    %1833 = vmatprep.subr.mxu0 0.0
    %1834 = vmatpush1.msra.mxu0 0.0
    %1835 = vmatprep.subr.mxu0 0.0
    %1836 = vmatpush1.msra.mxu0 0.0
    %1837 = vmatprep.subr.mxu0 0.0
    %1838 = vmatpush1.msra.mxu0 0.0
    %1839 = vmatprep.subr.mxu0 0.0
    %1840 = vmatpush1.msra.mxu0 0.0
    %1841 = vmatprep.subr.mxu0 0.0
    %1842 = vmatpush1.msra.mxu0 0.0
    %1843 = vmatprep.subr.mxu0 0.0
    %1844 = vmatpush1.msra.mxu0 0.0
    %1845 = vmatprep.subr.mxu0 0.0
    %1846 = vmatpush1.msra.mxu0 0.0
    %1847 = vmatprep.subr.mxu0 0.0
    %1848 = vmatpush1.msra.mxu0 0.0
    %1849 = vmatprep.subr.mxu0 0.0
    %1850 = vmatpush1.msra.mxu0 0.0
    %1851 = vmatprep.subr.mxu0 0.0
    %1852 = vmatpush1.msra.mxu0 0.0
    %1853 = vmatprep.subr.mxu0 0.0
    %1854 = vmatpush1.msra.mxu0 0.0
    %1855 = vmatprep.subr.mxu0 0.0
    %1856 = vmatpush1.msra.mxu0 0.0
    %1857 = vmatprep.subr.mxu0 0.0
    %1858 = vmatpush1.msra.mxu0 0.0
    %1859 = vmatprep.subr.mxu0 0.0
    %1860 = vmatpush1.msra.mxu0 0.0
    %1861 = vmatprep.subr.mxu0 0.0
    %1862 = vmatpush1.msra.mxu0 0.0
    %1863 = vmatprep.subr.mxu0 0.0
    %1864 = vmatpush1.msra.mxu0 0.0
    %1865 = vmatprep.subr.mxu0 0.0
    %1866 = vmatpush1.msra.mxu0 0.0
    %1867 = vmatprep.subr.mxu0 0.0
    %1868 = vmatpush1.msra.mxu0 0.0
    %1869 = vmatprep.subr.mxu0 0.0
    %1870 = vmatpush1.msra.mxu0 0.0
    %1871 = vmatprep.subr.mxu0 0.0
    %1872 = vmatpush1.msra.mxu0 0.0
    %1873 = vmatprep.subr.mxu0 0.0
    %1874 = vmatpush1.msra.mxu0 0.0
    %1875 = vmatprep.subr.mxu0 0.0
    %1876 = vmatpush1.msra.mxu0 0.0
    %1877 = vmatprep.subr.mxu0 0.0
    %1878 = vmatpush1.msra.mxu0 0.0
    %1879 = vmatprep.subr.mxu0 0.0
    %1880 = vmatpush1.msra.mxu0 0.0
    %1881 = vmatprep.subr.mxu0 0.0
    %1882 = vmatpush1.msra.mxu0 0.0
    %1883 = vmatprep.subr.mxu0 0.0
    %1884 = vmatpush1.msra.mxu0 0.0
    %1885 = vmatprep.subr.mxu0 0.0
    %1886 = vmatpush1.msra.mxu0 0.0
    %1887 = vmatprep.subr.mxu0 0.0
    %1888 = vmatpush1.msra.mxu0 0.0
    %1889 = vmatprep.mubr.f32.mxu0 0.0
    %1890 = vmatmul.mubr.f32.gmra.mrb[0].mxu0 %v1823
    %v1891 = vpop.f32.mrb[0].mxu0
    %v1892 = vadd.f32 %v1816, %v1891
    %v1893 = vpop.f32.mrb[0].mxu0
    %v1894 = vadd.f32 %v1820, %v1893
    %1895 = vdwg.mxu0
    %1896 = vst [vmem:[#allocation5 + $0xb] sm:$0x1] %v1894
    %1897 = vst [vmem:[#allocation4 + $0xc] sm:$0x1] %v1892
    %v1898 = vld [vmem:[#allocation3 + $0xc] sm:$0x1]
    %1900 = vrot.lane.b32.xlu0 %v1892, 96
    %v1901 = vpop.permute.xlu0 %1900
    %v1903 = vadd.f32 %v1898, %v1901
    %v1904 = vxor.u32 %v1903, 2147483648
    %v1905 = vmul.f32 %v1904, 1.442695
    %v1906 = vpow.pop %v1905
    %v1907 = vadd.f32 %v1906, 1.0
    %v1908 = vrcp.pop %v1907
    %v1909 = vmul.f32 1.0, %v1908
    %1910 = vrot.lane.b32.xlu0 %v1892, 32
    %v1911 = vpop.permute.xlu0 %1910
    %v1913 = vmul.f32 %v1909, %v1911
    %1915 = vrot.lane.b32.xlu0 %v1913, 64
    %v1916 = vpop.permute.xlu0 %1915
    %v1918 = vadd.f32 %v1898, %v1916
    %v1919 = vtanh.pop %v1918
    %v1920 = vsub.f32 1.0, %v1909
    %1922 = vrot.lane.b32.xlu0 %v1919, 96
    %v1923 = vpop.permute.xlu0 %1922
    %v1925 = vmul.f32 %v1920, %v1923
    %v1926 = vmul.f32 %v1909, %v1799
    %v1927 = vadd.f32 %v1925, %v1926
    %v1928 = vld [vmem:[#allocation11] sm:$0xff]
    %v1929 = vld [vmem:[#allocation11 + $0x8] sm:$0xff]
    %v1930 = vld [vmem:[#allocation11 + $0x10] sm:$0xff]
    %v1931 = vld [vmem:[#allocation11 + $0x18] sm:$0xff]
    %v1932 = vld [vmem:[#allocation11 + $0x20] sm:$0xff]
    %v1933 = vld [vmem:[#allocation11 + $0x28] sm:$0xff]
    %v1934 = vld [vmem:[#allocation11 + $0x30] sm:$0xff]
    %v1935 = vld [vmem:[#allocation11 + $0x38] sm:$0xff]
    %v1936 = vld [vmem:[%s5] sm:$0x3]
    %1938 = vrot.lane.b32.xlu0 %v1927, 96
    %v1939 = vpop.permute.xlu0 %1938
    %v1941 = vlaneseq
    %v1942 = vshrl.u32 %v1941, 7
    %v1943 = vsub.s32 0, %v1942
    %v1944 = vrot.slane %v1936, %v1943
    %v1945 = vlaneseq
    %v1946 = vshrl.u32 %v1945, 7
    %v1947 = vsub.s32 1, %v1946
    %v1948 = vrot.slane %v1936, %v1947
    %v1951 = vsel %vm81, %v1939, 0
    %1953 = vmatprep.subr.mxu0 %v1929
    %1954 = vmatpush1.msra.mxu0 %v1928
    %1955 = vmatprep.subr.mxu0 %v1931
    %1956 = vmatpush1.msra.mxu0 %v1930
    %1957 = vmatprep.subr.mxu0 %v1933
    %1958 = vmatpush1.msra.mxu0 %v1932
    %1959 = vmatprep.subr.mxu0 %v1935
    %1960 = vmatpush1.msra.mxu0 %v1934
    %1961 = vmatprep.subr.mxu0 0.0
    %1962 = vmatpush1.msra.mxu0 0.0
    %1963 = vmatprep.subr.mxu0 0.0
    %1964 = vmatpush1.msra.mxu0 0.0
    %1965 = vmatprep.subr.mxu0 0.0
    %1966 = vmatpush1.msra.mxu0 0.0
    %1967 = vmatprep.subr.mxu0 0.0
    %1968 = vmatpush1.msra.mxu0 0.0
    %1969 = vmatprep.subr.mxu0 0.0
    %1970 = vmatpush1.msra.mxu0 0.0
    %1971 = vmatprep.subr.mxu0 0.0
    %1972 = vmatpush1.msra.mxu0 0.0
    %1973 = vmatprep.subr.mxu0 0.0
    %1974 = vmatpush1.msra.mxu0 0.0
    %1975 = vmatprep.subr.mxu0 0.0
    %1976 = vmatpush1.msra.mxu0 0.0
    %1977 = vmatprep.subr.mxu0 0.0
    %1978 = vmatpush1.msra.mxu0 0.0
    %1979 = vmatprep.subr.mxu0 0.0
    %1980 = vmatpush1.msra.mxu0 0.0
    %1981 = vmatprep.subr.mxu0 0.0
    %1982 = vmatpush1.msra.mxu0 0.0
    %1983 = vmatprep.subr.mxu0 0.0
    %1984 = vmatpush1.msra.mxu0 0.0
    %1985 = vmatprep.subr.mxu0 0.0
    %1986 = vmatpush1.msra.mxu0 0.0
    %1987 = vmatprep.subr.mxu0 0.0
    %1988 = vmatpush1.msra.mxu0 0.0
    %1989 = vmatprep.subr.mxu0 0.0
    %1990 = vmatpush1.msra.mxu0 0.0
    %1991 = vmatprep.subr.mxu0 0.0
    %1992 = vmatpush1.msra.mxu0 0.0
    %1993 = vmatprep.subr.mxu0 0.0
    %1994 = vmatpush1.msra.mxu0 0.0
    %1995 = vmatprep.subr.mxu0 0.0
    %1996 = vmatpush1.msra.mxu0 0.0
    %1997 = vmatprep.subr.mxu0 0.0
    %1998 = vmatpush1.msra.mxu0 0.0
    %1999 = vmatprep.subr.mxu0 0.0
    %2000 = vmatpush1.msra.mxu0 0.0
    %2001 = vmatprep.subr.mxu0 0.0
    %2002 = vmatpush1.msra.mxu0 0.0
    %2003 = vmatprep.subr.mxu0 0.0
    %2004 = vmatpush1.msra.mxu0 0.0
    %2005 = vmatprep.subr.mxu0 0.0
    %2006 = vmatpush1.msra.mxu0 0.0
    %2007 = vmatprep.subr.mxu0 0.0
    %2008 = vmatpush1.msra.mxu0 0.0
    %2009 = vmatprep.subr.mxu0 0.0
    %2010 = vmatpush1.msra.mxu0 0.0
    %2011 = vmatprep.subr.mxu0 0.0
    %2012 = vmatpush1.msra.mxu0 0.0
    %2013 = vmatprep.subr.mxu0 0.0
    %2014 = vmatpush1.msra.mxu0 0.0
    %2015 = vmatprep.subr.mxu0 0.0
    %2016 = vmatpush1.msra.mxu0 0.0
    %2017 = vmatprep.mubr.f32.mxu0 0.0
    %2018 = vmatmul.mubr.f32.gmra.mrb[0].mxu0 %v1951
    %v2019 = vpop.f32.mrb[0].mxu0
    %v2020 = vadd.f32 %v1944, %v2019
    %v2021 = vpop.f32.mrb[0].mxu0
    %v2022 = vadd.f32 %v1948, %v2021
    %2023 = vdwg.mxu0
    %2024 = vst [vmem:[#allocation5 + $0xc] sm:$0x1] %v2022
    %2025 = vst [vmem:[#allocation4 + $0xd] sm:$0x1] %v2020
    %v2026 = vld [vmem:[#allocation3 + $0xd] sm:$0x1]
    %2028 = vrot.lane.b32.xlu0 %v2020, 96
    %v2029 = vpop.permute.xlu0 %2028
    %v2031 = vadd.f32 %v2026, %v2029
    %v2032 = vxor.u32 %v2031, 2147483648
    %v2033 = vmul.f32 %v2032, 1.442695
    %v2034 = vpow.pop %v2033
    %v2035 = vadd.f32 %v2034, 1.0
    %v2036 = vrcp.pop %v2035
    %v2037 = vmul.f32 1.0, %v2036
    %2038 = vrot.lane.b32.xlu0 %v2020, 32
    %v2039 = vpop.permute.xlu0 %2038
    %v2041 = vmul.f32 %v2037, %v2039
    %2043 = vrot.lane.b32.xlu0 %v2041, 64
    %v2044 = vpop.permute.xlu0 %2043
    %v2046 = vadd.f32 %v2026, %v2044
    %v2047 = vtanh.pop %v2046
    %v2048 = vsub.f32 1.0, %v2037
    %2050 = vrot.lane.b32.xlu0 %v2047, 96
    %v2051 = vpop.permute.xlu0 %2050
    %v2053 = vmul.f32 %v2048, %v2051
    %v2054 = vmul.f32 %v2037, %v1927
    %v2055 = vadd.f32 %v2053, %v2054
    %v2056 = vld [vmem:[#allocation11] sm:$0xff]
    %v2057 = vld [vmem:[#allocation11 + $0x8] sm:$0xff]
    %v2058 = vld [vmem:[#allocation11 + $0x10] sm:$0xff]
    %v2059 = vld [vmem:[#allocation11 + $0x18] sm:$0xff]
    %v2060 = vld [vmem:[#allocation11 + $0x20] sm:$0xff]
    %v2061 = vld [vmem:[#allocation11 + $0x28] sm:$0xff]
    %v2062 = vld [vmem:[#allocation11 + $0x30] sm:$0xff]
    %v2063 = vld [vmem:[#allocation11 + $0x38] sm:$0xff]
    %v2064 = vld [vmem:[%s5] sm:$0x3]
    %2066 = vrot.lane.b32.xlu0 %v2055, 96
    %v2067 = vpop.permute.xlu0 %2066
    %v2069 = vlaneseq
    %v2070 = vshrl.u32 %v2069, 7
    %v2071 = vsub.s32 0, %v2070
    %v2072 = vrot.slane %v2064, %v2071
    %v2073 = vlaneseq
    %v2074 = vshrl.u32 %v2073, 7
    %v2075 = vsub.s32 1, %v2074
    %v2076 = vrot.slane %v2064, %v2075
    %v2079 = vsel %vm81, %v2067, 0
    %2081 = vmatprep.subr.mxu0 %v2057
    %2082 = vmatpush1.msra.mxu0 %v2056
    %2083 = vmatprep.subr.mxu0 %v2059
    %2084 = vmatpush1.msra.mxu0 %v2058
    %2085 = vmatprep.subr.mxu0 %v2061
    %2086 = vmatpush1.msra.mxu0 %v2060
    %2087 = vmatprep.subr.mxu0 %v2063
    %2088 = vmatpush1.msra.mxu0 %v2062
    %2089 = vmatprep.subr.mxu0 0.0
    %2090 = vmatpush1.msra.mxu0 0.0
    %2091 = vmatprep.subr.mxu0 0.0
    %2092 = vmatpush1.msra.mxu0 0.0
    %2093 = vmatprep.subr.mxu0 0.0
    %2094 = vmatpush1.msra.mxu0 0.0
    %2095 = vmatprep.subr.mxu0 0.0
    %2096 = vmatpush1.msra.mxu0 0.0
    %2097 = vmatprep.subr.mxu0 0.0
    %2098 = vmatpush1.msra.mxu0 0.0
    %2099 = vmatprep.subr.mxu0 0.0
    %2100 = vmatpush1.msra.mxu0 0.0
    %2101 = vmatprep.subr.mxu0 0.0
    %2102 = vmatpush1.msra.mxu0 0.0
    %2103 = vmatprep.subr.mxu0 0.0
    %2104 = vmatpush1.msra.mxu0 0.0
    %2105 = vmatprep.subr.mxu0 0.0
    %2106 = vmatpush1.msra.mxu0 0.0
    %2107 = vmatprep.subr.mxu0 0.0
    %2108 = vmatpush1.msra.mxu0 0.0
    %2109 = vmatprep.subr.mxu0 0.0
    %2110 = vmatpush1.msra.mxu0 0.0
    %2111 = vmatprep.subr.mxu0 0.0
    %2112 = vmatpush1.msra.mxu0 0.0
    %2113 = vmatprep.subr.mxu0 0.0
    %2114 = vmatpush1.msra.mxu0 0.0
    %2115 = vmatprep.subr.mxu0 0.0
    %2116 = vmatpush1.msra.mxu0 0.0
    %2117 = vmatprep.subr.mxu0 0.0
    %2118 = vmatpush1.msra.mxu0 0.0
    %2119 = vmatprep.subr.mxu0 0.0
    %2120 = vmatpush1.msra.mxu0 0.0
    %2121 = vmatprep.subr.mxu0 0.0
    %2122 = vmatpush1.msra.mxu0 0.0
    %2123 = vmatprep.subr.mxu0 0.0
    %2124 = vmatpush1.msra.mxu0 0.0
    %2125 = vmatprep.subr.mxu0 0.0
    %2126 = vmatpush1.msra.mxu0 0.0
    %2127 = vmatprep.subr.mxu0 0.0
    %2128 = vmatpush1.msra.mxu0 0.0
    %2129 = vmatprep.subr.mxu0 0.0
    %2130 = vmatpush1.msra.mxu0 0.0
    %2131 = vmatprep.subr.mxu0 0.0
    %2132 = vmatpush1.msra.mxu0 0.0
    %2133 = vmatprep.subr.mxu0 0.0
    %2134 = vmatpush1.msra.mxu0 0.0
    %2135 = vmatprep.subr.mxu0 0.0
    %2136 = vmatpush1.msra.mxu0 0.0
    %2137 = vmatprep.subr.mxu0 0.0
    %2138 = vmatpush1.msra.mxu0 0.0
    %2139 = vmatprep.subr.mxu0 0.0
    %2140 = vmatpush1.msra.mxu0 0.0
    %2141 = vmatprep.subr.mxu0 0.0
    %2142 = vmatpush1.msra.mxu0 0.0
    %2143 = vmatprep.subr.mxu0 0.0
    %2144 = vmatpush1.msra.mxu0 0.0
    %2145 = vmatprep.mubr.f32.mxu0 0.0
    %2146 = vmatmul.mubr.f32.gmra.mrb[0].mxu0 %v2079
    %v2147 = vpop.f32.mrb[0].mxu0
    %v2148 = vadd.f32 %v2072, %v2147
    %v2149 = vpop.f32.mrb[0].mxu0
    %v2150 = vadd.f32 %v2076, %v2149
    %2151 = vdwg.mxu0
    %2152 = vst [vmem:[#allocation5 + $0xd] sm:$0x1] %v2150
    %2153 = vst [vmem:[#allocation4 + $0xe] sm:$0x1] %v2148
    %v2154 = vld [vmem:[#allocation3 + $0xe] sm:$0x1]
    %2156 = vrot.lane.b32.xlu0 %v2148, 96
    %v2157 = vpop.permute.xlu0 %2156
    %v2159 = vadd.f32 %v2154, %v2157
    %v2160 = vxor.u32 %v2159, 2147483648
    %v2161 = vmul.f32 %v2160, 1.442695
    %v2162 = vpow.pop %v2161
    %v2163 = vadd.f32 %v2162, 1.0
    %v2164 = vrcp.pop %v2163
    %v2165 = vmul.f32 1.0, %v2164
    %2166 = vrot.lane.b32.xlu0 %v2148, 32
    %v2167 = vpop.permute.xlu0 %2166
    %v2169 = vmul.f32 %v2165, %v2167
    %2171 = vrot.lane.b32.xlu0 %v2169, 64
    %v2172 = vpop.permute.xlu0 %2171
    %v2174 = vadd.f32 %v2154, %v2172
    %v2175 = vtanh.pop %v2174
    %v2176 = vsub.f32 1.0, %v2165
    %2178 = vrot.lane.b32.xlu0 %v2175, 96
    %v2179 = vpop.permute.xlu0 %2178
    %v2181 = vmul.f32 %v2176, %v2179
    %v2182 = vmul.f32 %v2165, %v2055
    %v2183 = vadd.f32 %v2181, %v2182
    %v2184 = vld [vmem:[#allocation11] sm:$0xff]
    %v2185 = vld [vmem:[#allocation11 + $0x8] sm:$0xff]
    %v2186 = vld [vmem:[#allocation11 + $0x10] sm:$0xff]
    %v2187 = vld [vmem:[#allocation11 + $0x18] sm:$0xff]
    %v2188 = vld [vmem:[#allocation11 + $0x20] sm:$0xff]
    %v2189 = vld [vmem:[#allocation11 + $0x28] sm:$0xff]
    %v2190 = vld [vmem:[#allocation11 + $0x30] sm:$0xff]
    %v2191 = vld [vmem:[#allocation11 + $0x38] sm:$0xff]
    %v2192 = vld [vmem:[%s5] sm:$0x3]
    %2194 = vrot.lane.b32.xlu0 %v2183, 96
    %v2195 = vpop.permute.xlu0 %2194
    %v2197 = vlaneseq
    %v2198 = vshrl.u32 %v2197, 7
    %v2199 = vsub.s32 0, %v2198
    %v2200 = vrot.slane %v2192, %v2199
    %v2201 = vlaneseq
    %v2202 = vshrl.u32 %v2201, 7
    %v2203 = vsub.s32 1, %v2202
    %v2204 = vrot.slane %v2192, %v2203
    %v2207 = vsel %vm81, %v2195, 0
    %2209 = vmatprep.subr.mxu0 %v2185
    %2210 = vmatpush1.msra.mxu0 %v2184
    %2211 = vmatprep.subr.mxu0 %v2187
    %2212 = vmatpush1.msra.mxu0 %v2186
    %2213 = vmatprep.subr.mxu0 %v2189
    %2214 = vmatpush1.msra.mxu0 %v2188
    %2215 = vmatprep.subr.mxu0 %v2191
    %2216 = vmatpush1.msra.mxu0 %v2190
    %2217 = vmatprep.subr.mxu0 0.0
    %2218 = vmatpush1.msra.mxu0 0.0
    %2219 = vmatprep.subr.mxu0 0.0
    %2220 = vmatpush1.msra.mxu0 0.0
    %2221 = vmatprep.subr.mxu0 0.0
    %2222 = vmatpush1.msra.mxu0 0.0
    %2223 = vmatprep.subr.mxu0 0.0
    %2224 = vmatpush1.msra.mxu0 0.0
    %2225 = vmatprep.subr.mxu0 0.0
    %2226 = vmatpush1.msra.mxu0 0.0
    %2227 = vmatprep.subr.mxu0 0.0
    %2228 = vmatpush1.msra.mxu0 0.0
    %2229 = vmatprep.subr.mxu0 0.0
    %2230 = vmatpush1.msra.mxu0 0.0
    %2231 = vmatprep.subr.mxu0 0.0
    %2232 = vmatpush1.msra.mxu0 0.0
    %2233 = vmatprep.subr.mxu0 0.0
    %2234 = vmatpush1.msra.mxu0 0.0
    %2235 = vmatprep.subr.mxu0 0.0
    %2236 = vmatpush1.msra.mxu0 0.0
    %2237 = vmatprep.subr.mxu0 0.0
    %2238 = vmatpush1.msra.mxu0 0.0
    %2239 = vmatprep.subr.mxu0 0.0
    %2240 = vmatpush1.msra.mxu0 0.0
    %2241 = vmatprep.subr.mxu0 0.0
    %2242 = vmatpush1.msra.mxu0 0.0
    %2243 = vmatprep.subr.mxu0 0.0
    %2244 = vmatpush1.msra.mxu0 0.0
    %2245 = vmatprep.subr.mxu0 0.0
    %2246 = vmatpush1.msra.mxu0 0.0
    %2247 = vmatprep.subr.mxu0 0.0
    %2248 = vmatpush1.msra.mxu0 0.0
    %2249 = vmatprep.subr.mxu0 0.0
    %2250 = vmatpush1.msra.mxu0 0.0
    %2251 = vmatprep.subr.mxu0 0.0
    %2252 = vmatpush1.msra.mxu0 0.0
    %2253 = vmatprep.subr.mxu0 0.0
    %2254 = vmatpush1.msra.mxu0 0.0
    %2255 = vmatprep.subr.mxu0 0.0
    %2256 = vmatpush1.msra.mxu0 0.0
    %2257 = vmatprep.subr.mxu0 0.0
    %2258 = vmatpush1.msra.mxu0 0.0
    %2259 = vmatprep.subr.mxu0 0.0
    %2260 = vmatpush1.msra.mxu0 0.0
    %2261 = vmatprep.subr.mxu0 0.0
    %2262 = vmatpush1.msra.mxu0 0.0
    %2263 = vmatprep.subr.mxu0 0.0
    %2264 = vmatpush1.msra.mxu0 0.0
    %2265 = vmatprep.subr.mxu0 0.0
    %2266 = vmatpush1.msra.mxu0 0.0
    %2267 = vmatprep.subr.mxu0 0.0
    %2268 = vmatpush1.msra.mxu0 0.0
    %2269 = vmatprep.subr.mxu0 0.0
    %2270 = vmatpush1.msra.mxu0 0.0
    %2271 = vmatprep.subr.mxu0 0.0
    %2272 = vmatpush1.msra.mxu0 0.0
    %2273 = vmatprep.mubr.f32.mxu0 0.0
    %2274 = vmatmul.mubr.f32.gmra.mrb[0].mxu0 %v2207
    %v2275 = vpop.f32.mrb[0].mxu0
    %v2276 = vadd.f32 %v2200, %v2275
    %v2277 = vpop.f32.mrb[0].mxu0
    %v2278 = vadd.f32 %v2204, %v2277
    %2279 = vdwg.mxu0
    %2280 = vst [vmem:[#allocation5 + $0xe] sm:$0x1] %v2278
    %2281 = vst [vmem:[#allocation4 + $0xf] sm:$0x1] %v2276
    %v2282 = vld [vmem:[#allocation3 + $0xf] sm:$0x1]
    %2284 = vrot.lane.b32.xlu0 %v2276, 96
    %v2285 = vpop.permute.xlu0 %2284
    %v2287 = vadd.f32 %v2282, %v2285
    %v2288 = vxor.u32 %v2287, 2147483648
    %v2289 = vmul.f32 %v2288, 1.442695
    %v2290 = vpow.pop %v2289
    %v2291 = vadd.f32 %v2290, 1.0
    %v2292 = vrcp.pop %v2291
    %v2293 = vmul.f32 1.0, %v2292
    %2294 = vrot.lane.b32.xlu0 %v2276, 32
    %v2295 = vpop.permute.xlu0 %2294
    %v2297 = vmul.f32 %v2293, %v2295
    %2299 = vrot.lane.b32.xlu0 %v2297, 64
    %v2300 = vpop.permute.xlu0 %2299
    %v2302 = vadd.f32 %v2282, %v2300
    %v2303 = vtanh.pop %v2302
    %v2304 = vsub.f32 1.0, %v2293
    %2306 = vrot.lane.b32.xlu0 %v2303, 96
    %v2307 = vpop.permute.xlu0 %2306
    %v2309 = vmul.f32 %v2304, %v2307
    %v2310 = vmul.f32 %v2293, %v2183
    %v2311 = vadd.f32 %v2309, %v2310
    %v2312 = vld [vmem:[#allocation11] sm:$0xff]
    %v2313 = vld [vmem:[#allocation11 + $0x8] sm:$0xff]
    %v2314 = vld [vmem:[#allocation11 + $0x10] sm:$0xff]
    %v2315 = vld [vmem:[#allocation11 + $0x18] sm:$0xff]
    %v2316 = vld [vmem:[#allocation11 + $0x20] sm:$0xff]
    %v2317 = vld [vmem:[#allocation11 + $0x28] sm:$0xff]
    %v2318 = vld [vmem:[#allocation11 + $0x30] sm:$0xff]
    %v2319 = vld [vmem:[#allocation11 + $0x38] sm:$0xff]
    %v2320 = vld [vmem:[%s5] sm:$0x3]
    %2322 = vrot.lane.b32.xlu0 %v2311, 96
    %v2323 = vpop.permute.xlu0 %2322
    %v2325 = vlaneseq
    %v2326 = vshrl.u32 %v2325, 7
    %v2327 = vsub.s32 1, %v2326
    %v2328 = vrot.slane %v2320, %v2327
    %v2330 = vsel %vm81, %v2323, 0
    %2332 = vmatprep.subr.mxu0 %v2313
    %2333 = vmatpush1.msra.mxu0 %v2312
    %2334 = vmatprep.subr.mxu0 %v2315
    %2335 = vmatpush1.msra.mxu0 %v2314
    %2336 = vmatprep.subr.mxu0 %v2317
    %2337 = vmatpush1.msra.mxu0 %v2316
    %2338 = vmatprep.subr.mxu0 %v2319
    %2339 = vmatpush1.msra.mxu0 %v2318
    %2340 = vmatprep.subr.mxu0 0.0
    %2341 = vmatpush1.msra.mxu0 0.0
    %2342 = vmatprep.subr.mxu0 0.0
    %2343 = vmatpush1.msra.mxu0 0.0
    %2344 = vmatprep.subr.mxu0 0.0
    %2345 = vmatpush1.msra.mxu0 0.0
    %2346 = vmatprep.subr.mxu0 0.0
    %2347 = vmatpush1.msra.mxu0 0.0
    %2348 = vmatprep.subr.mxu0 0.0
    %2349 = vmatpush1.msra.mxu0 0.0
    %2350 = vmatprep.subr.mxu0 0.0
    %2351 = vmatpush1.msra.mxu0 0.0
    %2352 = vmatprep.subr.mxu0 0.0
    %2353 = vmatpush1.msra.mxu0 0.0
    %2354 = vmatprep.subr.mxu0 0.0
    %2355 = vmatpush1.msra.mxu0 0.0
    %2356 = vmatprep.subr.mxu0 0.0
    %2357 = vmatpush1.msra.mxu0 0.0
    %2358 = vmatprep.subr.mxu0 0.0
    %2359 = vmatpush1.msra.mxu0 0.0
    %2360 = vmatprep.subr.mxu0 0.0
    %2361 = vmatpush1.msra.mxu0 0.0
    %2362 = vmatprep.subr.mxu0 0.0
    %2363 = vmatpush1.msra.mxu0 0.0
    %2364 = vmatprep.subr.mxu0 0.0
    %2365 = vmatpush1.msra.mxu0 0.0
    %2366 = vmatprep.subr.mxu0 0.0
    %2367 = vmatpush1.msra.mxu0 0.0
    %2368 = vmatprep.subr.mxu0 0.0
    %2369 = vmatpush1.msra.mxu0 0.0
    %2370 = vmatprep.subr.mxu0 0.0
    %2371 = vmatpush1.msra.mxu0 0.0
    %2372 = vmatprep.subr.mxu0 0.0
    %2373 = vmatpush1.msra.mxu0 0.0
    %2374 = vmatprep.subr.mxu0 0.0
    %2375 = vmatpush1.msra.mxu0 0.0
    %2376 = vmatprep.subr.mxu0 0.0
    %2377 = vmatpush1.msra.mxu0 0.0
    %2378 = vmatprep.subr.mxu0 0.0
    %2379 = vmatpush1.msra.mxu0 0.0
    %2380 = vmatprep.subr.mxu0 0.0
    %2381 = vmatpush1.msra.mxu0 0.0
    %2382 = vmatprep.subr.mxu0 0.0
    %2383 = vmatpush1.msra.mxu0 0.0
    %2384 = vmatprep.subr.mxu0 0.0
    %2385 = vmatpush1.msra.mxu0 0.0
    %2386 = vmatprep.subr.mxu0 0.0
    %2387 = vmatpush1.msra.mxu0 0.0
    %2388 = vmatprep.subr.mxu0 0.0
    %2389 = vmatpush1.msra.mxu0 0.0
    %2390 = vmatprep.subr.mxu0 0.0
    %2391 = vmatpush1.msra.mxu0 0.0
    %2392 = vmatprep.subr.mxu0 0.0
    %2393 = vmatpush1.msra.mxu0 0.0
    %2394 = vmatprep.subr.mxu0 0.0
    %2395 = vmatpush1.msra.mxu0 0.0
    %2396 = vmatprep.mubr.f32.mxu0 0.0
    %2397 = vmatmul.mubr.f32.gmra.mrb[0].mxu0 %v2330
    %v2398 = vpop.f32.mrb[0].mxu0
    %v2399 = vpop.f32.mrb[0].mxu0
    %v2400 = vadd.f32 %v2328, %v2399
    %2401 = vdwg.mxu0
    %2402 = vst [vmem:[#allocation5 + $0xf] sm:$0x1] %v2400
    %v2403 = vlaneseq
    %v2404 = vand.u32 %v2403, 127
    %vm2405 = vcmp.lt.s32.totalorder %v2404, 48
    %v2406 = vld [vmem:[#allocation5] sm:$0xff]
    %v2407 = vld [vmem:[#allocation5 + $0x8] sm:$0xff]
    %v2408 = vsel %vm2405, %v2406, -1e+30
    %v2409 = vsel %vm2405, %v2407, -1e+30
    %2410 = vmax.xlane.f32.xlu0 %v2408
    %v2411 = vpop.xlane.xlu0 %2410
    %2412 = vmax.xlane.f32.xlu0 %v2409
    %v2413 = vpop.xlane.xlu0 %2412
    %v2414 = vsub.f32 %v2408, %v2411
    %v2415 = vsub.f32 %v2409, %v2413
    %v2416 = vmul.f32 %v2414, 1.442695
    %v2417 = vpow.pop %v2416
    %v2418 = vmul.f32 %v2415, 1.442695
    %v2419 = vpow.pop %v2418
    %2420 = vadd.xlane.f32.xlu0 %v2417
    %v2421 = vpop.xlane.xlu0 %2420
    %2422 = vadd.xlane.f32.xlu0 %v2419
    %v2423 = vpop.xlane.xlu0 %2422
    %v2424 = vlog2.pop %v2421
    %v2425 = vmul.f32 %v2424, 0.6931472
    %v2426 = vlog2.pop %v2423
    %v2427 = vmul.f32 %v2426, 0.6931472
    %v2428 = vsub.f32 %v2414, %v2425
    %v2429 = vsub.f32 %v2415, %v2427
    %v2430 = vsel %vm2405, %v2428, 0.0
    %v2431 = vsel %vm2405, %v2429, 0.0
    %2432 = vst [vmem:[#allocation12] sm:$0xff] %v2430
    %2433 = vst [vmem:[#allocation12 + $0x10] sm:$0xff] %v2431
    %vm2434 = vcmp.lt.s32.totalorder %v2404, 10
    %v2435 = vld [vmem:[#allocation2] sm:$0xff]
    %v2436 = vld [vmem:[#allocation2 + $0x8] sm:$0xff]
    %v2437 = vld [vmem:[#allocation4] sm:$0xff]
    %v2438 = vld [vmem:[#allocation4 + $0x8] sm:$0xff]
    %v2439 = vadd.f32 %v2435, %v2437
    %v2440 = vadd.f32 %v2436, %v2438
    %v2441 = vsel %vm2434, %v2439, -1e+30
    %v2442 = vsel %vm2434, %v2440, -1e+30
    %2443 = vmax.xlane.f32.xlu0 %v2441
    %v2444 = vpop.xlane.xlu0 %2443
    %2445 = vmax.xlane.f32.xlu0 %v2442
    %v2446 = vpop.xlane.xlu0 %2445
    %v2447 = vsub.f32 %v2441, %v2444
    %v2448 = vsub.f32 %v2442, %v2446
    %v2449 = vmul.f32 %v2447, 1.442695
    %v2450 = vpow.pop %v2449
    %v2451 = vmul.f32 %v2448, 1.442695
    %v2452 = vpow.pop %v2451
    %2453 = vadd.xlane.f32.xlu0 %v2450
    %v2454 = vpop.xlane.xlu0 %2453
    %2455 = vadd.xlane.f32.xlu0 %v2452
    %v2456 = vpop.xlane.xlu0 %2455
    %v2457 = vrcp.pop %v2454
    %v2458 = vmul.f32 %v2450, %v2457
    %v2459 = vrcp.pop %v2456
    %v2460 = vmul.f32 %v2452, %v2459
    %2461 = vst [vmem:[#allocation12 + $0x8] sm:$0xff] %v2458
    %2462 = vst [vmem:[#allocation12 + $0x18] sm:$0xff] %v2460
    %2463 = vst [vmem:[#allocation13] sm:$0x1] 0.0
    %vm2465 = vcmask 253952
    %2466 = vst.msk [vmem:[#allocation13] sm:$0x1] %vm2465, %v2323
    // Predicated region
    $region38: #{tpu_custom_call.1} parent=1 // pred_check
      _
    $region39: #{tpu_custom_call.1} parent=1 // pred_check_branch
      %2468 = sbr.rel (0) target = $region41
    $region40: #{tpu_custom_call.1} parent=1 // pred_region
      %s2470 = ssub.s32 512, 512
      %2471 = vsyncadd [#allocation8], %s2470
      %s2472 = sshll.u32 [#allocation12], 4
      %s2473 = int_to_ptr.vmem [resolvable:$true] %s2472
      %2478 = dma.vmem_to_hbm [thread:$0]  %s2473, 512, %s6, [#allocation8], 256, 256, 16
    $region41: #{tpu_custom_call.1} parent=1 // pred_fallthru
      _
    // Predicated region
    $region42: #{tpu_custom_call.1} parent=1 // pred_check
      _
    $region43: #{tpu_custom_call.1} parent=1 // pred_check_branch
      %2480 = sbr.rel (0) target = $region45
    $region44: #{tpu_custom_call.1} parent=1 // pred_region
      %s2482 = ssub.s32 16, 16
      %2483 = vsyncadd [#allocation14], %s2482
      %s2485 = sshll.u32 [#allocation13], 4
      %s2486 = int_to_ptr.vmem [resolvable:$true] %s2485
      %2488 = dma.vmem_to_hbm [thread:$0]  %s2486, 16, %s7, [#allocation14]
    $region45: #{tpu_custom_call.1} parent=1 // pred_fallthru
      _
    // Predicated region
    $region46: #{tpu_custom_call.1} parent=1 // pred_check
      _
    $region47: #{tpu_custom_call.1} parent=1 // pred_check_branch
      %2490 = sbr.rel (0) target = $region49
    $region48: #{tpu_custom_call.1} parent=1 // pred_region
      %2491 = dma.done [#allocation8], 512
    $region49: #{tpu_custom_call.1} parent=1 // pred_fallthru
      _
    // Predicated region
    $region50: #{tpu_custom_call.1} parent=1 // pred_check
      _
    $region51: #{tpu_custom_call.1} parent=1 // pred_check_branch
      %2493 = sbr.rel (0) target = $region53
    $region52: #{tpu_custom_call.1} parent=1 // pred_region
      %2494 = dma.done [#allocation14], 16
    $region53: #{tpu_custom_call.1} parent=1 // pred_fallthru
      _
    %2495 = vsyncpa [#allocation7], 1
    %2496 = vsyncpa [#allocation10], 1
    %2497 = vsyncpa [#allocation8], 1
    %2498 = vsyncpa [#allocation14], 1

</llo_original>
